<compile_context>
chip_gen: v5e
topology: v5e:2x2
jax: 0.10.0
libtpu: 0.0.40
codegen_flags: <defaults>
</compile_context>

<pallas_src>
import functools

import jax
import jax.numpy as jnp
from jax import lax
from jax.experimental import pallas as pl
from jax.experimental.pallas import tpu as pltpu

SEQ_LEN = 168                 # weekly hourly series; circular pad needs L >= (K-1)*d = 167
NUM_LEVELS = 6                # num_channels = [1] * 6  (single channel -> no downsample conv)
KERNEL_SIZES = (24, 72, 168)  # daily / weekly / monthly TCN branches
KGE_SIZE = 32
KGE_SQUEEZE = 20


def _round_up(n, m):
    return ((n + m - 1) // m) * m


def _dilations(kernel_size, num_levels=NUM_LEVELS):
    """Dilation schedule exactly as in TemporalConvNet.__init__."""
    out = []
    for i in range(num_levels):
        d = 2 ** i
        if kernel_size * d > 168:
            d = int(168 // kernel_size)
        out.append(d)
    return out


def _band_matrices(w1, w2, kernel_size, dilation, seq_len, n_pad):
    """Fold one TemporalBlock's two circular dilated convs into dense maps.

    With P = (K-1)*d and N = L + P (PyTorch Conv1d, padding_mode='circular'):
      conv1 (after circular pad):  h1[j] = b1 + sum_k w1[k] * x[(j + k*d - P) % L],  j in [0, N)
      conv2 + center slice [P:P+L]: z[t] = b2 + sum_k w2[k] * h1[(t + k*d) % N],     t in [0, L)
    Returned as M1:(L, n_pad), M2:(n_pad, L); columns j >= N of M1 and rows
    j >= N of M2 are exactly zero (see invariant note at top of file).
    """
    K, d, L = kernel_size, dilation, seq_len
    P = (K - 1) * d
    N = L + P
    k = jnp.arange(K)

    j = jnp.arange(N)
    rows1 = (j[None, :] + k[:, None] * d - P) % L               # (K, N)
    cols1 = jnp.broadcast_to(j[None, :], (K, N))
    M1 = jnp.zeros((L, N), jnp.float32).at[rows1, cols1].add(
        jnp.broadcast_to(w1[:, None], (K, N)))

    t = jnp.arange(L)
    rows2 = (t[None, :] + k[:, None] * d) % N                   # (K, L)
    cols2 = jnp.broadcast_to(t[None, :], (K, L))
    M2 = jnp.zeros((N, L), jnp.float32).at[rows2, cols2].add(
        jnp.broadcast_to(w2[:, None], (K, L)))

    M1 = jnp.pad(M1, ((0, 0), (0, n_pad - N)))
    M2 = jnp.pad(M2, ((0, n_pad - N), (0, 0)))
    return M1, M2


# ----------------------------------------------------------------------------
# Parameters (deterministic init, PyTorch-equivalent effective weights)
# ----------------------------------------------------------------------------
def init_params(key, seq_len=SEQ_LEN):
    params = {"branches": [], "seq_len": seq_len}
    for K in KERNEL_SIZES:
        blocks = []
        for d in _dilations(K):
            key, k1, k2, k3, k4 = jax.random.split(key, 5)
            blocks.append(dict(
                kernel_size=K, dilation=d, padding=(K - 1) * d,
                w1=0.01 * jax.random.normal(k1, (K,), jnp.float32),   # conv weights ~ N(0, 0.01)
                b1=0.01 * jax.random.normal(k2, (), jnp.float32),
                w2=0.01 * jax.random.normal(k3, (K,), jnp.float32),
                b2=0.01 * jax.random.normal(k4, (), jnp.float32)))
        params["branches"].append(blocks)
    key, kw, kb, kl, klb = jax.random.split(key, 5)
    params["w_kge"] = jax.random.normal(kw, (KGE_SIZE, KGE_SQUEEZE), jnp.float32) / jnp.sqrt(float(KGE_SIZE))
    params["b_kge"] = 0.1 * jax.random.normal(kb, (KGE_SQUEEZE,), jnp.float32)
    n_feat = len(KERNEL_SIZES) + 2 + KGE_SQUEEZE                  # 3 + 2 + 20 = 25
    params["w_lin"] = 0.01 * jax.random.normal(kl, (n_feat, 1), jnp.float32)
    params["b_lin"] = 0.01 * jax.random.normal(klb, (1,), jnp.float32)
    return params


def pack_operands(params):
    """One-time fold: conv weights -> bf16 banded matrices (unified lane-aligned
    n_pad, stacked over branches x levels), linear_kge -> final linear."""
    L = params["seq_len"]
    max_n = max(L + blk["padding"] for blocks in params["branches"] for blk in blocks)
    n_pad = _round_up(max_n, 128)                                 # 335 -> 384, lane aligned
    assert n_pad % 128 == 0 and n_pad >= max_n

    m1_br, m2_br, b1_br, b2_br = [], [], [], []
    for blocks in params["branches"]:
        m1s, m2s, b1s, b2s = [], [], [], []
        for blk in blocks:
            m1, m2 = _band_matrices(blk["w1"], blk["w2"], blk["kernel_size"],
                                    blk["dilation"], L, n_pad)
            m1s.append(m1); m2s.append(m2)
            b1s.append(blk["b1"]); b2s.append(blk["b2"])
        m1_br.append(jnp.stack(m1s)); m2_br.append(jnp.stack(m2s))
        b1_br.append(jnp.stack(b1s)); b2_br.append(jnp.stack(b2s))

    w_lin = params["w_lin"]                                       # (25, 1)
    # linear_kge folded into the final linear (exact f32 fold, no nonlinearity between).
    wkge_row = jnp.dot(params["w_kge"], w_lin[5:, :],
                       precision=lax.Precision.HIGHEST).T         # (1, 32)
    head_bias = jnp.sum(params["b_kge"] * w_lin[5:, 0]) + params["b_lin"][0]
    head = jnp.concatenate([w_lin[:5, 0], head_bias[None]])       # [w_d,w_w,w_m,w_mean,w_min,bias]

    return dict(
        m1=jnp.stack(m1_br).astype(jnp.bfloat16),                 # (3, 6, L, n_pad)
        m2=jnp.stack(m2_br).astype(jnp.bfloat16),                 # (3, 6, n_pad, L)
        b1=jnp.stack(b1_br).astype(jnp.float32),                  # (3, 6)  SMEM
        b2=jnp.stack(b2_br).astype(jnp.float32),                  # (3, 6)  SMEM
        wkge=wkge_row.astype(jnp.float32),                        # (1, 32) VMEM (f32 VPU head)
        head=head.astype(jnp.float32),                            # (6,)    SMEM
    )


# ----------------------------------------------------------------------------
# Pallas kernel: grid = (batch_tiles, levels)
# ----------------------------------------------------------------------------
def _discriminator_kernel(x_ref, kge_ref, m1_ref, m2_ref, b1_ref, b2_ref,
                          wkge_ref, head_ref, out_ref, h_ref, *,
                          seq_len, num_branches):
    lvl = pl.program_id(1)
    n_lvl = pl.num_programs(1)

    @pl.when(lvl == 0)
    def _init():                                                  # residual stream starts at x
        for g in range(num_branches):
            h_ref[g, :, :] = x_ref[...]

    # One TemporalBlock per branch per grid step.  The three branch chains are
    # independent inside a level -> 3x ILP (scheduler overlaps one branch's
    # MXU weight-push with another branch's epilogue).  bf16 matmuls, f32 acc.
    for g in range(num_branches):
        h_g = h_ref[g, :, :]                                      # (Bt, L) f32
        a = jnp.dot(h_g.astype(jnp.bfloat16), m1_ref[g],
                    preferred_element_type=jnp.float32)           # conv1 (banded) -> (Bt, n_pad)
        a = jnp.maximum(a + b1_ref[g, lvl], 0.0)                  # + bias, ReLU
        z = jnp.dot(a.astype(jnp.bfloat16), m2_ref[g],
                    preferred_element_type=jnp.float32)           # conv2 + center slice -> (Bt, L)
        z = jnp.maximum(z + b2_ref[g, lvl], 0.0)
        h_ref[g, :, :] = jnp.maximum(z + h_g, 0.0)                # residual + ReLU

    @pl.when(lvl == n_lvl - 1)
    def _finalize():
        x = x_ref[...]                                            # (Bt, L)
        x_mean = jnp.mean(x, axis=1, keepdims=True)               # (Bt, 1)
        x_min = jnp.min(x, axis=1, keepdims=True)                 # (Bt, 1)
        kge_term = jnp.sum(kge_ref[...] * wkge_ref[...],          # folded linear_kge @ head (f32 VPU)
                           axis=1, keepdims=True)                 # (Bt, 1)
        y_d = h_ref[0][:, seq_len - 1:]                           # last time step of each branch
        y_w = h_ref[1][:, seq_len - 1:]
        y_m = h_ref[2][:, seq_len - 1:]
        logit = (y_d * head_ref[0] + y_w * head_ref[1] + y_m * head_ref[2]
                 + x_mean * head_ref[3] + x_min * head_ref[4]
                 + kge_term + head_ref[5])
        out_ref[...] = (1.0 / (1.0 + jnp.exp(-logit))).astype(out_ref.dtype)


@jax.jit
def discriminator_tcn_forward(x, kge, packed):
    B, L = x.shape
    n_br, n_lvl, _, n_pad = packed["m1"].shape
    kge_dim = kge.shape[1]

    # Pad batch to a multiple of 8 (sublane) and tile it.  Feed B >= 128 per
    # call for throughput; the batch grid axis is "parallel" so it also shards
    # across the two TensorCores on v7x.
    b_tile = min(_round_up(max(B, 8), 8), 128)
    b_pad = _round_up(max(B, b_tile), b_tile)
    if b_pad != B:
        x_p = jnp.pad(x, ((0, b_pad - B), (0, 0)))
        kge_p = jnp.pad(kge, ((0, b_pad - B), (0, 0)))
    else:
        x_p, kge_p = x, kge
    nb = b_pad // b_tile

    kernel = functools.partial(_discriminator_kernel, seq_len=L, num_branches=n_br)
    smem = pl.BlockSpec(memory_space=pltpu.MemorySpace.SMEM)      # small scalar tables

    out = pl.pallas_call(
        kernel,
        out_shape=jax.ShapeDtypeStruct((b_pad, 1), x.dtype),
        grid=(nb, n_lvl),
        in_specs=[
            pl.BlockSpec((b_tile, L), lambda b, i: (b, 0)),               # x (resident per batch tile)
            pl.BlockSpec((b_tile, kge_dim), lambda b, i: (b, 0)),         # kge
            pl.BlockSpec((n_br, None, L, n_pad), lambda b, i: (0, i, 0, 0)),  # conv1 bands, streamed per level
            pl.BlockSpec((n_br, None, n_pad, L), lambda b, i: (0, i, 0, 0)),  # conv2 bands, streamed per level
            smem,                                                         # b1 (3, 6)
            smem,                                                         # b2 (3, 6)
            pl.BlockSpec((1, kge_dim), lambda b, i: (0, 0)),              # folded kge weights (f32)
            smem,                                                         # head weights + bias (6,)
        ],
        out_specs=pl.BlockSpec((b_tile, 1), lambda b, i: (b, 0)),
        scratch_shapes=[pltpu.VMEM((n_br, b_tile, L), jnp.float32)],      # residual stream h per branch
        compiler_params=pltpu.CompilerParams(
            dimension_semantics=("parallel", "arbitrary")),
    )(x_p, kge_p, packed["m1"], packed["m2"], packed["b1"], packed["b2"],
      packed["wkge"], packed["head"])
    return out[:B]


# ----------------------------------------------------------------------------
# Pure-JAX reference (independent formulation: explicit circular pad + conv)
# ----------------------------------------------------------------------------
def _circular_conv1d(x, w, b, dilation, padding):
    """PyTorch Conv1d(1,1,K, stride=1, padding=P, dilation=d, padding_mode='circular')."""
    L = x.shape[-1]
    xp = jnp.concatenate([x[:, L - padding:], x, x[:, :padding]], axis=-1)
    y = lax.conv_general_dilated(
        xp[:, None, :], w[None, None, :], window_strides=(1,),
        padding="VALID", rhs_dilation=(dilation,),
        dimension_numbers=("NCH", "OIH", "NCH"),
        precision=lax.Precision.HIGHEST)
    return y[:, 0, :] + b


def discriminator_tcn_reference(x, kge, params):
    """Pure-JAX port of DiscriminatorTCN.forward (eval mode, dropout = identity)."""
    x_mean = jnp.mean(x, axis=1, keepdims=True)
    x_min = jnp.min(x, axis=1, keepdims=True)
    feats = []
    for blocks in params["branches"]:
        h = x
        for blk in blocks:
            P, d = blk["padding"], blk["dilation"]
            h1 = jax.nn.relu(_circular_conv1d(h, blk["w1"], blk["b1"], d, P))
            h2 = jax.nn.relu(_circular_conv1d(h1, blk["w2"], blk["b2"], d, P))
            h = jax.nn.relu(h2[:, P:P + h.shape[-1]] + h)         # center slice + residual + ReLU
        feats.append(h[:, -1:])
    kge_sq = jnp.dot(kge, params["w_kge"], precision=lax.Precision.HIGHEST) + params["b_kge"]
    feat = jnp.concatenate(feats + [x_mean, x_min, kge_sq], axis=1)
    logit = jnp.dot(feat, params["w_lin"], precision=lax.Precision.HIGHEST) + params["b_lin"]
    return jax.nn.sigmoid(logit)


if __name__ == "__main__":
    key = jax.random.PRNGKey(0)
    batch = 4
    key, kx, kk, kp = jax.random.split(key, 4)
    x = jax.random.normal(kx, (batch, SEQ_LEN), jnp.float32)      # (B, 168) hourly series
    kge = jax.random.normal(kk, (batch, KGE_SIZE), jnp.float32)   # (B, 32) knowledge embedding

    params = init_params(kp)
    packed = pack_operands(params)                                # one-time weight fold (outside kernel)

    out = discriminator_tcn_forward(x, kge, packed)
    out = jax.block_until_ready(out)

    ref = discriminator_tcn_reference(x, kge, params)
    assert out.shape == (batch, 1)
    # bf16 band matrices vs f32 reference: expected output error ~1e-4 on a
    # sigmoid output near 0.5 (head weights ~0.01 damp branch-level error).
    assert bool(jnp.allclose(out, ref, atol=1e-3, rtol=1e-3)), (out, ref)

    print("KERNEL_OK")
</pallas_src>

<mosaic_0001>
module attributes {stable_mosaic.version = 11 : i64} {
  func.func @_discriminator_kernel(%arg0: i32, %arg1: i32, %arg2: memref<8x168xf32, #tpu.memory_space<vmem>>, %arg3: memref<8x32xf32, #tpu.memory_space<vmem>>, %arg4: memref<3x1x168x384xbf16, #tpu.memory_space<vmem>>, %arg5: memref<3x1x384x168xbf16, #tpu.memory_space<vmem>>, %arg6: memref<3x6xf32, #tpu.memory_space<smem>>, %arg7: memref<3x6xf32, #tpu.memory_space<smem>>, %arg8: memref<1x32xf32, #tpu.memory_space<vmem>>, %arg9: memref<6xf32, #tpu.memory_space<smem>>, %arg10: memref<8x1xf32, #tpu.memory_space<vmem>>, %arg11: memref<3x8x168xf32, #tpu.memory_space<vmem>>) attributes {dimension_semantics = [#tpu.dimension_semantics<parallel>, #tpu.dimension_semantics<arbitrary>], iteration_bounds = array<i64: 1, 6>, scalar_prefetch = 0 : i64, scratch_operands = 1 : i64, tpu.core_type = #tpu.core_type<tc>, window_params = [{transform_indices = @transform_0, window_bounds = array<i64: 8, 168>}, {transform_indices = @transform_1, window_bounds = array<i64: 8, 32>}, {transform_indices = @transform_2, window_bounds = array<i64: 3, 1, 168, 384>}, {transform_indices = @transform_3, window_bounds = array<i64: 3, 1, 384, 168>}, {transform_indices = @transform_4, window_bounds = array<i64: 3, 6>}, {transform_indices = @transform_5, window_bounds = array<i64: 3, 6>}, {pipeline_mode = #tpu.pipeline_mode<synchronous>, transform_indices = @transform_6, window_bounds = array<i64: 1, 32>}, {transform_indices = @transform_7, window_bounds = array<i64: 6>}, {transform_indices = @transform_8, window_bounds = array<i64: 8, 1>}]} {
    %c0_i32 = arith.constant 0 : i32
    %0 = arith.cmpi eq, %arg1, %c0_i32 : i32
    %1 = arith.extui %0 : i1 to i32
    %c0_i32_0 = arith.constant 0 : i32
    %2 = arith.cmpi ne, %1, %c0_i32_0 : i32
    scf.if %2 {
      %c0_61 = arith.constant 0 : index
      %c0_62 = arith.constant 0 : index
      %90 = vector.load %arg2[%c0_61, %c0_62] : memref<8x168xf32, #tpu.memory_space<vmem>>, vector<8x168xf32>
      %c0_63 = arith.constant 0 : index
      %c0_64 = arith.constant 0 : index
      %c0_65 = arith.constant 0 : index
      %91 = vector.load %arg11[%c0_63, %c0_64, %c0_65] : memref<3x8x168xf32, #tpu.memory_space<vmem>>, vector<1x8x168xf32>
      %92 = vector.shape_cast %91 : vector<1x8x168xf32> to vector<8x168xf32>
      %93 = vector.shape_cast %90 : vector<8x168xf32> to vector<1x8x168xf32>
      tpu.vector_store %arg11[%c0_63, %c0_64, %c0_65], %93 {strides = array<i32>} : memref<3x8x168xf32, #tpu.memory_space<vmem>>, vector<1x8x168xf32>,
      %c0_66 = arith.constant 0 : index
      %c0_67 = arith.constant 0 : index
      %94 = vector.load %arg2[%c0_66, %c0_67] : memref<8x168xf32, #tpu.memory_space<vmem>>, vector<8x168xf32>
      %c1_68 = arith.constant 1 : index
      %c0_69 = arith.constant 0 : index
      %c0_70 = arith.constant 0 : index
      %95 = vector.load %arg11[%c1_68, %c0_69, %c0_70] : memref<3x8x168xf32, #tpu.memory_space<vmem>>, vector<1x8x168xf32>
      %96 = vector.shape_cast %95 : vector<1x8x168xf32> to vector<8x168xf32>
      %97 = vector.shape_cast %94 : vector<8x168xf32> to vector<1x8x168xf32>
      tpu.vector_store %arg11[%c1_68, %c0_69, %c0_70], %97 {strides = array<i32>} : memref<3x8x168xf32, #tpu.memory_space<vmem>>, vector<1x8x168xf32>,
      %c0_71 = arith.constant 0 : index
      %c0_72 = arith.constant 0 : index
      %98 = vector.load %arg2[%c0_71, %c0_72] : memref<8x168xf32, #tpu.memory_space<vmem>>, vector<8x168xf32>
      %c2_73 = arith.constant 2 : index
      %c0_74 = arith.constant 0 : index
      %c0_75 = arith.constant 0 : index
      %99 = vector.load %arg11[%c2_73, %c0_74, %c0_75] : memref<3x8x168xf32, #tpu.memory_space<vmem>>, vector<1x8x168xf32>
      %100 = vector.shape_cast %99 : vector<1x8x168xf32> to vector<8x168xf32>
      %101 = vector.shape_cast %98 : vector<8x168xf32> to vector<1x8x168xf32>
      tpu.vector_store %arg11[%c2_73, %c0_74, %c0_75], %101 {strides = array<i32>} : memref<3x8x168xf32, #tpu.memory_space<vmem>>, vector<1x8x168xf32>,
    } else {
    }
    %c0 = arith.constant 0 : index
    %c0_1 = arith.constant 0 : index
    %c0_2 = arith.constant 0 : index
    %3 = vector.load %arg11[%c0, %c0_1, %c0_2] : memref<3x8x168xf32, #tpu.memory_space<vmem>>, vector<1x8x168xf32>
    %4 = vector.shape_cast %3 : vector<1x8x168xf32> to vector<8x168xf32>
    %5 = arith.truncf %4 : vector<8x168xf32> to vector<8x168xbf16>
    %c0_3 = arith.constant 0 : index
    %c0_4 = arith.constant 0 : index
    %c0_5 = arith.constant 0 : index
    %c0_6 = arith.constant 0 : index
    %6 = vector.load %arg4[%c0_3, %c0_4, %c0_5, %c0_6] : memref<3x1x168x384xbf16, #tpu.memory_space<vmem>>, vector<1x1x168x384xbf16>
    %7 = vector.shape_cast %6 : vector<1x1x168x384xbf16> to vector<168x384xbf16>
    %cst = arith.constant dense<0.000000e+00> : vector<8x384xf32>
    %8 = tpu.matmul %5, %7, %cst {dimension_numbers = #tpu.dot_dimension_numbers<[1], [0], [0], [1], [0, 0, 1, 1], [], []>} : vector<8x168xbf16>, vector<168x384xbf16>, vector<8x384xf32> -> vector<8x384xf32>
    %c0_7 = arith.constant 0 : index
    %9 = arith.index_cast %arg1 : i32 to index
    %10 = memref.load %arg6[%c0_7, %9] : memref<3x6xf32, #tpu.memory_space<smem>>
    %11 = vector.broadcast %10 : f32 to vector<8x384xf32>
    %12 = arith.addf %8, %11 : vector<8x384xf32>
    %cst_8 = arith.constant 0.000000e+00 : f32
    %13 = vector.broadcast %cst_8 : f32 to vector<8x384xf32>
    %14 = arith.maximumf %12, %13 : vector<8x384xf32>
    %15 = arith.truncf %14 : vector<8x384xf32> to vector<8x384xbf16>
    %c0_9 = arith.constant 0 : index
    %c0_10 = arith.constant 0 : index
    %c0_11 = arith.constant 0 : index
    %c0_12 = arith.constant 0 : index
    %16 = vector.load %arg5[%c0_9, %c0_10, %c0_11, %c0_12] : memref<3x1x384x168xbf16, #tpu.memory_space<vmem>>, vector<1x1x384x168xbf16>
    %17 = vector.shape_cast %16 : vector<1x1x384x168xbf16> to vector<384x168xbf16>
    %cst_13 = arith.constant dense<0.000000e+00> : vector<8x168xf32>
    %18 = tpu.matmul %15, %17, %cst_13 {dimension_numbers = #tpu.dot_dimension_numbers<[1], [0], [0], [1], [0, 0, 1, 1], [], []>} : vector<8x384xbf16>, vector<384x168xbf16>, vector<8x168xf32> -> vector<8x168xf32>
    %c0_14 = arith.constant 0 : index
    %19 = arith.index_cast %arg1 : i32 to index
    %20 = memref.load %arg7[%c0_14, %19] : memref<3x6xf32, #tpu.memory_space<smem>>
    %21 = vector.broadcast %20 : f32 to vector<8x168xf32>
    %22 = arith.addf %18, %21 : vector<8x168xf32>
    %cst_15 = arith.constant 0.000000e+00 : f32
    %23 = vector.broadcast %cst_15 : f32 to vector<8x168xf32>
    %24 = arith.maximumf %22, %23 : vector<8x168xf32>
    %25 = arith.addf %24, %4 : vector<8x168xf32>
    %cst_16 = arith.constant 0.000000e+00 : f32
    %26 = vector.broadcast %cst_16 : f32 to vector<8x168xf32>
    %27 = arith.maximumf %25, %26 : vector<8x168xf32>
    %c0_17 = arith.constant 0 : index
    %c0_18 = arith.constant 0 : index
    %c0_19 = arith.constant 0 : index
    %28 = vector.load %arg11[%c0_17, %c0_18, %c0_19] : memref<3x8x168xf32, #tpu.memory_space<vmem>>, vector<1x8x168xf32>
    %29 = vector.shape_cast %28 : vector<1x8x168xf32> to vector<8x168xf32>
    %30 = vector.shape_cast %27 : vector<8x168xf32> to vector<1x8x168xf32>
    tpu.vector_store %arg11[%c0_17, %c0_18, %c0_19], %30 {strides = array<i32>} : memref<3x8x168xf32, #tpu.memory_space<vmem>>, vector<1x8x168xf32>,
    %c1 = arith.constant 1 : index
    %c0_20 = arith.constant 0 : index
    %c0_21 = arith.constant 0 : index
    %31 = vector.load %arg11[%c1, %c0_20, %c0_21] : memref<3x8x168xf32, #tpu.memory_space<vmem>>, vector<1x8x168xf32>
    %32 = vector.shape_cast %31 : vector<1x8x168xf32> to vector<8x168xf32>
    %33 = arith.truncf %32 : vector<8x168xf32> to vector<8x168xbf16>
    %c1_22 = arith.constant 1 : index
    %c0_23 = arith.constant 0 : index
    %c0_24 = arith.constant 0 : index
    %c0_25 = arith.constant 0 : index
    %34 = vector.load %arg4[%c1_22, %c0_23, %c0_24, %c0_25] : memref<3x1x168x384xbf16, #tpu.memory_space<vmem>>, vector<1x1x168x384xbf16>
    %35 = vector.shape_cast %34 : vector<1x1x168x384xbf16> to vector<168x384xbf16>
    %cst_26 = arith.constant dense<0.000000e+00> : vector<8x384xf32>
    %36 = tpu.matmul %33, %35, %cst_26 {dimension_numbers = #tpu.dot_dimension_numbers<[1], [0], [0], [1], [0, 0, 1, 1], [], []>} : vector<8x168xbf16>, vector<168x384xbf16>, vector<8x384xf32> -> vector<8x384xf32>
    %c1_27 = arith.constant 1 : index
    %37 = arith.index_cast %arg1 : i32 to index
    %38 = memref.load %arg6[%c1_27, %37] : memref<3x6xf32, #tpu.memory_space<smem>>
    %39 = vector.broadcast %38 : f32 to vector<8x384xf32>
    %40 = arith.addf %36, %39 : vector<8x384xf32>
    %cst_28 = arith.constant 0.000000e+00 : f32
    %41 = vector.broadcast %cst_28 : f32 to vector<8x384xf32>
    %42 = arith.maximumf %40, %41 : vector<8x384xf32>
    %43 = arith.truncf %42 : vector<8x384xf32> to vector<8x384xbf16>
    %c1_29 = arith.constant 1 : index
    %c0_30 = arith.constant 0 : index
    %c0_31 = arith.constant 0 : index
    %c0_32 = arith.constant 0 : index
    %44 = vector.load %arg5[%c1_29, %c0_30, %c0_31, %c0_32] : memref<3x1x384x168xbf16, #tpu.memory_space<vmem>>, vector<1x1x384x168xbf16>
    %45 = vector.shape_cast %44 : vector<1x1x384x168xbf16> to vector<384x168xbf16>
    %cst_33 = arith.constant dense<0.000000e+00> : vector<8x168xf32>
    %46 = tpu.matmul %43, %45, %cst_33 {dimension_numbers = #tpu.dot_dimension_numbers<[1], [0], [0], [1], [0, 0, 1, 1], [], []>} : vector<8x384xbf16>, vector<384x168xbf16>, vector<8x168xf32> -> vector<8x168xf32>
    %c1_34 = arith.constant 1 : index
    %47 = arith.index_cast %arg1 : i32 to index
    %48 = memref.load %arg7[%c1_34, %47] : memref<3x6xf32, #tpu.memory_space<smem>>
    %49 = vector.broadcast %48 : f32 to vector<8x168xf32>
    %50 = arith.addf %46, %49 : vector<8x168xf32>
    %cst_35 = arith.constant 0.000000e+00 : f32
    %51 = vector.broadcast %cst_35 : f32 to vector<8x168xf32>
    %52 = arith.maximumf %50, %51 : vector<8x168xf32>
    %53 = arith.addf %52, %32 : vector<8x168xf32>
    %cst_36 = arith.constant 0.000000e+00 : f32
    %54 = vector.broadcast %cst_36 : f32 to vector<8x168xf32>
    %55 = arith.maximumf %53, %54 : vector<8x168xf32>
    %c1_37 = arith.constant 1 : index
    %c0_38 = arith.constant 0 : index
    %c0_39 = arith.constant 0 : index
    %56 = vector.load %arg11[%c1_37, %c0_38, %c0_39] : memref<3x8x168xf32, #tpu.memory_space<vmem>>, vector<1x8x168xf32>
    %57 = vector.shape_cast %56 : vector<1x8x168xf32> to vector<8x168xf32>
    %58 = vector.shape_cast %55 : vector<8x168xf32> to vector<1x8x168xf32>
    tpu.vector_store %arg11[%c1_37, %c0_38, %c0_39], %58 {strides = array<i32>} : memref<3x8x168xf32, #tpu.memory_space<vmem>>, vector<1x8x168xf32>,
    %c2 = arith.constant 2 : index
    %c0_40 = arith.constant 0 : index
    %c0_41 = arith.constant 0 : index
    %59 = vector.load %arg11[%c2, %c0_40, %c0_41] : memref<3x8x168xf32, #tpu.memory_space<vmem>>, vector<1x8x168xf32>
    %60 = vector.shape_cast %59 : vector<1x8x168xf32> to vector<8x168xf32>
    %61 = arith.truncf %60 : vector<8x168xf32> to vector<8x168xbf16>
    %c2_42 = arith.constant 2 : index
    %c0_43 = arith.constant 0 : index
    %c0_44 = arith.constant 0 : index
    %c0_45 = arith.constant 0 : index
    %62 = vector.load %arg4[%c2_42, %c0_43, %c0_44, %c0_45] : memref<3x1x168x384xbf16, #tpu.memory_space<vmem>>, vector<1x1x168x384xbf16>
    %63 = vector.shape_cast %62 : vector<1x1x168x384xbf16> to vector<168x384xbf16>
    %cst_46 = arith.constant dense<0.000000e+00> : vector<8x384xf32>
    %64 = tpu.matmul %61, %63, %cst_46 {dimension_numbers = #tpu.dot_dimension_numbers<[1], [0], [0], [1], [0, 0, 1, 1], [], []>} : vector<8x168xbf16>, vector<168x384xbf16>, vector<8x384xf32> -> vector<8x384xf32>
    %c2_47 = arith.constant 2 : index
    %65 = arith.index_cast %arg1 : i32 to index
    %66 = memref.load %arg6[%c2_47, %65] : memref<3x6xf32, #tpu.memory_space<smem>>
    %67 = vector.broadcast %66 : f32 to vector<8x384xf32>
    %68 = arith.addf %64, %67 : vector<8x384xf32>
    %cst_48 = arith.constant 0.000000e+00 : f32
    %69 = vector.broadcast %cst_48 : f32 to vector<8x384xf32>
    %70 = arith.maximumf %68, %69 : vector<8x384xf32>
    %71 = arith.truncf %70 : vector<8x384xf32> to vector<8x384xbf16>
    %c2_49 = arith.constant 2 : index
    %c0_50 = arith.constant 0 : index
    %c0_51 = arith.constant 0 : index
    %c0_52 = arith.constant 0 : index
    %72 = vector.load %arg5[%c2_49, %c0_50, %c0_51, %c0_52] : memref<3x1x384x168xbf16, #tpu.memory_space<vmem>>, vector<1x1x384x168xbf16>
    %73 = vector.shape_cast %72 : vector<1x1x384x168xbf16> to vector<384x168xbf16>
    %cst_53 = arith.constant dense<0.000000e+00> : vector<8x168xf32>
    %74 = tpu.matmul %71, %73, %cst_53 {dimension_numbers = #tpu.dot_dimension_numbers<[1], [0], [0], [1], [0, 0, 1, 1], [], []>} : vector<8x384xbf16>, vector<384x168xbf16>, vector<8x168xf32> -> vector<8x168xf32>
    %c2_54 = arith.constant 2 : index
    %75 = arith.index_cast %arg1 : i32 to index
    %76 = memref.load %arg7[%c2_54, %75] : memref<3x6xf32, #tpu.memory_space<smem>>
    %77 = vector.broadcast %76 : f32 to vector<8x168xf32>
    %78 = arith.addf %74, %77 : vector<8x168xf32>
    %cst_55 = arith.constant 0.000000e+00 : f32
    %79 = vector.broadcast %cst_55 : f32 to vector<8x168xf32>
    %80 = arith.maximumf %78, %79 : vector<8x168xf32>
    %81 = arith.addf %80, %60 : vector<8x168xf32>
    %cst_56 = arith.constant 0.000000e+00 : f32
    %82 = vector.broadcast %cst_56 : f32 to vector<8x168xf32>
    %83 = arith.maximumf %81, %82 : vector<8x168xf32>
    %c2_57 = arith.constant 2 : index
    %c0_58 = arith.constant 0 : index
    %c0_59 = arith.constant 0 : index
    %84 = vector.load %arg11[%c2_57, %c0_58, %c0_59] : memref<3x8x168xf32, #tpu.memory_space<vmem>>, vector<1x8x168xf32>
    %85 = vector.shape_cast %84 : vector<1x8x168xf32> to vector<8x168xf32>
    %86 = vector.shape_cast %83 : vector<8x168xf32> to vector<1x8x168xf32>
    tpu.vector_store %arg11[%c2_57, %c0_58, %c0_59], %86 {strides = array<i32>} : memref<3x8x168xf32, #tpu.memory_space<vmem>>, vector<1x8x168xf32>,
    %c5_i32 = arith.constant 5 : i32
    %87 = arith.cmpi eq, %arg1, %c5_i32 : i32
    %88 = arith.extui %87 : i1 to i32
    %c0_i32_60 = arith.constant 0 : i32
    %89 = arith.cmpi ne, %88, %c0_i32_60 : i32
    scf.if %89 {
      %c0_61 = arith.constant 0 : index
      %c0_62 = arith.constant 0 : index
      %90 = vector.load %arg2[%c0_61, %c0_62] : memref<8x168xf32, #tpu.memory_space<vmem>>, vector<8x168xf32>
      %cst_63 = arith.constant dense<0.000000e+00> : vector<8xf32>
      %91 = vector.multi_reduction <add>, %90, %cst_63 [1] : vector<8x168xf32> to vector<8xf32>
      %92 = vector.shape_cast %91 : vector<8xf32> to vector<8x1xf32>
      %cst_64 = arith.constant 1.680000e+02 : f32
      %93 = vector.broadcast %cst_64 : f32 to vector<8x1xf32>
      %94 = arith.divf %92, %93 : vector<8x1xf32>
      %cst_65 = arith.constant dense<0x7F800000> : vector<8xf32>
      %95 = vector.multi_reduction <minimumf>, %90, %cst_65 [1] : vector<8x168xf32> to vector<8xf32>
      %96 = vector.shape_cast %95 : vector<8xf32> to vector<8x1xf32>
      %c0_66 = arith.constant 0 : index
      %c0_67 = arith.constant 0 : index
      %97 = vector.load %arg3[%c0_66, %c0_67] : memref<8x32xf32, #tpu.memory_space<vmem>>, vector<8x32xf32>
      %c0_68 = arith.constant 0 : index
      %c0_69 = arith.constant 0 : index
      %98 = vector.load %arg8[%c0_68, %c0_69] : memref<1x32xf32, #tpu.memory_space<vmem>>, vector<1x32xf32>
      %99 = vector.broadcast %98 : vector<1x32xf32> to vector<8x32xf32>
      %100 = arith.mulf %97, %99 : vector<8x32xf32>
      %cst_70 = arith.constant dense<0.000000e+00> : vector<8xf32>
      %101 = vector.multi_reduction <add>, %100, %cst_70 [1] : vector<8x32xf32> to vector<8xf32>
      %102 = vector.shape_cast %101 : vector<8xf32> to vector<8x1xf32>
      %c0_71 = arith.constant 0 : index
      %c0_72 = arith.constant 0 : index
      %c0_73 = arith.constant 0 : index
      %103 = vector.load %arg11[%c0_71, %c0_72, %c0_73] : memref<3x8x168xf32, #tpu.memory_space<vmem>>, vector<1x8x168xf32>
      %104 = vector.shape_cast %103 : vector<1x8x168xf32> to vector<8x168xf32>
      %105 = vector.extract_strided_slice %104 {offsets = [0, 167], sizes = [8, 1], strides = [1, 1]} : vector<8x168xf32> to vector<8x1xf32>
      %c1_74 = arith.constant 1 : index
      %c0_75 = arith.constant 0 : index
      %c0_76 = arith.constant 0 : index
      %106 = vector.load %arg11[%c1_74, %c0_75, %c0_76] : memref<3x8x168xf32, #tpu.memory_space<vmem>>, vector<1x8x168xf32>
      %107 = vector.shape_cast %106 : vector<1x8x168xf32> to vector<8x168xf32>
      %108 = vector.extract_strided_slice %107 {offsets = [0, 167], sizes = [8, 1], strides = [1, 1]} : vector<8x168xf32> to vector<8x1xf32>
      %c2_77 = arith.constant 2 : index
      %c0_78 = arith.constant 0 : index
      %c0_79 = arith.constant 0 : index
      %109 = vector.load %arg11[%c2_77, %c0_78, %c0_79] : memref<3x8x168xf32, #tpu.memory_space<vmem>>, vector<1x8x168xf32>
      %110 = vector.shape_cast %109 : vector<1x8x168xf32> to vector<8x168xf32>
      %111 = vector.extract_strided_slice %110 {offsets = [0, 167], sizes = [8, 1], strides = [1, 1]} : vector<8x168xf32> to vector<8x1xf32>
      %c0_80 = arith.constant 0 : index
      %112 = memref.load %arg9[%c0_80] : memref<6xf32, #tpu.memory_space<smem>>
      %113 = vector.broadcast %112 : f32 to vector<8x1xf32>
      %114 = arith.mulf %105, %113 : vector<8x1xf32>
      %c1_81 = arith.constant 1 : index
      %115 = memref.load %arg9[%c1_81] : memref<6xf32, #tpu.memory_space<smem>>
      %116 = vector.broadcast %115 : f32 to vector<8x1xf32>
      %117 = arith.mulf %108, %116 : vector<8x1xf32>
      %118 = arith.addf %114, %117 : vector<8x1xf32>
      %c2_82 = arith.constant 2 : index
      %119 = memref.load %arg9[%c2_82] : memref<6xf32, #tpu.memory_space<smem>>
      %120 = vector.broadcast %119 : f32 to vector<8x1xf32>
      %121 = arith.mulf %111, %120 : vector<8x1xf32>
      %122 = arith.addf %118, %121 : vector<8x1xf32>
      %c3 = arith.constant 3 : index
      %123 = memref.load %arg9[%c3] : memref<6xf32, #tpu.memory_space<smem>>
      %124 = vector.broadcast %123 : f32 to vector<8x1xf32>
      %125 = arith.mulf %94, %124 : vector<8x1xf32>
      %126 = arith.addf %122, %125 : vector<8x1xf32>
      %c4 = arith.constant 4 : index
      %127 = memref.load %arg9[%c4] : memref<6xf32, #tpu.memory_space<smem>>
      %128 = vector.broadcast %127 : f32 to vector<8x1xf32>
      %129 = arith.mulf %96, %128 : vector<8x1xf32>
      %130 = arith.addf %126, %129 : vector<8x1xf32>
      %131 = arith.addf %130, %102 : vector<8x1xf32>
      %c5 = arith.constant 5 : index
      %132 = memref.load %arg9[%c5] : memref<6xf32, #tpu.memory_space<smem>>
      %133 = vector.broadcast %132 : f32 to vector<8x1xf32>
      %134 = arith.addf %131, %133 : vector<8x1xf32>
      %cst_83 = arith.constant 0.000000e+00 : f32
      %135 = vector.broadcast %cst_83 : f32 to vector<8x1xf32>
      %136 = arith.subf %135, %134 : vector<8x1xf32>
      %137 = math.exp %136 : vector<8x1xf32>
      %cst_84 = arith.constant 1.000000e+00 : f32
      %138 = vector.broadcast %cst_84 : f32 to vector<8x1xf32>
      %139 = arith.addf %138, %137 : vector<8x1xf32>
      %cst_85 = arith.constant 1.000000e+00 : f32
      %140 = vector.broadcast %cst_85 : f32 to vector<8x1xf32>
      %141 = arith.divf %140, %139 : vector<8x1xf32>
      %c0_86 = arith.constant 0 : index
      %c0_87 = arith.constant 0 : index
      %142 = vector.load %arg10[%c0_86, %c0_87] : memref<8x1xf32, #tpu.memory_space<vmem>>, vector<8x1xf32>
      tpu.vector_store %arg10[%c0_86, %c0_87], %141 {strides = array<i32>} : memref<8x1xf32, #tpu.memory_space<vmem>>, vector<8x1xf32>,
    } else {
    }
    return
  }
  func.func @transform_0(%arg0: i32, %arg1: i32) -> (i32, i32) {
    %c0_i32 = arith.constant 0 : i32
    %c0_i32_0 = arith.constant 0 : i32
    return %arg0, %c0_i32 : i32, i32
  }
  func.func @transform_1(%arg0: i32, %arg1: i32) -> (i32, i32) {
    %c0_i32 = arith.constant 0 : i32
    %c0_i32_0 = arith.constant 0 : i32
    return %arg0, %c0_i32 : i32, i32
  }
  func.func @transform_2(%arg0: i32, %arg1: i32) -> (i32, i32, i32, i32) {
    %c0_i32 = arith.constant 0 : i32
    %c0_i32_0 = arith.constant 0 : i32
    %c0_i32_1 = arith.constant 0 : i32
    %c0_i32_2 = arith.constant 0 : i32
    return %c0_i32, %arg1, %c0_i32_0, %c0_i32_1 : i32, i32, i32, i32
  }
  func.func @transform_3(%arg0: i32, %arg1: i32) -> (i32, i32, i32, i32) {
    %c0_i32 = arith.constant 0 : i32
    %c0_i32_0 = arith.constant 0 : i32
    %c0_i32_1 = arith.constant 0 : i32
    %c0_i32_2 = arith.constant 0 : i32
    return %c0_i32, %arg1, %c0_i32_0, %c0_i32_1 : i32, i32, i32, i32
  }
  func.func @transform_4(%arg0: i32, %arg1: i32) -> (i32, i32) {
    %c0_i32 = arith.constant 0 : i32
    %c0_i32_0 = arith.constant 0 : i32
    %c0_i32_1 = arith.constant 0 : i32
    return %c0_i32, %c0_i32_0 : i32, i32
  }
  func.func @transform_5(%arg0: i32, %arg1: i32) -> (i32, i32) {
    %c0_i32 = arith.constant 0 : i32
    %c0_i32_0 = arith.constant 0 : i32
    %c0_i32_1 = arith.constant 0 : i32
    return %c0_i32, %c0_i32_0 : i32, i32
  }
  func.func @transform_6(%arg0: i32, %arg1: i32) -> (i32, i32) {
    %c0_i32 = arith.constant 0 : i32
    %c0_i32_0 = arith.constant 0 : i32
    %c0_i32_1 = arith.constant 0 : i32
    return %c0_i32, %c0_i32_0 : i32, i32
  }
  func.func @transform_7(%arg0: i32, %arg1: i32) -> i32 {
    %c0_i32 = arith.constant 0 : i32
    %c0_i32_0 = arith.constant 0 : i32
    return %c0_i32 : i32
  }
  func.func @transform_8(%arg0: i32, %arg1: i32) -> (i32, i32) {
    %c0_i32 = arith.constant 0 : i32
    %c0_i32_0 = arith.constant 0 : i32
    return %arg0, %c0_i32 : i32, i32
  }
}

</mosaic_0001>

<llo_original>
// kernel: discriminator_tcn_forward.1
$region0: #{discriminator_tcn_forward.1}
  #allocation0 [shape = 'u32[]', space=smem, size = 0x4, offset = 0x4, fixed_abs, tag = 'smem constant byte address 0x4 - core index']
  #allocation1 [shape = 'u32[72,128]{1,0:T(1,128)}', space=vmem, size = 0x9000, scoped, tag = 'internal scratch']
  #allocation2 [shape = 'f32[3,8,168]{2,1,0:T(8,128)}', space=vmem, size = 0x6000, scoped, tag = 'scratch operand']
  %s0 = inlined_call_operand.vmem [shape: f32[8,168], index: 0, kind: input, shape index: {}]
  %s1 = inlined_call_operand.vmem [shape: f32[8,32], index: 1, kind: input, shape index: {}]
  %s2 = inlined_call_operand.vmem [shape: bf16[3,6,168,384], index: 2, kind: input, shape index: {}]
  %s3 = inlined_call_operand.vmem [shape: bf16[3,6,384,168], index: 3, kind: input, shape index: {}]
  %s4 = inlined_call_operand.vmem [shape: f32[3,6], index: 4, kind: input, shape index: {}]
  %s5 = inlined_call_operand.vmem [shape: f32[3,6], index: 5, kind: input, shape index: {}]
  %s6 = inlined_call_operand.vmem [shape: f32[1,32], index: 6, kind: input, shape index: {}]
  %s7 = inlined_call_operand.vmem [shape: f32[6], index: 7, kind: input, shape index: {}]
  %s8 = inlined_call_operand.vmem [shape: f32[8,1], index: 8, kind: output, shape index: {}]
  %s9 = sld [smem:[#allocation0]]
  $region149: #{discriminator_tcn_forward.1} parent=0
    _
  %s11 = ssub.s32 1, %s9
  %s12 = scalar_select 0, %s11, %s9
  $region1: #{discriminator_tcn_forward.1} parent=0
    #allocation3 [shape = 'u8[774144]{0}', space=vmem, size = 0xbd000, scoped, tag = 'input window, operand 2']
    #allocation4 [shape = 'u8[1179648]{0}', space=vmem, size = 0x120000, scoped, tag = 'input window, operand 3']
    #allocation5 [shape = 'u8[2048]{0}', space=smem, size = 0x800, scoped, tag = 'input window, operand 4, single buffered']
    #allocation6 [shape = 's32[2]{0}', space=sflag, size = 0x8, scoped, tag = 'scoped memory for discriminator_tcn_forward.1']
    #allocation7 [shape = 'u8[2048]{0}', space=smem, size = 0x800, scoped, tag = 'input window, operand 5, single buffered']
    #allocation8 [shape = 's32[1]{0}', space=sflag, size = 0x4, scoped, tag = 'scoped memory for discriminator_tcn_forward.1']
    #allocation9 [shape = 'u8[512]{0}', space=smem, size = 0x200, scoped, tag = 'input window, operand 7, single buffered']
    %13 = vsyncpa [#allocation6], 0
    %14 = vsyncpa [#allocation8], 0
    loop: start=0, step=1, limit=8
    $region2: #{discriminator_tcn_forward.1} parent=1 // loop_pre_header
      _
    $region3: #{discriminator_tcn_forward.1} parent=1 // loop_header
      %s16 = sphi 0, %s20
      %p17 = scmp.ge.s32.totalorder %s16, 8
      %s23 = sphi 0, %s35
      %s24 = sphi 0, %s31
      %s25 = sphi 0, %s23
      %s26 = sphi 0, %s24
      %s27 = sphi 0, %s25
      %s28 = sphi 0, %s26
      %s38 = sphi 0, %s40
      %s41 = sphi 0, %s38
      %s42 = sphi 0, %s41
      %s58 = sphi 0, %s42
      %s64 = sphi 0, %s66
      %s67 = sphi 0, %s64
      %s68 = sphi 0, %s67
      %s84 = sphi 0, %s68
      %s90 = sphi 0, %s92
      %s93 = sphi 0, %s90
      %s94 = sphi 0, %s93
      %s110 = sphi 0, %s94
      %s116 = sphi 0, %s118
      %s119 = sphi 0, %s116
      %s120 = sphi 0, %s119
      %s136 = sphi 0, %s120
      %s140 = sphi 0, %s140
      %s142 = sphi 0, %s140
      %s143 = sphi 0, %s142
      %s157 = sphi 0, %s143
      %s161 = sphi 0, %s161
      %s163 = sphi 0, %s161
      %s164 = sphi 0, %s163
      %s178 = sphi 0, %s164
      %s182 = sphi 0, %s182
      %s184 = sphi 0, %s182
      %s185 = sphi 0, %s184
      %s199 = sphi 0, %s185
      %s203 = sphi 0, %s203
      %s205 = sphi 0, %s203
      %s206 = sphi 0, %s205
      %s220 = sphi 0, %s206
      %s226 = sphi 0, %s228
      %s229 = sphi 0, %s226
      %s230 = sphi 0, %s229
      %s246 = sphi 0, %s230
    $region4: #{discriminator_tcn_forward.1} parent=1 // loop_header_branch
      %19 = sbr.rel (%p17) target = $region8
    $region5: #{discriminator_tcn_forward.1} parent=1 // loop_body
      %s21 = ssub.s32 %s16, 1
      %s22 = ssub.s32 %s16, 2
      %s29 = sadd.s32 1, %s24
      %p30 = scmp.ge.s32.totalorder %s29, 6
      %s31 = scalar_select %p30, 0, %s29
      %s32 = sadd.s32 1, %s23
      %s33 = scalar_select %p30, %s32, %s23
      %p34 = scmp.ge.s32.totalorder %s33, 1
      %s35 = scalar_select %p34, 0, %s33
      %s36 = ssub.s32 %s23, %s35
      %p37 = scmp.eq.s32.totalorder %s36, 0
      %s39 = sadd.s32 %s38, 1
      %s40 = scalar_select %p37, %s38, %s39
      %p43 = pneg %p37
      %p44 = scmp.eq.s32.totalorder %s16, 5
      %p45 = por %p43, %p44
      %p46 = scmp.ne.s32.totalorder %s38, %s41
      %p47 = scmp.eq.s32.totalorder %s16, 0
      %p48 = por %p46, %p47
      %p49 = scmp.ne.s32.totalorder %s38, %s41
      %p50 = scmp.eq.s32.totalorder %s21, 5
      %p51 = por %p49, %p50
      %p52 = scmp.ne.s32.totalorder %s41, %s42
      %p53 = scmp.eq.s32.totalorder %s21, 0
      %p54 = por %p52, %p53
      %p55 = scmp.ne.s32.totalorder %s41, %s42
      %p56 = scmp.eq.s32.totalorder %s22, 5
      %p57 = por %p55, %p56
      %p59 = scmp.ne.s32.totalorder %s42, %s58
      %p60 = scmp.eq.s32.totalorder %s22, 0
      %p61 = por %p59, %p60
      %s62 = ssub.s32 %s23, %s35
      %p63 = scmp.eq.s32.totalorder %s62, 0
      %s65 = sadd.s32 %s64, 1
      %s66 = scalar_select %p63, %s64, %s65
      %p69 = pneg %p63
      %p70 = scmp.eq.s32.totalorder %s16, 5
      %p71 = por %p69, %p70
      %p72 = scmp.ne.s32.totalorder %s64, %s67
      %p73 = scmp.eq.s32.totalorder %s16, 0
      %p74 = por %p72, %p73
      %p75 = scmp.ne.s32.totalorder %s64, %s67
      %p76 = scmp.eq.s32.totalorder %s21, 5
      %p77 = por %p75, %p76
      %p78 = scmp.ne.s32.totalorder %s67, %s68
      %p79 = scmp.eq.s32.totalorder %s21, 0
      %p80 = por %p78, %p79
      %p81 = scmp.ne.s32.totalorder %s67, %s68
      %p82 = scmp.eq.s32.totalorder %s22, 5
      %p83 = por %p81, %p82
      %p85 = scmp.ne.s32.totalorder %s68, %s84
      %p86 = scmp.eq.s32.totalorder %s22, 0
      %p87 = por %p85, %p86
      %s88 = ssub.s32 %s24, %s31
      %p89 = scmp.eq.s32.totalorder %s88, 0
      %s91 = sadd.s32 %s90, 1
      %s92 = scalar_select %p89, %s90, %s91
      %p95 = pneg %p89
      %p96 = scmp.eq.s32.totalorder %s16, 5
      %p97 = por %p95, %p96
      %p98 = scmp.ne.s32.totalorder %s90, %s93
      %p99 = scmp.eq.s32.totalorder %s16, 0
      %p100 = por %p98, %p99
      %p101 = scmp.ne.s32.totalorder %s90, %s93
      %p102 = scmp.eq.s32.totalorder %s21, 5
      %p103 = por %p101, %p102
      %p104 = scmp.ne.s32.totalorder %s93, %s94
      %p105 = scmp.eq.s32.totalorder %s21, 0
      %p106 = por %p104, %p105
      %p107 = scmp.ne.s32.totalorder %s93, %s94
      %p108 = scmp.eq.s32.totalorder %s22, 5
      %p109 = por %p107, %p108
      %p111 = scmp.ne.s32.totalorder %s94, %s110
      %p112 = scmp.eq.s32.totalorder %s22, 0
      %p113 = por %p111, %p112
      %s114 = ssub.s32 %s24, %s31
      %p115 = scmp.eq.s32.totalorder %s114, 0
      %s117 = sadd.s32 %s116, 1
      %s118 = scalar_select %p115, %s116, %s117
      %p121 = pneg %p115
      %p122 = scmp.eq.s32.totalorder %s16, 5
      %p123 = por %p121, %p122
      %p124 = scmp.ne.s32.totalorder %s116, %s119
      %p125 = scmp.eq.s32.totalorder %s16, 0
      %p126 = por %p124, %p125
      %p127 = scmp.ne.s32.totalorder %s116, %s119
      %p128 = scmp.eq.s32.totalorder %s21, 5
      %p129 = por %p127, %p128
      %p130 = scmp.ne.s32.totalorder %s119, %s120
      %p131 = scmp.eq.s32.totalorder %s21, 0
      %p132 = por %p130, %p131
      %p133 = scmp.ne.s32.totalorder %s119, %s120
      %p134 = scmp.eq.s32.totalorder %s22, 5
      %p135 = por %p133, %p134
      %p137 = scmp.ne.s32.totalorder %s120, %s136
      %p138 = scmp.eq.s32.totalorder %s22, 0
      %p139 = por %p137, %p138
      %s141 = sadd.s32 %s140, 1
      %p144 = scmp.eq.s32.totalorder %s16, 5
      %p145 = scmp.ne.s32.totalorder %s140, %s142
      %p146 = scmp.eq.s32.totalorder %s16, 0
      %p147 = por %p145, %p146
      %p148 = scmp.ne.s32.totalorder %s140, %s142
      %p149 = scmp.eq.s32.totalorder %s21, 5
      %p150 = por %p148, %p149
      %p151 = scmp.ne.s32.totalorder %s142, %s143
      %p152 = scmp.eq.s32.totalorder %s21, 0
      %p153 = por %p151, %p152
      %p154 = scmp.ne.s32.totalorder %s142, %s143
      %p155 = scmp.eq.s32.totalorder %s22, 5
      %p156 = por %p154, %p155
      %p158 = scmp.ne.s32.totalorder %s143, %s157
      %p159 = scmp.eq.s32.totalorder %s22, 0
      %p160 = por %p158, %p159
      %s162 = sadd.s32 %s161, 1
      %p165 = scmp.eq.s32.totalorder %s16, 5
      %p166 = scmp.ne.s32.totalorder %s161, %s163
      %p167 = scmp.eq.s32.totalorder %s16, 0
      %p168 = por %p166, %p167
      %p169 = scmp.ne.s32.totalorder %s161, %s163
      %p170 = scmp.eq.s32.totalorder %s21, 5
      %p171 = por %p169, %p170
      %p172 = scmp.ne.s32.totalorder %s163, %s164
      %p173 = scmp.eq.s32.totalorder %s21, 0
      %p174 = por %p172, %p173
      %p175 = scmp.ne.s32.totalorder %s163, %s164
      %p176 = scmp.eq.s32.totalorder %s22, 5
      %p177 = por %p175, %p176
      %p179 = scmp.ne.s32.totalorder %s164, %s178
      %p180 = scmp.eq.s32.totalorder %s22, 0
      %p181 = por %p179, %p180
      %s183 = sadd.s32 %s182, 1
      %p186 = scmp.eq.s32.totalorder %s16, 5
      %p187 = scmp.ne.s32.totalorder %s182, %s184
      %p188 = scmp.eq.s32.totalorder %s16, 0
      %p189 = por %p187, %p188
      %p190 = scmp.ne.s32.totalorder %s182, %s184
      %p191 = scmp.eq.s32.totalorder %s21, 5
      %p192 = por %p190, %p191
      %p193 = scmp.ne.s32.totalorder %s184, %s185
      %p194 = scmp.eq.s32.totalorder %s21, 0
      %p195 = por %p193, %p194
      %p196 = scmp.ne.s32.totalorder %s184, %s185
      %p197 = scmp.eq.s32.totalorder %s22, 5
      %p198 = por %p196, %p197
      %p200 = scmp.ne.s32.totalorder %s185, %s199
      %p201 = scmp.eq.s32.totalorder %s22, 0
      %p202 = por %p200, %p201
      %s204 = sadd.s32 %s203, 1
      %p207 = scmp.eq.s32.totalorder %s16, 5
      %p208 = scmp.ne.s32.totalorder %s203, %s205
      %p209 = scmp.eq.s32.totalorder %s16, 0
      %p210 = por %p208, %p209
      %p211 = scmp.ne.s32.totalorder %s203, %s205
      %p212 = scmp.eq.s32.totalorder %s21, 5
      %p213 = por %p211, %p212
      %p214 = scmp.ne.s32.totalorder %s205, %s206
      %p215 = scmp.eq.s32.totalorder %s21, 0
      %p216 = por %p214, %p215
      %p217 = scmp.ne.s32.totalorder %s205, %s206
      %p218 = scmp.eq.s32.totalorder %s22, 5
      %p219 = por %p217, %p218
      %p221 = scmp.ne.s32.totalorder %s206, %s220
      %p222 = scmp.eq.s32.totalorder %s22, 0
      %p223 = por %p221, %p222
      %s224 = ssub.s32 %s23, %s35
      %p225 = scmp.eq.s32.totalorder %s224, 0
      %s227 = sadd.s32 %s226, 1
      %s228 = scalar_select %p225, %s226, %s227
      %p231 = pneg %p225
      %p232 = scmp.eq.s32.totalorder %s16, 5
      %p233 = por %p231, %p232
      %p234 = scmp.ne.s32.totalorder %s226, %s229
      %p235 = scmp.eq.s32.totalorder %s16, 0
      %p236 = por %p234, %p235
      %p237 = scmp.ne.s32.totalorder %s226, %s229
      %p238 = scmp.eq.s32.totalorder %s21, 5
      %p239 = por %p237, %p238
      %p240 = scmp.ne.s32.totalorder %s229, %s230
      %p241 = scmp.eq.s32.totalorder %s21, 0
      %p242 = por %p240, %p241
      %p243 = scmp.ne.s32.totalorder %s229, %s230
      %p244 = scmp.eq.s32.totalorder %s22, 5
      %p245 = por %p243, %p244
      %p247 = scmp.ne.s32.totalorder %s230, %s246
      %p248 = scmp.eq.s32.totalorder %s22, 0
      %p249 = por %p247, %p248
      %p250 = scmp.le.s32.totalorder 1, %s16
      %p251 = scmp.lt.s32.totalorder %s16, 7
      %p252 = pnand %p250, %p251
      %p253 = pneg %p252
      // Predicated region
      $region9: #{discriminator_tcn_forward.1} parent=5 // pred_check
        _
      $region10: #{discriminator_tcn_forward.1} parent=5 // pred_check_branch
        %255 = sbr.rel (%p252) target = $region12
      $region11: #{discriminator_tcn_forward.1} parent=5 // pred_region
        %s256 = ssub.s32 %s16, 1
        // Predicated region
        $region13: #{discriminator_tcn_forward.1} parent=11 // pred_check
          %p257 = pneg %p54
        $region14: #{discriminator_tcn_forward.1} parent=11 // pred_check_branch
          %259 = sbr.rel (%p257) target = $region16
        $region15: #{discriminator_tcn_forward.1} parent=11 // pred_region
          %p260 = scmp.lt.s32.totalorder %s25, 0
          %s261 = scalar_select %p260, %s25, 0
          %s262 = smul.addr %s261, 2
          %s263 = smul.addr %s262, 8
          %s264 = scalar_lea.vmem %s0, %s263
        $region16: #{discriminator_tcn_forward.1} parent=11 // pred_fallthru
          _
        // Predicated region
        $region17: #{discriminator_tcn_forward.1} parent=11 // pred_check
          %p265 = pneg %p80
        $region18: #{discriminator_tcn_forward.1} parent=11 // pred_check_branch
          %267 = sbr.rel (%p265) target = $region20
        $region19: #{discriminator_tcn_forward.1} parent=11 // pred_region
          %p268 = scmp.lt.s32.totalorder %s25, 0
          %s269 = scalar_select %p268, %s25, 0
          %s270 = smul.addr %s269, 8
          %s271 = scalar_lea.vmem %s1, %s270
        $region20: #{discriminator_tcn_forward.1} parent=11 // pred_fallthru
          _
        // Predicated region
        $region21: #{discriminator_tcn_forward.1} parent=11 // pred_check
          %p272 = pneg %p153
        $region22: #{discriminator_tcn_forward.1} parent=11 // pred_check_branch
          %274 = sbr.rel (%p272) target = $region24
        $region23: #{discriminator_tcn_forward.1} parent=11 // pred_region
          %276 = vsyncadd [#allocation6], 0
          %s278 = sshll.u32 %s4, 4
          %s279 = int_to_ptr.vmem [resolvable:$true] %s278
          %281 = dma.vmem_to_smem %s279, 64, [#allocation5], [#allocation6]
        $region24: #{discriminator_tcn_forward.1} parent=11 // pred_fallthru
          _
        // Predicated region
        $region25: #{discriminator_tcn_forward.1} parent=11 // pred_check
          %p282 = pneg %p174
        $region26: #{discriminator_tcn_forward.1} parent=11 // pred_check_branch
          %284 = sbr.rel (%p282) target = $region28
        $region27: #{discriminator_tcn_forward.1} parent=11 // pred_region
          %286 = vsyncadd [#allocation8], 0
          %s288 = sshll.u32 %s5, 4
          %s289 = int_to_ptr.vmem [resolvable:$true] %s288
          %291 = dma.vmem_to_smem %s289, 64, [#allocation7], [#allocation8]
        $region28: #{discriminator_tcn_forward.1} parent=11 // pred_fallthru
          _
        // Predicated region
        $region29: #{discriminator_tcn_forward.1} parent=11 // pred_check
          %p292 = pneg %p195
        $region30: #{discriminator_tcn_forward.1} parent=11 // pred_check_branch
          %294 = sbr.rel (%p292) target = $region32
        $region31: #{discriminator_tcn_forward.1} parent=11 // pred_region
          _
        $region32: #{discriminator_tcn_forward.1} parent=11 // pred_fallthru
          _
        // Predicated region
        $region33: #{discriminator_tcn_forward.1} parent=11 // pred_check
          %p295 = pneg %p216
        $region34: #{discriminator_tcn_forward.1} parent=11 // pred_check_branch
          %297 = sbr.rel (%p295) target = $region36
        $region35: #{discriminator_tcn_forward.1} parent=11 // pred_region
          %299 = vsyncadd [#allocation8], 0
          %s301 = sshll.u32 %s7, 4
          %s302 = int_to_ptr.vmem [resolvable:$true] %s301
          %304 = dma.vmem_to_smem %s302, 16, [#allocation9], [#allocation8]
        $region36: #{discriminator_tcn_forward.1} parent=11 // pred_fallthru
          _
      $region12: #{discriminator_tcn_forward.1} parent=5 // pred_fallthru
        _
      %p305 = scmp.lt.s32.totalorder %s16, 6
      // Predicated region
      $region37: #{discriminator_tcn_forward.1} parent=5 // pred_check
        %p306 = pneg %p305
      $region38: #{discriminator_tcn_forward.1} parent=5 // pred_check_branch
        %308 = sbr.rel (%p306) target = $region40
      $region39: #{discriminator_tcn_forward.1} parent=5 // pred_region
        // Predicated region
        $region41: #{discriminator_tcn_forward.1} parent=39 // pred_check
          %p309 = pneg %p100
        $region42: #{discriminator_tcn_forward.1} parent=39 // pred_check_branch
          %311 = sbr.rel (%p309) target = $region44
        $region43: #{discriminator_tcn_forward.1} parent=39 // pred_region
          %s312 = sand.u32 %s90, 1
          %s313 = sand.u32 %s90, 1
          %s314 = smul.addr %s313, 756
          %s315 = scalar_lea.vmem [#allocation3], %s314
          %s316 = smul.addr %s24, 63
          %s317 = smul.addr %s316, 4
          %s318 = scalar_lea.vmem %s2, %s317
          // Predicated region
          $region45: #{discriminator_tcn_forward.1} parent=43 // pred_check
            _
          $region46: #{discriminator_tcn_forward.1} parent=43 // pred_check_branch
            %320 = sbr.rel (0) target = $region48
          $region47: #{discriminator_tcn_forward.1} parent=43 // pred_region
            // Predicated region
            $region49: #{discriminator_tcn_forward.1} parent=47 // pred_check
              _
            $region50: #{discriminator_tcn_forward.1} parent=47 // pred_check_branch
              %322 = sbr.rel (0) target = $region52
            $region51: #{discriminator_tcn_forward.1} parent=47 // pred_region
              %s323 = scalar_lea.vmem %s318, 8
              %s324 = scalar_lea.vmem %s315, 8 [#allocation3]
              loop: start=0, step=1, limit=1
              $region53: #{discriminator_tcn_forward.1} parent=51 // loop_pre_header
                _
              $region54: #{discriminator_tcn_forward.1} parent=51 // loop_header
                %s326 = sphi 0, %s330
                %p327 = scmp.ge.s32.totalorder %s326, 1
                %s331 = sphi %s318, %s318
                %s332 = sphi %s315, %s315
              $region55: #{discriminator_tcn_forward.1} parent=51 // loop_header_branch
                %329 = sbr.rel (%p327) target = $region59
              $region56: #{discriminator_tcn_forward.1} parent=51 // loop_body
                %v333 = vld [vmem:[%s331] sm:$0xff]
                %334 = vst [vmem:[%s332] sm:$0xff] %v333
                %v335 = vld [vmem:[%s331 + $0xc] sm:$0xff]
                %336 = vst [vmem:[%s332 + $0xc] sm:$0xff] %v335
                %v337 = vld [vmem:[%s331 + $0x18] sm:$0xff]
                %338 = vst [vmem:[%s332 + $0x18] sm:$0xff] %v337
                %v339 = vld [vmem:[%s331 + $0x24] sm:$0xff]
                %340 = vst [vmem:[%s332 + $0x24] sm:$0xff] %v339
                %v341 = vld [vmem:[%s331 + $0x30] sm:$0xff]
                %342 = vst [vmem:[%s332 + $0x30] sm:$0xff] %v341
                %v343 = vld [vmem:[%s331 + $0x3c] sm:$0xff]
                %344 = vst [vmem:[%s332 + $0x3c] sm:$0xff] %v343
                %v345 = vld [vmem:[%s331 + $0x48] sm:$0xff]
                %346 = vst [vmem:[%s332 + $0x48] sm:$0xff] %v345
                %v347 = vld [vmem:[%s331 + $0x54] sm:$0xff]
                %348 = vst [vmem:[%s332 + $0x54] sm:$0xff] %v347
                %v349 = vld [vmem:[%s331 + $0x60] sm:$0xff]
                %350 = vst [vmem:[%s332 + $0x60] sm:$0xff] %v349
                %v351 = vld [vmem:[%s331 + $0x6c] sm:$0xff]
                %352 = vst [vmem:[%s332 + $0x6c] sm:$0xff] %v351
                %v353 = vld [vmem:[%s331 + $0x78] sm:$0xff]
                %354 = vst [vmem:[%s332 + $0x78] sm:$0xff] %v353
                %v355 = vld [vmem:[%s331 + $0x84] sm:$0xff]
                %356 = vst [vmem:[%s332 + $0x84] sm:$0xff] %v355
                %v357 = vld [vmem:[%s331 + $0x90] sm:$0xff]
                %358 = vst [vmem:[%s332 + $0x90] sm:$0xff] %v357
                %v359 = vld [vmem:[%s331 + $0x9c] sm:$0xff]
                %360 = vst [vmem:[%s332 + $0x9c] sm:$0xff] %v359
                %v361 = vld [vmem:[%s331 + $0xa8] sm:$0xff]
                %362 = vst [vmem:[%s332 + $0xa8] sm:$0xff] %v361
                %v363 = vld [vmem:[%s331 + $0xb4] sm:$0xff]
                %364 = vst [vmem:[%s332 + $0xb4] sm:$0xff] %v363
                %v365 = vld [vmem:[%s331 + $0xc0] sm:$0xff]
                %366 = vst [vmem:[%s332 + $0xc0] sm:$0xff] %v365
                %v367 = vld [vmem:[%s331 + $0xcc] sm:$0xff]
                %368 = vst [vmem:[%s332 + $0xcc] sm:$0xff] %v367
                %v369 = vld [vmem:[%s331 + $0xd8] sm:$0xff]
                %370 = vst [vmem:[%s332 + $0xd8] sm:$0xff] %v369
                %v371 = vld [vmem:[%s331 + $0xe4] sm:$0xff]
                %372 = vst [vmem:[%s332 + $0xe4] sm:$0xff] %v371
                %v373 = vld [vmem:[%s331 + $0xf0] sm:$0xff]
                %374 = vst [vmem:[%s332 + $0xf0] sm:$0xff] %v373
                %v375 = vld [vmem:[%s331 + $0x5e8] sm:$0xff]
                %376 = vst [vmem:[%s332 + $0xfc] sm:$0xff] %v375
                %v377 = vld [vmem:[%s331 + $0x5f4] sm:$0xff]
                %378 = vst [vmem:[%s332 + $0x108] sm:$0xff] %v377
                %v379 = vld [vmem:[%s331 + $0x600] sm:$0xff]
                %380 = vst [vmem:[%s332 + $0x114] sm:$0xff] %v379
                %v381 = vld [vmem:[%s331 + $0x60c] sm:$0xff]
                %382 = vst [vmem:[%s332 + $0x120] sm:$0xff] %v381
                %v383 = vld [vmem:[%s331 + $0x618] sm:$0xff]
                %384 = vst [vmem:[%s332 + $0x12c] sm:$0xff] %v383
                %v385 = vld [vmem:[%s331 + $0x624] sm:$0xff]
                %386 = vst [vmem:[%s332 + $0x138] sm:$0xff] %v385
                %v387 = vld [vmem:[%s331 + $0x630] sm:$0xff]
                %388 = vst [vmem:[%s332 + $0x144] sm:$0xff] %v387
                %v389 = vld [vmem:[%s331 + $0x63c] sm:$0xff]
                %390 = vst [vmem:[%s332 + $0x150] sm:$0xff] %v389
                %v391 = vld [vmem:[%s331 + $0x648] sm:$0xff]
                %392 = vst [vmem:[%s332 + $0x15c] sm:$0xff] %v391
                %v393 = vld [vmem:[%s331 + $0x654] sm:$0xff]
                %394 = vst [vmem:[%s332 + $0x168] sm:$0xff] %v393
                %v395 = vld [vmem:[%s331 + $0x660] sm:$0xff]
                %396 = vst [vmem:[%s332 + $0x174] sm:$0xff] %v395
                %v397 = vld [vmem:[%s331 + $0x66c] sm:$0xff]
                %398 = vst [vmem:[%s332 + $0x180] sm:$0xff] %v397
                %v399 = vld [vmem:[%s331 + $0x678] sm:$0xff]
                %400 = vst [vmem:[%s332 + $0x18c] sm:$0xff] %v399
                %v401 = vld [vmem:[%s331 + $0x684] sm:$0xff]
                %402 = vst [vmem:[%s332 + $0x198] sm:$0xff] %v401
                %v403 = vld [vmem:[%s331 + $0x690] sm:$0xff]
                %404 = vst [vmem:[%s332 + $0x1a4] sm:$0xff] %v403
                %v405 = vld [vmem:[%s331 + $0x69c] sm:$0xff]
                %406 = vst [vmem:[%s332 + $0x1b0] sm:$0xff] %v405
                %v407 = vld [vmem:[%s331 + $0x6a8] sm:$0xff]
                %408 = vst [vmem:[%s332 + $0x1bc] sm:$0xff] %v407
                %v409 = vld [vmem:[%s331 + $0x6b4] sm:$0xff]
                %410 = vst [vmem:[%s332 + $0x1c8] sm:$0xff] %v409
                %v411 = vld [vmem:[%s331 + $0x6c0] sm:$0xff]
                %412 = vst [vmem:[%s332 + $0x1d4] sm:$0xff] %v411
                %v413 = vld [vmem:[%s331 + $0x6cc] sm:$0xff]
                %414 = vst [vmem:[%s332 + $0x1e0] sm:$0xff] %v413
                %v415 = vld [vmem:[%s331 + $0x6d8] sm:$0xff]
                %416 = vst [vmem:[%s332 + $0x1ec] sm:$0xff] %v415
                %v417 = vld [vmem:[%s331 + $0xbd0] sm:$0xff]
                %418 = vst [vmem:[%s332 + $0x1f8] sm:$0xff] %v417
                %v419 = vld [vmem:[%s331 + $0xbdc] sm:$0xff]
                %420 = vst [vmem:[%s332 + $0x204] sm:$0xff] %v419
                %v421 = vld [vmem:[%s331 + $0xbe8] sm:$0xff]
                %422 = vst [vmem:[%s332 + $0x210] sm:$0xff] %v421
                %v423 = vld [vmem:[%s331 + $0xbf4] sm:$0xff]
                %424 = vst [vmem:[%s332 + $0x21c] sm:$0xff] %v423
                %v425 = vld [vmem:[%s331 + $0xc00] sm:$0xff]
                %426 = vst [vmem:[%s332 + $0x228] sm:$0xff] %v425
                %v427 = vld [vmem:[%s331 + $0xc0c] sm:$0xff]
                %428 = vst [vmem:[%s332 + $0x234] sm:$0xff] %v427
                %v429 = vld [vmem:[%s331 + $0xc18] sm:$0xff]
                %430 = vst [vmem:[%s332 + $0x240] sm:$0xff] %v429
                %v431 = vld [vmem:[%s331 + $0xc24] sm:$0xff]
                %432 = vst [vmem:[%s332 + $0x24c] sm:$0xff] %v431
                %v433 = vld [vmem:[%s331 + $0xc30] sm:$0xff]
                %434 = vst [vmem:[%s332 + $0x258] sm:$0xff] %v433
                %v435 = vld [vmem:[%s331 + $0xc3c] sm:$0xff]
                %436 = vst [vmem:[%s332 + $0x264] sm:$0xff] %v435
                %v437 = vld [vmem:[%s331 + $0xc48] sm:$0xff]
                %438 = vst [vmem:[%s332 + $0x270] sm:$0xff] %v437
                %v439 = vld [vmem:[%s331 + $0xc54] sm:$0xff]
                %440 = vst [vmem:[%s332 + $0x27c] sm:$0xff] %v439
                %v441 = vld [vmem:[%s331 + $0xc60] sm:$0xff]
                %442 = vst [vmem:[%s332 + $0x288] sm:$0xff] %v441
                %v443 = vld [vmem:[%s331 + $0xc6c] sm:$0xff]
                %444 = vst [vmem:[%s332 + $0x294] sm:$0xff] %v443
                %v445 = vld [vmem:[%s331 + $0xc78] sm:$0xff]
                %446 = vst [vmem:[%s332 + $0x2a0] sm:$0xff] %v445
                %v447 = vld [vmem:[%s331 + $0xc84] sm:$0xff]
                %448 = vst [vmem:[%s332 + $0x2ac] sm:$0xff] %v447
                %v449 = vld [vmem:[%s331 + $0xc90] sm:$0xff]
                %450 = vst [vmem:[%s332 + $0x2b8] sm:$0xff] %v449
                %v451 = vld [vmem:[%s331 + $0xc9c] sm:$0xff]
                %452 = vst [vmem:[%s332 + $0x2c4] sm:$0xff] %v451
                %v453 = vld [vmem:[%s331 + $0xca8] sm:$0xff]
                %454 = vst [vmem:[%s332 + $0x2d0] sm:$0xff] %v453
                %v455 = vld [vmem:[%s331 + $0xcb4] sm:$0xff]
                %456 = vst [vmem:[%s332 + $0x2dc] sm:$0xff] %v455
                %v457 = vld [vmem:[%s331 + $0xcc0] sm:$0xff]
                %458 = vst [vmem:[%s332 + $0x2e8] sm:$0xff] %v457
              $region57: #{discriminator_tcn_forward.1} parent=51 // loop_footer
                %s330 = sadd.s32 1, %s326
              $region58: #{discriminator_tcn_forward.1} parent=51 // loop_footer_branch
                %325 = sbr.rel target = $region54
              $region59: #{discriminator_tcn_forward.1} parent=51 // loop_exit
                _
              %s460 = ssub.s32 16, 1
              loop: start=0, step=1, limit=1
              $region60: #{discriminator_tcn_forward.1} parent=51 // loop_pre_header
                _
              $region61: #{discriminator_tcn_forward.1} parent=51 // loop_header
                %s462 = sphi 0, %s466
                %p463 = scmp.ge.s32.totalorder %s462, 1
                %s467 = sphi %s323, %s323
                %s468 = sphi %s324, %s324
              $region62: #{discriminator_tcn_forward.1} parent=51 // loop_header_branch
                %465 = sbr.rel (%p463) target = $region66
              $region63: #{discriminator_tcn_forward.1} parent=51 // loop_body
                %v469 = vld [vmem:[%s467] sm:%s460]
                %470 = vst [vmem:[%s468] sm:%s460] %v469
                %v471 = vld [vmem:[%s467 + $0xc] sm:%s460]
                %472 = vst [vmem:[%s468 + $0xc] sm:%s460] %v471
                %v473 = vld [vmem:[%s467 + $0x18] sm:%s460]
                %474 = vst [vmem:[%s468 + $0x18] sm:%s460] %v473
                %v475 = vld [vmem:[%s467 + $0x24] sm:%s460]
                %476 = vst [vmem:[%s468 + $0x24] sm:%s460] %v475
                %v477 = vld [vmem:[%s467 + $0x30] sm:%s460]
                %478 = vst [vmem:[%s468 + $0x30] sm:%s460] %v477
                %v479 = vld [vmem:[%s467 + $0x3c] sm:%s460]
                %480 = vst [vmem:[%s468 + $0x3c] sm:%s460] %v479
                %v481 = vld [vmem:[%s467 + $0x48] sm:%s460]
                %482 = vst [vmem:[%s468 + $0x48] sm:%s460] %v481
                %v483 = vld [vmem:[%s467 + $0x54] sm:%s460]
                %484 = vst [vmem:[%s468 + $0x54] sm:%s460] %v483
                %v485 = vld [vmem:[%s467 + $0x60] sm:%s460]
                %486 = vst [vmem:[%s468 + $0x60] sm:%s460] %v485
                %v487 = vld [vmem:[%s467 + $0x6c] sm:%s460]
                %488 = vst [vmem:[%s468 + $0x6c] sm:%s460] %v487
                %v489 = vld [vmem:[%s467 + $0x78] sm:%s460]
                %490 = vst [vmem:[%s468 + $0x78] sm:%s460] %v489
                %v491 = vld [vmem:[%s467 + $0x84] sm:%s460]
                %492 = vst [vmem:[%s468 + $0x84] sm:%s460] %v491
                %v493 = vld [vmem:[%s467 + $0x90] sm:%s460]
                %494 = vst [vmem:[%s468 + $0x90] sm:%s460] %v493
                %v495 = vld [vmem:[%s467 + $0x9c] sm:%s460]
                %496 = vst [vmem:[%s468 + $0x9c] sm:%s460] %v495
                %v497 = vld [vmem:[%s467 + $0xa8] sm:%s460]
                %498 = vst [vmem:[%s468 + $0xa8] sm:%s460] %v497
                %v499 = vld [vmem:[%s467 + $0xb4] sm:%s460]
                %500 = vst [vmem:[%s468 + $0xb4] sm:%s460] %v499
                %v501 = vld [vmem:[%s467 + $0xc0] sm:%s460]
                %502 = vst [vmem:[%s468 + $0xc0] sm:%s460] %v501
                %v503 = vld [vmem:[%s467 + $0xcc] sm:%s460]
                %504 = vst [vmem:[%s468 + $0xcc] sm:%s460] %v503
                %v505 = vld [vmem:[%s467 + $0xd8] sm:%s460]
                %506 = vst [vmem:[%s468 + $0xd8] sm:%s460] %v505
                %v507 = vld [vmem:[%s467 + $0xe4] sm:%s460]
                %508 = vst [vmem:[%s468 + $0xe4] sm:%s460] %v507
                %v509 = vld [vmem:[%s467 + $0xf0] sm:%s460]
                %510 = vst [vmem:[%s468 + $0xf0] sm:%s460] %v509
                %v511 = vld [vmem:[%s467 + $0x5e8] sm:%s460]
                %512 = vst [vmem:[%s468 + $0xfc] sm:%s460] %v511
                %v513 = vld [vmem:[%s467 + $0x5f4] sm:%s460]
                %514 = vst [vmem:[%s468 + $0x108] sm:%s460] %v513
                %v515 = vld [vmem:[%s467 + $0x600] sm:%s460]
                %516 = vst [vmem:[%s468 + $0x114] sm:%s460] %v515
                %v517 = vld [vmem:[%s467 + $0x60c] sm:%s460]
                %518 = vst [vmem:[%s468 + $0x120] sm:%s460] %v517
                %v519 = vld [vmem:[%s467 + $0x618] sm:%s460]
                %520 = vst [vmem:[%s468 + $0x12c] sm:%s460] %v519
                %v521 = vld [vmem:[%s467 + $0x624] sm:%s460]
                %522 = vst [vmem:[%s468 + $0x138] sm:%s460] %v521
                %v523 = vld [vmem:[%s467 + $0x630] sm:%s460]
                %524 = vst [vmem:[%s468 + $0x144] sm:%s460] %v523
                %v525 = vld [vmem:[%s467 + $0x63c] sm:%s460]
                %526 = vst [vmem:[%s468 + $0x150] sm:%s460] %v525
                %v527 = vld [vmem:[%s467 + $0x648] sm:%s460]
                %528 = vst [vmem:[%s468 + $0x15c] sm:%s460] %v527
                %v529 = vld [vmem:[%s467 + $0x654] sm:%s460]
                %530 = vst [vmem:[%s468 + $0x168] sm:%s460] %v529
                %v531 = vld [vmem:[%s467 + $0x660] sm:%s460]
                %532 = vst [vmem:[%s468 + $0x174] sm:%s460] %v531
                %v533 = vld [vmem:[%s467 + $0x66c] sm:%s460]
                %534 = vst [vmem:[%s468 + $0x180] sm:%s460] %v533
                %v535 = vld [vmem:[%s467 + $0x678] sm:%s460]
                %536 = vst [vmem:[%s468 + $0x18c] sm:%s460] %v535
                %v537 = vld [vmem:[%s467 + $0x684] sm:%s460]
                %538 = vst [vmem:[%s468 + $0x198] sm:%s460] %v537
                %v539 = vld [vmem:[%s467 + $0x690] sm:%s460]
                %540 = vst [vmem:[%s468 + $0x1a4] sm:%s460] %v539
                %v541 = vld [vmem:[%s467 + $0x69c] sm:%s460]
                %542 = vst [vmem:[%s468 + $0x1b0] sm:%s460] %v541
                %v543 = vld [vmem:[%s467 + $0x6a8] sm:%s460]
                %544 = vst [vmem:[%s468 + $0x1bc] sm:%s460] %v543
                %v545 = vld [vmem:[%s467 + $0x6b4] sm:%s460]
                %546 = vst [vmem:[%s468 + $0x1c8] sm:%s460] %v545
                %v547 = vld [vmem:[%s467 + $0x6c0] sm:%s460]
                %548 = vst [vmem:[%s468 + $0x1d4] sm:%s460] %v547
                %v549 = vld [vmem:[%s467 + $0x6cc] sm:%s460]
                %550 = vst [vmem:[%s468 + $0x1e0] sm:%s460] %v549
                %v551 = vld [vmem:[%s467 + $0x6d8] sm:%s460]
                %552 = vst [vmem:[%s468 + $0x1ec] sm:%s460] %v551
                %v553 = vld [vmem:[%s467 + $0xbd0] sm:%s460]
                %554 = vst [vmem:[%s468 + $0x1f8] sm:%s460] %v553
                %v555 = vld [vmem:[%s467 + $0xbdc] sm:%s460]
                %556 = vst [vmem:[%s468 + $0x204] sm:%s460] %v555
                %v557 = vld [vmem:[%s467 + $0xbe8] sm:%s460]
                %558 = vst [vmem:[%s468 + $0x210] sm:%s460] %v557
                %v559 = vld [vmem:[%s467 + $0xbf4] sm:%s460]
                %560 = vst [vmem:[%s468 + $0x21c] sm:%s460] %v559
                %v561 = vld [vmem:[%s467 + $0xc00] sm:%s460]
                %562 = vst [vmem:[%s468 + $0x228] sm:%s460] %v561
                %v563 = vld [vmem:[%s467 + $0xc0c] sm:%s460]
                %564 = vst [vmem:[%s468 + $0x234] sm:%s460] %v563
                %v565 = vld [vmem:[%s467 + $0xc18] sm:%s460]
                %566 = vst [vmem:[%s468 + $0x240] sm:%s460] %v565
                %v567 = vld [vmem:[%s467 + $0xc24] sm:%s460]
                %568 = vst [vmem:[%s468 + $0x24c] sm:%s460] %v567
                %v569 = vld [vmem:[%s467 + $0xc30] sm:%s460]
                %570 = vst [vmem:[%s468 + $0x258] sm:%s460] %v569
                %v571 = vld [vmem:[%s467 + $0xc3c] sm:%s460]
                %572 = vst [vmem:[%s468 + $0x264] sm:%s460] %v571
                %v573 = vld [vmem:[%s467 + $0xc48] sm:%s460]
                %574 = vst [vmem:[%s468 + $0x270] sm:%s460] %v573
                %v575 = vld [vmem:[%s467 + $0xc54] sm:%s460]
                %576 = vst [vmem:[%s468 + $0x27c] sm:%s460] %v575
                %v577 = vld [vmem:[%s467 + $0xc60] sm:%s460]
                %578 = vst [vmem:[%s468 + $0x288] sm:%s460] %v577
                %v579 = vld [vmem:[%s467 + $0xc6c] sm:%s460]
                %580 = vst [vmem:[%s468 + $0x294] sm:%s460] %v579
                %v581 = vld [vmem:[%s467 + $0xc78] sm:%s460]
                %582 = vst [vmem:[%s468 + $0x2a0] sm:%s460] %v581
                %v583 = vld [vmem:[%s467 + $0xc84] sm:%s460]
                %584 = vst [vmem:[%s468 + $0x2ac] sm:%s460] %v583
                %v585 = vld [vmem:[%s467 + $0xc90] sm:%s460]
                %586 = vst [vmem:[%s468 + $0x2b8] sm:%s460] %v585
                %v587 = vld [vmem:[%s467 + $0xc9c] sm:%s460]
                %588 = vst [vmem:[%s468 + $0x2c4] sm:%s460] %v587
                %v589 = vld [vmem:[%s467 + $0xca8] sm:%s460]
                %590 = vst [vmem:[%s468 + $0x2d0] sm:%s460] %v589
                %v591 = vld [vmem:[%s467 + $0xcb4] sm:%s460]
                %592 = vst [vmem:[%s468 + $0x2dc] sm:%s460] %v591
                %v593 = vld [vmem:[%s467 + $0xcc0] sm:%s460]
                %594 = vst [vmem:[%s468 + $0x2e8] sm:%s460] %v593
              $region64: #{discriminator_tcn_forward.1} parent=51 // loop_footer
                %s466 = sadd.s32 1, %s462
              $region65: #{discriminator_tcn_forward.1} parent=51 // loop_footer_branch
                %461 = sbr.rel target = $region61
              $region66: #{discriminator_tcn_forward.1} parent=51 // loop_exit
                _
            $region52: #{discriminator_tcn_forward.1} parent=47 // pred_fallthru
              _
          $region48: #{discriminator_tcn_forward.1} parent=43 // pred_fallthru
            _
          %595 = vnop
        $region44: #{discriminator_tcn_forward.1} parent=39 // pred_fallthru
          _
        // Predicated region
        $region67: #{discriminator_tcn_forward.1} parent=39 // pred_check
          %p596 = pneg %p126
        $region68: #{discriminator_tcn_forward.1} parent=39 // pred_check_branch
          %598 = sbr.rel (%p596) target = $region70
        $region69: #{discriminator_tcn_forward.1} parent=39 // pred_region
          %s599 = sand.u32 %s116, 1
          %s600 = sand.u32 %s116, 1
          %s601 = smul.addr %s600, 1152
          %s602 = scalar_lea.vmem [#allocation4], %s601
          %s603 = smul.addr %s24, 96
          %s604 = smul.addr %s603, 4
          %s605 = scalar_lea.vmem %s3, %s604
          // Predicated region
          $region71: #{discriminator_tcn_forward.1} parent=69 // pred_check
            _
          $region72: #{discriminator_tcn_forward.1} parent=69 // pred_check_branch
            %607 = sbr.rel (0) target = $region74
          $region73: #{discriminator_tcn_forward.1} parent=69 // pred_region
            // Predicated region
            $region75: #{discriminator_tcn_forward.1} parent=73 // pred_check
              _
            $region76: #{discriminator_tcn_forward.1} parent=73 // pred_check_branch
              %609 = sbr.rel (0) target = $region78
            $region77: #{discriminator_tcn_forward.1} parent=73 // pred_region
              // Predicated region
              $region90: #{discriminator_tcn_forward.1} parent=77 // pred_check
                _
              $region91: #{discriminator_tcn_forward.1} parent=77 // pred_check_branch
                %911 = sbr.rel (0) target = $region93
              $region92: #{discriminator_tcn_forward.1} parent=77 // pred_region
                loop: start=0, step=1, limit=1
                $region94: #{discriminator_tcn_forward.1} parent=92 // loop_pre_header
                  _
                $region95: #{discriminator_tcn_forward.1} parent=92 // loop_header
                  %s913 = sphi 0, %s917
                  %p914 = scmp.ge.s32.totalorder %s913, 1
                  %s918 = sphi %s605, %s605
                  %s919 = sphi %s602, %s602
                $region96: #{discriminator_tcn_forward.1} parent=92 // loop_header_branch
                  %916 = sbr.rel (%p914) target = $region100
                $region97: #{discriminator_tcn_forward.1} parent=92 // loop_body
                  %v920 = vld [vmem:[%s918] sm:$0xff]
                  %921 = vst [vmem:[%s919] sm:$0xff] %v920
                  %v922 = vld [vmem:[%s918 + $0x8] sm:$0xff]
                  %923 = vst [vmem:[%s919 + $0x8] sm:$0xff] %v922
                  %v924 = vld [vmem:[%s918 + $0x10] sm:$0xff]
                  %925 = vst [vmem:[%s919 + $0x10] sm:$0xff] %v924
                  %v926 = vld [vmem:[%s918 + $0x18] sm:$0xff]
                  %927 = vst [vmem:[%s919 + $0x18] sm:$0xff] %v926
                  %v928 = vld [vmem:[%s918 + $0x20] sm:$0xff]
                  %929 = vst [vmem:[%s919 + $0x20] sm:$0xff] %v928
                  %v930 = vld [vmem:[%s918 + $0x28] sm:$0xff]
                  %931 = vst [vmem:[%s919 + $0x28] sm:$0xff] %v930
                  %v932 = vld [vmem:[%s918 + $0x30] sm:$0xff]
                  %933 = vst [vmem:[%s919 + $0x30] sm:$0xff] %v932
                  %v934 = vld [vmem:[%s918 + $0x38] sm:$0xff]
                  %935 = vst [vmem:[%s919 + $0x38] sm:$0xff] %v934
                  %v936 = vld [vmem:[%s918 + $0x40] sm:$0xff]
                  %937 = vst [vmem:[%s919 + $0x40] sm:$0xff] %v936
                  %v938 = vld [vmem:[%s918 + $0x48] sm:$0xff]
                  %939 = vst [vmem:[%s919 + $0x48] sm:$0xff] %v938
                  %v940 = vld [vmem:[%s918 + $0x50] sm:$0xff]
                  %941 = vst [vmem:[%s919 + $0x50] sm:$0xff] %v940
                  %v942 = vld [vmem:[%s918 + $0x58] sm:$0xff]
                  %943 = vst [vmem:[%s919 + $0x58] sm:$0xff] %v942
                  %v944 = vld [vmem:[%s918 + $0x60] sm:$0xff]
                  %945 = vst [vmem:[%s919 + $0x60] sm:$0xff] %v944
                  %v946 = vld [vmem:[%s918 + $0x68] sm:$0xff]
                  %947 = vst [vmem:[%s919 + $0x68] sm:$0xff] %v946
                  %v948 = vld [vmem:[%s918 + $0x70] sm:$0xff]
                  %949 = vst [vmem:[%s919 + $0x70] sm:$0xff] %v948
                  %v950 = vld [vmem:[%s918 + $0x78] sm:$0xff]
                  %951 = vst [vmem:[%s919 + $0x78] sm:$0xff] %v950
                  %v952 = vld [vmem:[%s918 + $0x80] sm:$0xff]
                  %953 = vst [vmem:[%s919 + $0x80] sm:$0xff] %v952
                  %v954 = vld [vmem:[%s918 + $0x88] sm:$0xff]
                  %955 = vst [vmem:[%s919 + $0x88] sm:$0xff] %v954
                  %v956 = vld [vmem:[%s918 + $0x90] sm:$0xff]
                  %957 = vst [vmem:[%s919 + $0x90] sm:$0xff] %v956
                  %v958 = vld [vmem:[%s918 + $0x98] sm:$0xff]
                  %959 = vst [vmem:[%s919 + $0x98] sm:$0xff] %v958
                  %v960 = vld [vmem:[%s918 + $0xa0] sm:$0xff]
                  %961 = vst [vmem:[%s919 + $0xa0] sm:$0xff] %v960
                  %v962 = vld [vmem:[%s918 + $0xa8] sm:$0xff]
                  %963 = vst [vmem:[%s919 + $0xa8] sm:$0xff] %v962
                  %v964 = vld [vmem:[%s918 + $0xb0] sm:$0xff]
                  %965 = vst [vmem:[%s919 + $0xb0] sm:$0xff] %v964
                  %v966 = vld [vmem:[%s918 + $0xb8] sm:$0xff]
                  %967 = vst [vmem:[%s919 + $0xb8] sm:$0xff] %v966
                  %v968 = vld [vmem:[%s918 + $0xc0] sm:$0xff]
                  %969 = vst [vmem:[%s919 + $0xc0] sm:$0xff] %v968
                  %v970 = vld [vmem:[%s918 + $0xc8] sm:$0xff]
                  %971 = vst [vmem:[%s919 + $0xc8] sm:$0xff] %v970
                  %v972 = vld [vmem:[%s918 + $0xd0] sm:$0xff]
                  %973 = vst [vmem:[%s919 + $0xd0] sm:$0xff] %v972
                  %v974 = vld [vmem:[%s918 + $0xd8] sm:$0xff]
                  %975 = vst [vmem:[%s919 + $0xd8] sm:$0xff] %v974
                  %v976 = vld [vmem:[%s918 + $0xe0] sm:$0xff]
                  %977 = vst [vmem:[%s919 + $0xe0] sm:$0xff] %v976
                  %v978 = vld [vmem:[%s918 + $0xe8] sm:$0xff]
                  %979 = vst [vmem:[%s919 + $0xe8] sm:$0xff] %v978
                  %v980 = vld [vmem:[%s918 + $0xf0] sm:$0xff]
                  %981 = vst [vmem:[%s919 + $0xf0] sm:$0xff] %v980
                  %v982 = vld [vmem:[%s918 + $0xf8] sm:$0xff]
                  %983 = vst [vmem:[%s919 + $0xf8] sm:$0xff] %v982
                  %v984 = vld [vmem:[%s918 + $0x100] sm:$0xff]
                  %985 = vst [vmem:[%s919 + $0x100] sm:$0xff] %v984
                  %v986 = vld [vmem:[%s918 + $0x108] sm:$0xff]
                  %987 = vst [vmem:[%s919 + $0x108] sm:$0xff] %v986
                  %v988 = vld [vmem:[%s918 + $0x110] sm:$0xff]
                  %989 = vst [vmem:[%s919 + $0x110] sm:$0xff] %v988
                  %v990 = vld [vmem:[%s918 + $0x118] sm:$0xff]
                  %991 = vst [vmem:[%s919 + $0x118] sm:$0xff] %v990
                  %v992 = vld [vmem:[%s918 + $0x120] sm:$0xff]
                  %993 = vst [vmem:[%s919 + $0x120] sm:$0xff] %v992
                  %v994 = vld [vmem:[%s918 + $0x128] sm:$0xff]
                  %995 = vst [vmem:[%s919 + $0x128] sm:$0xff] %v994
                  %v996 = vld [vmem:[%s918 + $0x130] sm:$0xff]
                  %997 = vst [vmem:[%s919 + $0x130] sm:$0xff] %v996
                  %v998 = vld [vmem:[%s918 + $0x138] sm:$0xff]
                  %999 = vst [vmem:[%s919 + $0x138] sm:$0xff] %v998
                  %v1000 = vld [vmem:[%s918 + $0x140] sm:$0xff]
                  %1001 = vst [vmem:[%s919 + $0x140] sm:$0xff] %v1000
                  %v1002 = vld [vmem:[%s918 + $0x148] sm:$0xff]
                  %1003 = vst [vmem:[%s919 + $0x148] sm:$0xff] %v1002
                  %v1004 = vld [vmem:[%s918 + $0x150] sm:$0xff]
                  %1005 = vst [vmem:[%s919 + $0x150] sm:$0xff] %v1004
                  %v1006 = vld [vmem:[%s918 + $0x158] sm:$0xff]
                  %1007 = vst [vmem:[%s919 + $0x158] sm:$0xff] %v1006
                  %v1008 = vld [vmem:[%s918 + $0x160] sm:$0xff]
                  %1009 = vst [vmem:[%s919 + $0x160] sm:$0xff] %v1008
                  %v1010 = vld [vmem:[%s918 + $0x168] sm:$0xff]
                  %1011 = vst [vmem:[%s919 + $0x168] sm:$0xff] %v1010
                  %v1012 = vld [vmem:[%s918 + $0x170] sm:$0xff]
                  %1013 = vst [vmem:[%s919 + $0x170] sm:$0xff] %v1012
                  %v1014 = vld [vmem:[%s918 + $0x178] sm:$0xff]
                  %1015 = vst [vmem:[%s919 + $0x178] sm:$0xff] %v1014
                  %v1016 = vld [vmem:[%s918 + $0x900] sm:$0xff]
                  %1017 = vst [vmem:[%s919 + $0x180] sm:$0xff] %v1016
                  %v1018 = vld [vmem:[%s918 + $0x908] sm:$0xff]
                  %1019 = vst [vmem:[%s919 + $0x188] sm:$0xff] %v1018
                  %v1020 = vld [vmem:[%s918 + $0x910] sm:$0xff]
                  %1021 = vst [vmem:[%s919 + $0x190] sm:$0xff] %v1020
                  %v1022 = vld [vmem:[%s918 + $0x918] sm:$0xff]
                  %1023 = vst [vmem:[%s919 + $0x198] sm:$0xff] %v1022
                  %v1024 = vld [vmem:[%s918 + $0x920] sm:$0xff]
                  %1025 = vst [vmem:[%s919 + $0x1a0] sm:$0xff] %v1024
                  %v1026 = vld [vmem:[%s918 + $0x928] sm:$0xff]
                  %1027 = vst [vmem:[%s919 + $0x1a8] sm:$0xff] %v1026
                  %v1028 = vld [vmem:[%s918 + $0x930] sm:$0xff]
                  %1029 = vst [vmem:[%s919 + $0x1b0] sm:$0xff] %v1028
                  %v1030 = vld [vmem:[%s918 + $0x938] sm:$0xff]
                  %1031 = vst [vmem:[%s919 + $0x1b8] sm:$0xff] %v1030
                  %v1032 = vld [vmem:[%s918 + $0x940] sm:$0xff]
                  %1033 = vst [vmem:[%s919 + $0x1c0] sm:$0xff] %v1032
                  %v1034 = vld [vmem:[%s918 + $0x948] sm:$0xff]
                  %1035 = vst [vmem:[%s919 + $0x1c8] sm:$0xff] %v1034
                  %v1036 = vld [vmem:[%s918 + $0x950] sm:$0xff]
                  %1037 = vst [vmem:[%s919 + $0x1d0] sm:$0xff] %v1036
                  %v1038 = vld [vmem:[%s918 + $0x958] sm:$0xff]
                  %1039 = vst [vmem:[%s919 + $0x1d8] sm:$0xff] %v1038
                  %v1040 = vld [vmem:[%s918 + $0x960] sm:$0xff]
                  %1041 = vst [vmem:[%s919 + $0x1e0] sm:$0xff] %v1040
                  %v1042 = vld [vmem:[%s918 + $0x968] sm:$0xff]
                  %1043 = vst [vmem:[%s919 + $0x1e8] sm:$0xff] %v1042
                  %v1044 = vld [vmem:[%s918 + $0x970] sm:$0xff]
                  %1045 = vst [vmem:[%s919 + $0x1f0] sm:$0xff] %v1044
                  %v1046 = vld [vmem:[%s918 + $0x978] sm:$0xff]
                  %1047 = vst [vmem:[%s919 + $0x1f8] sm:$0xff] %v1046
                  %v1048 = vld [vmem:[%s918 + $0x980] sm:$0xff]
                  %1049 = vst [vmem:[%s919 + $0x200] sm:$0xff] %v1048
                  %v1050 = vld [vmem:[%s918 + $0x988] sm:$0xff]
                  %1051 = vst [vmem:[%s919 + $0x208] sm:$0xff] %v1050
                  %v1052 = vld [vmem:[%s918 + $0x990] sm:$0xff]
                  %1053 = vst [vmem:[%s919 + $0x210] sm:$0xff] %v1052
                  %v1054 = vld [vmem:[%s918 + $0x998] sm:$0xff]
                  %1055 = vst [vmem:[%s919 + $0x218] sm:$0xff] %v1054
                  %v1056 = vld [vmem:[%s918 + $0x9a0] sm:$0xff]
                  %1057 = vst [vmem:[%s919 + $0x220] sm:$0xff] %v1056
                  %v1058 = vld [vmem:[%s918 + $0x9a8] sm:$0xff]
                  %1059 = vst [vmem:[%s919 + $0x228] sm:$0xff] %v1058
                  %v1060 = vld [vmem:[%s918 + $0x9b0] sm:$0xff]
                  %1061 = vst [vmem:[%s919 + $0x230] sm:$0xff] %v1060
                  %v1062 = vld [vmem:[%s918 + $0x9b8] sm:$0xff]
                  %1063 = vst [vmem:[%s919 + $0x238] sm:$0xff] %v1062
                  %v1064 = vld [vmem:[%s918 + $0x9c0] sm:$0xff]
                  %1065 = vst [vmem:[%s919 + $0x240] sm:$0xff] %v1064
                  %v1066 = vld [vmem:[%s918 + $0x9c8] sm:$0xff]
                  %1067 = vst [vmem:[%s919 + $0x248] sm:$0xff] %v1066
                  %v1068 = vld [vmem:[%s918 + $0x9d0] sm:$0xff]
                  %1069 = vst [vmem:[%s919 + $0x250] sm:$0xff] %v1068
                  %v1070 = vld [vmem:[%s918 + $0x9d8] sm:$0xff]
                  %1071 = vst [vmem:[%s919 + $0x258] sm:$0xff] %v1070
                  %v1072 = vld [vmem:[%s918 + $0x9e0] sm:$0xff]
                  %1073 = vst [vmem:[%s919 + $0x260] sm:$0xff] %v1072
                  %v1074 = vld [vmem:[%s918 + $0x9e8] sm:$0xff]
                  %1075 = vst [vmem:[%s919 + $0x268] sm:$0xff] %v1074
                  %v1076 = vld [vmem:[%s918 + $0x9f0] sm:$0xff]
                  %1077 = vst [vmem:[%s919 + $0x270] sm:$0xff] %v1076
                  %v1078 = vld [vmem:[%s918 + $0x9f8] sm:$0xff]
                  %1079 = vst [vmem:[%s919 + $0x278] sm:$0xff] %v1078
                  %v1080 = vld [vmem:[%s918 + $0xa00] sm:$0xff]
                  %1081 = vst [vmem:[%s919 + $0x280] sm:$0xff] %v1080
                  %v1082 = vld [vmem:[%s918 + $0xa08] sm:$0xff]
                  %1083 = vst [vmem:[%s919 + $0x288] sm:$0xff] %v1082
                  %v1084 = vld [vmem:[%s918 + $0xa10] sm:$0xff]
                  %1085 = vst [vmem:[%s919 + $0x290] sm:$0xff] %v1084
                  %v1086 = vld [vmem:[%s918 + $0xa18] sm:$0xff]
                  %1087 = vst [vmem:[%s919 + $0x298] sm:$0xff] %v1086
                  %v1088 = vld [vmem:[%s918 + $0xa20] sm:$0xff]
                  %1089 = vst [vmem:[%s919 + $0x2a0] sm:$0xff] %v1088
                  %v1090 = vld [vmem:[%s918 + $0xa28] sm:$0xff]
                  %1091 = vst [vmem:[%s919 + $0x2a8] sm:$0xff] %v1090
                  %v1092 = vld [vmem:[%s918 + $0xa30] sm:$0xff]
                  %1093 = vst [vmem:[%s919 + $0x2b0] sm:$0xff] %v1092
                  %v1094 = vld [vmem:[%s918 + $0xa38] sm:$0xff]
                  %1095 = vst [vmem:[%s919 + $0x2b8] sm:$0xff] %v1094
                  %v1096 = vld [vmem:[%s918 + $0xa40] sm:$0xff]
                  %1097 = vst [vmem:[%s919 + $0x2c0] sm:$0xff] %v1096
                  %v1098 = vld [vmem:[%s918 + $0xa48] sm:$0xff]
                  %1099 = vst [vmem:[%s919 + $0x2c8] sm:$0xff] %v1098
                  %v1100 = vld [vmem:[%s918 + $0xa50] sm:$0xff]
                  %1101 = vst [vmem:[%s919 + $0x2d0] sm:$0xff] %v1100
                  %v1102 = vld [vmem:[%s918 + $0xa58] sm:$0xff]
                  %1103 = vst [vmem:[%s919 + $0x2d8] sm:$0xff] %v1102
                  %v1104 = vld [vmem:[%s918 + $0xa60] sm:$0xff]
                  %1105 = vst [vmem:[%s919 + $0x2e0] sm:$0xff] %v1104
                  %v1106 = vld [vmem:[%s918 + $0xa68] sm:$0xff]
                  %1107 = vst [vmem:[%s919 + $0x2e8] sm:$0xff] %v1106
                  %v1108 = vld [vmem:[%s918 + $0xa70] sm:$0xff]
                  %1109 = vst [vmem:[%s919 + $0x2f0] sm:$0xff] %v1108
                  %v1110 = vld [vmem:[%s918 + $0xa78] sm:$0xff]
                  %1111 = vst [vmem:[%s919 + $0x2f8] sm:$0xff] %v1110
                  %v1112 = vld [vmem:[%s918 + $0x1200] sm:$0xff]
                  %1113 = vst [vmem:[%s919 + $0x300] sm:$0xff] %v1112
                  %v1114 = vld [vmem:[%s918 + $0x1208] sm:$0xff]
                  %1115 = vst [vmem:[%s919 + $0x308] sm:$0xff] %v1114
                  %v1116 = vld [vmem:[%s918 + $0x1210] sm:$0xff]
                  %1117 = vst [vmem:[%s919 + $0x310] sm:$0xff] %v1116
                  %v1118 = vld [vmem:[%s918 + $0x1218] sm:$0xff]
                  %1119 = vst [vmem:[%s919 + $0x318] sm:$0xff] %v1118
                  %v1120 = vld [vmem:[%s918 + $0x1220] sm:$0xff]
                  %1121 = vst [vmem:[%s919 + $0x320] sm:$0xff] %v1120
                  %v1122 = vld [vmem:[%s918 + $0x1228] sm:$0xff]
                  %1123 = vst [vmem:[%s919 + $0x328] sm:$0xff] %v1122
                  %v1124 = vld [vmem:[%s918 + $0x1230] sm:$0xff]
                  %1125 = vst [vmem:[%s919 + $0x330] sm:$0xff] %v1124
                  %v1126 = vld [vmem:[%s918 + $0x1238] sm:$0xff]
                  %1127 = vst [vmem:[%s919 + $0x338] sm:$0xff] %v1126
                  %v1128 = vld [vmem:[%s918 + $0x1240] sm:$0xff]
                  %1129 = vst [vmem:[%s919 + $0x340] sm:$0xff] %v1128
                  %v1130 = vld [vmem:[%s918 + $0x1248] sm:$0xff]
                  %1131 = vst [vmem:[%s919 + $0x348] sm:$0xff] %v1130
                  %v1132 = vld [vmem:[%s918 + $0x1250] sm:$0xff]
                  %1133 = vst [vmem:[%s919 + $0x350] sm:$0xff] %v1132
                  %v1134 = vld [vmem:[%s918 + $0x1258] sm:$0xff]
                  %1135 = vst [vmem:[%s919 + $0x358] sm:$0xff] %v1134
                  %v1136 = vld [vmem:[%s918 + $0x1260] sm:$0xff]
                  %1137 = vst [vmem:[%s919 + $0x360] sm:$0xff] %v1136
                  %v1138 = vld [vmem:[%s918 + $0x1268] sm:$0xff]
                  %1139 = vst [vmem:[%s919 + $0x368] sm:$0xff] %v1138
                  %v1140 = vld [vmem:[%s918 + $0x1270] sm:$0xff]
                  %1141 = vst [vmem:[%s919 + $0x370] sm:$0xff] %v1140
                  %v1142 = vld [vmem:[%s918 + $0x1278] sm:$0xff]
                  %1143 = vst [vmem:[%s919 + $0x378] sm:$0xff] %v1142
                  %v1144 = vld [vmem:[%s918 + $0x1280] sm:$0xff]
                  %1145 = vst [vmem:[%s919 + $0x380] sm:$0xff] %v1144
                  %v1146 = vld [vmem:[%s918 + $0x1288] sm:$0xff]
                  %1147 = vst [vmem:[%s919 + $0x388] sm:$0xff] %v1146
                  %v1148 = vld [vmem:[%s918 + $0x1290] sm:$0xff]
                  %1149 = vst [vmem:[%s919 + $0x390] sm:$0xff] %v1148
                  %v1150 = vld [vmem:[%s918 + $0x1298] sm:$0xff]
                  %1151 = vst [vmem:[%s919 + $0x398] sm:$0xff] %v1150
                  %v1152 = vld [vmem:[%s918 + $0x12a0] sm:$0xff]
                  %1153 = vst [vmem:[%s919 + $0x3a0] sm:$0xff] %v1152
                  %v1154 = vld [vmem:[%s918 + $0x12a8] sm:$0xff]
                  %1155 = vst [vmem:[%s919 + $0x3a8] sm:$0xff] %v1154
                  %v1156 = vld [vmem:[%s918 + $0x12b0] sm:$0xff]
                  %1157 = vst [vmem:[%s919 + $0x3b0] sm:$0xff] %v1156
                  %v1158 = vld [vmem:[%s918 + $0x12b8] sm:$0xff]
                  %1159 = vst [vmem:[%s919 + $0x3b8] sm:$0xff] %v1158
                  %v1160 = vld [vmem:[%s918 + $0x12c0] sm:$0xff]
                  %1161 = vst [vmem:[%s919 + $0x3c0] sm:$0xff] %v1160
                  %v1162 = vld [vmem:[%s918 + $0x12c8] sm:$0xff]
                  %1163 = vst [vmem:[%s919 + $0x3c8] sm:$0xff] %v1162
                  %v1164 = vld [vmem:[%s918 + $0x12d0] sm:$0xff]
                  %1165 = vst [vmem:[%s919 + $0x3d0] sm:$0xff] %v1164
                  %v1166 = vld [vmem:[%s918 + $0x12d8] sm:$0xff]
                  %1167 = vst [vmem:[%s919 + $0x3d8] sm:$0xff] %v1166
                  %v1168 = vld [vmem:[%s918 + $0x12e0] sm:$0xff]
                  %1169 = vst [vmem:[%s919 + $0x3e0] sm:$0xff] %v1168
                  %v1170 = vld [vmem:[%s918 + $0x12e8] sm:$0xff]
                  %1171 = vst [vmem:[%s919 + $0x3e8] sm:$0xff] %v1170
                  %v1172 = vld [vmem:[%s918 + $0x12f0] sm:$0xff]
                  %1173 = vst [vmem:[%s919 + $0x3f0] sm:$0xff] %v1172
                  %v1174 = vld [vmem:[%s918 + $0x12f8] sm:$0xff]
                  %1175 = vst [vmem:[%s919 + $0x3f8] sm:$0xff] %v1174
                  %v1176 = vld [vmem:[%s918 + $0x1300] sm:$0xff]
                  %1177 = vst [vmem:[%s919 + $0x400] sm:$0xff] %v1176
                  %v1178 = vld [vmem:[%s918 + $0x1308] sm:$0xff]
                  %1179 = vst [vmem:[%s919 + $0x408] sm:$0xff] %v1178
                  %v1180 = vld [vmem:[%s918 + $0x1310] sm:$0xff]
                  %1181 = vst [vmem:[%s919 + $0x410] sm:$0xff] %v1180
                  %v1182 = vld [vmem:[%s918 + $0x1318] sm:$0xff]
                  %1183 = vst [vmem:[%s919 + $0x418] sm:$0xff] %v1182
                  %v1184 = vld [vmem:[%s918 + $0x1320] sm:$0xff]
                  %1185 = vst [vmem:[%s919 + $0x420] sm:$0xff] %v1184
                  %v1186 = vld [vmem:[%s918 + $0x1328] sm:$0xff]
                  %1187 = vst [vmem:[%s919 + $0x428] sm:$0xff] %v1186
                  %v1188 = vld [vmem:[%s918 + $0x1330] sm:$0xff]
                  %1189 = vst [vmem:[%s919 + $0x430] sm:$0xff] %v1188
                  %v1190 = vld [vmem:[%s918 + $0x1338] sm:$0xff]
                  %1191 = vst [vmem:[%s919 + $0x438] sm:$0xff] %v1190
                  %v1192 = vld [vmem:[%s918 + $0x1340] sm:$0xff]
                  %1193 = vst [vmem:[%s919 + $0x440] sm:$0xff] %v1192
                  %v1194 = vld [vmem:[%s918 + $0x1348] sm:$0xff]
                  %1195 = vst [vmem:[%s919 + $0x448] sm:$0xff] %v1194
                  %v1196 = vld [vmem:[%s918 + $0x1350] sm:$0xff]
                  %1197 = vst [vmem:[%s919 + $0x450] sm:$0xff] %v1196
                  %v1198 = vld [vmem:[%s918 + $0x1358] sm:$0xff]
                  %1199 = vst [vmem:[%s919 + $0x458] sm:$0xff] %v1198
                  %v1200 = vld [vmem:[%s918 + $0x1360] sm:$0xff]
                  %1201 = vst [vmem:[%s919 + $0x460] sm:$0xff] %v1200
                  %v1202 = vld [vmem:[%s918 + $0x1368] sm:$0xff]
                  %1203 = vst [vmem:[%s919 + $0x468] sm:$0xff] %v1202
                  %v1204 = vld [vmem:[%s918 + $0x1370] sm:$0xff]
                  %1205 = vst [vmem:[%s919 + $0x470] sm:$0xff] %v1204
                  %v1206 = vld [vmem:[%s918 + $0x1378] sm:$0xff]
                  %1207 = vst [vmem:[%s919 + $0x478] sm:$0xff] %v1206
                $region98: #{discriminator_tcn_forward.1} parent=92 // loop_footer
                  %s917 = sadd.s32 1, %s913
                $region99: #{discriminator_tcn_forward.1} parent=92 // loop_footer_branch
                  %912 = sbr.rel target = $region95
                $region100: #{discriminator_tcn_forward.1} parent=92 // loop_exit
                  _
              $region93: #{discriminator_tcn_forward.1} parent=77 // pred_fallthru
                _
              // Predicated region
              $region101: #{discriminator_tcn_forward.1} parent=77 // pred_check
                _
              $region102: #{discriminator_tcn_forward.1} parent=77 // pred_check_branch
                %1209 = sbr.rel target = $region104
              $region103: #{discriminator_tcn_forward.1} parent=77 // pred_region
                _
              $region104: #{discriminator_tcn_forward.1} parent=77 // pred_fallthru
                _
            $region78: #{discriminator_tcn_forward.1} parent=73 // pred_fallthru
              _
            // Predicated region
            $region79: #{discriminator_tcn_forward.1} parent=73 // pred_check
              _
            $region80: #{discriminator_tcn_forward.1} parent=73 // pred_check_branch
              %611 = sbr.rel target = $region82
            $region81: #{discriminator_tcn_forward.1} parent=73 // pred_region
              %s613 = ssub.s32 256, 1
              loop: start=0, step=1, limit=1
              $region83: #{discriminator_tcn_forward.1} parent=81 // loop_pre_header
                _
              $region84: #{discriminator_tcn_forward.1} parent=81 // loop_header
                %s615 = sphi 0, %s619
                %p616 = scmp.ge.s32.totalorder %s615, 1
                %s620 = sphi %s605, %s605
                %s621 = sphi %s602, %s602
              $region85: #{discriminator_tcn_forward.1} parent=81 // loop_header_branch
                %618 = sbr.rel (%p616) target = $region89
              $region86: #{discriminator_tcn_forward.1} parent=81 // loop_body
                %v622 = vld [vmem:[%s620] sm:%s613]
                %623 = vst [vmem:[%s621] sm:%s613] %v622
                %v624 = vld [vmem:[%s620 + $0x8] sm:%s613]
                %625 = vst [vmem:[%s621 + $0x8] sm:%s613] %v624
                %v626 = vld [vmem:[%s620 + $0x10] sm:%s613]
                %627 = vst [vmem:[%s621 + $0x10] sm:%s613] %v626
                %v628 = vld [vmem:[%s620 + $0x18] sm:%s613]
                %629 = vst [vmem:[%s621 + $0x18] sm:%s613] %v628
                %v630 = vld [vmem:[%s620 + $0x20] sm:%s613]
                %631 = vst [vmem:[%s621 + $0x20] sm:%s613] %v630
                %v632 = vld [vmem:[%s620 + $0x28] sm:%s613]
                %633 = vst [vmem:[%s621 + $0x28] sm:%s613] %v632
                %v634 = vld [vmem:[%s620 + $0x30] sm:%s613]
                %635 = vst [vmem:[%s621 + $0x30] sm:%s613] %v634
                %v636 = vld [vmem:[%s620 + $0x38] sm:%s613]
                %637 = vst [vmem:[%s621 + $0x38] sm:%s613] %v636
                %v638 = vld [vmem:[%s620 + $0x40] sm:%s613]
                %639 = vst [vmem:[%s621 + $0x40] sm:%s613] %v638
                %v640 = vld [vmem:[%s620 + $0x48] sm:%s613]
                %641 = vst [vmem:[%s621 + $0x48] sm:%s613] %v640
                %v642 = vld [vmem:[%s620 + $0x50] sm:%s613]
                %643 = vst [vmem:[%s621 + $0x50] sm:%s613] %v642
                %v644 = vld [vmem:[%s620 + $0x58] sm:%s613]
                %645 = vst [vmem:[%s621 + $0x58] sm:%s613] %v644
                %v646 = vld [vmem:[%s620 + $0x60] sm:%s613]
                %647 = vst [vmem:[%s621 + $0x60] sm:%s613] %v646
                %v648 = vld [vmem:[%s620 + $0x68] sm:%s613]
                %649 = vst [vmem:[%s621 + $0x68] sm:%s613] %v648
                %v650 = vld [vmem:[%s620 + $0x70] sm:%s613]
                %651 = vst [vmem:[%s621 + $0x70] sm:%s613] %v650
                %v652 = vld [vmem:[%s620 + $0x78] sm:%s613]
                %653 = vst [vmem:[%s621 + $0x78] sm:%s613] %v652
                %v654 = vld [vmem:[%s620 + $0x80] sm:%s613]
                %655 = vst [vmem:[%s621 + $0x80] sm:%s613] %v654
                %v656 = vld [vmem:[%s620 + $0x88] sm:%s613]
                %657 = vst [vmem:[%s621 + $0x88] sm:%s613] %v656
                %v658 = vld [vmem:[%s620 + $0x90] sm:%s613]
                %659 = vst [vmem:[%s621 + $0x90] sm:%s613] %v658
                %v660 = vld [vmem:[%s620 + $0x98] sm:%s613]
                %661 = vst [vmem:[%s621 + $0x98] sm:%s613] %v660
                %v662 = vld [vmem:[%s620 + $0xa0] sm:%s613]
                %663 = vst [vmem:[%s621 + $0xa0] sm:%s613] %v662
                %v664 = vld [vmem:[%s620 + $0xa8] sm:%s613]
                %665 = vst [vmem:[%s621 + $0xa8] sm:%s613] %v664
                %v666 = vld [vmem:[%s620 + $0xb0] sm:%s613]
                %667 = vst [vmem:[%s621 + $0xb0] sm:%s613] %v666
                %v668 = vld [vmem:[%s620 + $0xb8] sm:%s613]
                %669 = vst [vmem:[%s621 + $0xb8] sm:%s613] %v668
                %v670 = vld [vmem:[%s620 + $0xc0] sm:%s613]
                %671 = vst [vmem:[%s621 + $0xc0] sm:%s613] %v670
                %v672 = vld [vmem:[%s620 + $0xc8] sm:%s613]
                %673 = vst [vmem:[%s621 + $0xc8] sm:%s613] %v672
                %v674 = vld [vmem:[%s620 + $0xd0] sm:%s613]
                %675 = vst [vmem:[%s621 + $0xd0] sm:%s613] %v674
                %v676 = vld [vmem:[%s620 + $0xd8] sm:%s613]
                %677 = vst [vmem:[%s621 + $0xd8] sm:%s613] %v676
                %v678 = vld [vmem:[%s620 + $0xe0] sm:%s613]
                %679 = vst [vmem:[%s621 + $0xe0] sm:%s613] %v678
                %v680 = vld [vmem:[%s620 + $0xe8] sm:%s613]
                %681 = vst [vmem:[%s621 + $0xe8] sm:%s613] %v680
                %v682 = vld [vmem:[%s620 + $0xf0] sm:%s613]
                %683 = vst [vmem:[%s621 + $0xf0] sm:%s613] %v682
                %v684 = vld [vmem:[%s620 + $0xf8] sm:%s613]
                %685 = vst [vmem:[%s621 + $0xf8] sm:%s613] %v684
                %v686 = vld [vmem:[%s620 + $0x100] sm:%s613]
                %687 = vst [vmem:[%s621 + $0x100] sm:%s613] %v686
                %v688 = vld [vmem:[%s620 + $0x108] sm:%s613]
                %689 = vst [vmem:[%s621 + $0x108] sm:%s613] %v688
                %v690 = vld [vmem:[%s620 + $0x110] sm:%s613]
                %691 = vst [vmem:[%s621 + $0x110] sm:%s613] %v690
                %v692 = vld [vmem:[%s620 + $0x118] sm:%s613]
                %693 = vst [vmem:[%s621 + $0x118] sm:%s613] %v692
                %v694 = vld [vmem:[%s620 + $0x120] sm:%s613]
                %695 = vst [vmem:[%s621 + $0x120] sm:%s613] %v694
                %v696 = vld [vmem:[%s620 + $0x128] sm:%s613]
                %697 = vst [vmem:[%s621 + $0x128] sm:%s613] %v696
                %v698 = vld [vmem:[%s620 + $0x130] sm:%s613]
                %699 = vst [vmem:[%s621 + $0x130] sm:%s613] %v698
                %v700 = vld [vmem:[%s620 + $0x138] sm:%s613]
                %701 = vst [vmem:[%s621 + $0x138] sm:%s613] %v700
                %v702 = vld [vmem:[%s620 + $0x140] sm:%s613]
                %703 = vst [vmem:[%s621 + $0x140] sm:%s613] %v702
                %v704 = vld [vmem:[%s620 + $0x148] sm:%s613]
                %705 = vst [vmem:[%s621 + $0x148] sm:%s613] %v704
                %v706 = vld [vmem:[%s620 + $0x150] sm:%s613]
                %707 = vst [vmem:[%s621 + $0x150] sm:%s613] %v706
                %v708 = vld [vmem:[%s620 + $0x158] sm:%s613]
                %709 = vst [vmem:[%s621 + $0x158] sm:%s613] %v708
                %v710 = vld [vmem:[%s620 + $0x160] sm:%s613]
                %711 = vst [vmem:[%s621 + $0x160] sm:%s613] %v710
                %v712 = vld [vmem:[%s620 + $0x168] sm:%s613]
                %713 = vst [vmem:[%s621 + $0x168] sm:%s613] %v712
                %v714 = vld [vmem:[%s620 + $0x170] sm:%s613]
                %715 = vst [vmem:[%s621 + $0x170] sm:%s613] %v714
                %v716 = vld [vmem:[%s620 + $0x178] sm:%s613]
                %717 = vst [vmem:[%s621 + $0x178] sm:%s613] %v716
                %v718 = vld [vmem:[%s620 + $0x900] sm:%s613]
                %719 = vst [vmem:[%s621 + $0x180] sm:%s613] %v718
                %v720 = vld [vmem:[%s620 + $0x908] sm:%s613]
                %721 = vst [vmem:[%s621 + $0x188] sm:%s613] %v720
                %v722 = vld [vmem:[%s620 + $0x910] sm:%s613]
                %723 = vst [vmem:[%s621 + $0x190] sm:%s613] %v722
                %v724 = vld [vmem:[%s620 + $0x918] sm:%s613]
                %725 = vst [vmem:[%s621 + $0x198] sm:%s613] %v724
                %v726 = vld [vmem:[%s620 + $0x920] sm:%s613]
                %727 = vst [vmem:[%s621 + $0x1a0] sm:%s613] %v726
                %v728 = vld [vmem:[%s620 + $0x928] sm:%s613]
                %729 = vst [vmem:[%s621 + $0x1a8] sm:%s613] %v728
                %v730 = vld [vmem:[%s620 + $0x930] sm:%s613]
                %731 = vst [vmem:[%s621 + $0x1b0] sm:%s613] %v730
                %v732 = vld [vmem:[%s620 + $0x938] sm:%s613]
                %733 = vst [vmem:[%s621 + $0x1b8] sm:%s613] %v732
                %v734 = vld [vmem:[%s620 + $0x940] sm:%s613]
                %735 = vst [vmem:[%s621 + $0x1c0] sm:%s613] %v734
                %v736 = vld [vmem:[%s620 + $0x948] sm:%s613]
                %737 = vst [vmem:[%s621 + $0x1c8] sm:%s613] %v736
                %v738 = vld [vmem:[%s620 + $0x950] sm:%s613]
                %739 = vst [vmem:[%s621 + $0x1d0] sm:%s613] %v738
                %v740 = vld [vmem:[%s620 + $0x958] sm:%s613]
                %741 = vst [vmem:[%s621 + $0x1d8] sm:%s613] %v740
                %v742 = vld [vmem:[%s620 + $0x960] sm:%s613]
                %743 = vst [vmem:[%s621 + $0x1e0] sm:%s613] %v742
                %v744 = vld [vmem:[%s620 + $0x968] sm:%s613]
                %745 = vst [vmem:[%s621 + $0x1e8] sm:%s613] %v744
                %v746 = vld [vmem:[%s620 + $0x970] sm:%s613]
                %747 = vst [vmem:[%s621 + $0x1f0] sm:%s613] %v746
                %v748 = vld [vmem:[%s620 + $0x978] sm:%s613]
                %749 = vst [vmem:[%s621 + $0x1f8] sm:%s613] %v748
                %v750 = vld [vmem:[%s620 + $0x980] sm:%s613]
                %751 = vst [vmem:[%s621 + $0x200] sm:%s613] %v750
                %v752 = vld [vmem:[%s620 + $0x988] sm:%s613]
                %753 = vst [vmem:[%s621 + $0x208] sm:%s613] %v752
                %v754 = vld [vmem:[%s620 + $0x990] sm:%s613]
                %755 = vst [vmem:[%s621 + $0x210] sm:%s613] %v754
                %v756 = vld [vmem:[%s620 + $0x998] sm:%s613]
                %757 = vst [vmem:[%s621 + $0x218] sm:%s613] %v756
                %v758 = vld [vmem:[%s620 + $0x9a0] sm:%s613]
                %759 = vst [vmem:[%s621 + $0x220] sm:%s613] %v758
                %v760 = vld [vmem:[%s620 + $0x9a8] sm:%s613]
                %761 = vst [vmem:[%s621 + $0x228] sm:%s613] %v760
                %v762 = vld [vmem:[%s620 + $0x9b0] sm:%s613]
                %763 = vst [vmem:[%s621 + $0x230] sm:%s613] %v762
                %v764 = vld [vmem:[%s620 + $0x9b8] sm:%s613]
                %765 = vst [vmem:[%s621 + $0x238] sm:%s613] %v764
                %v766 = vld [vmem:[%s620 + $0x9c0] sm:%s613]
                %767 = vst [vmem:[%s621 + $0x240] sm:%s613] %v766
                %v768 = vld [vmem:[%s620 + $0x9c8] sm:%s613]
                %769 = vst [vmem:[%s621 + $0x248] sm:%s613] %v768
                %v770 = vld [vmem:[%s620 + $0x9d0] sm:%s613]
                %771 = vst [vmem:[%s621 + $0x250] sm:%s613] %v770
                %v772 = vld [vmem:[%s620 + $0x9d8] sm:%s613]
                %773 = vst [vmem:[%s621 + $0x258] sm:%s613] %v772
                %v774 = vld [vmem:[%s620 + $0x9e0] sm:%s613]
                %775 = vst [vmem:[%s621 + $0x260] sm:%s613] %v774
                %v776 = vld [vmem:[%s620 + $0x9e8] sm:%s613]
                %777 = vst [vmem:[%s621 + $0x268] sm:%s613] %v776
                %v778 = vld [vmem:[%s620 + $0x9f0] sm:%s613]
                %779 = vst [vmem:[%s621 + $0x270] sm:%s613] %v778
                %v780 = vld [vmem:[%s620 + $0x9f8] sm:%s613]
                %781 = vst [vmem:[%s621 + $0x278] sm:%s613] %v780
                %v782 = vld [vmem:[%s620 + $0xa00] sm:%s613]
                %783 = vst [vmem:[%s621 + $0x280] sm:%s613] %v782
                %v784 = vld [vmem:[%s620 + $0xa08] sm:%s613]
                %785 = vst [vmem:[%s621 + $0x288] sm:%s613] %v784
                %v786 = vld [vmem:[%s620 + $0xa10] sm:%s613]
                %787 = vst [vmem:[%s621 + $0x290] sm:%s613] %v786
                %v788 = vld [vmem:[%s620 + $0xa18] sm:%s613]
                %789 = vst [vmem:[%s621 + $0x298] sm:%s613] %v788
                %v790 = vld [vmem:[%s620 + $0xa20] sm:%s613]
                %791 = vst [vmem:[%s621 + $0x2a0] sm:%s613] %v790
                %v792 = vld [vmem:[%s620 + $0xa28] sm:%s613]
                %793 = vst [vmem:[%s621 + $0x2a8] sm:%s613] %v792
                %v794 = vld [vmem:[%s620 + $0xa30] sm:%s613]
                %795 = vst [vmem:[%s621 + $0x2b0] sm:%s613] %v794
                %v796 = vld [vmem:[%s620 + $0xa38] sm:%s613]
                %797 = vst [vmem:[%s621 + $0x2b8] sm:%s613] %v796
                %v798 = vld [vmem:[%s620 + $0xa40] sm:%s613]
                %799 = vst [vmem:[%s621 + $0x2c0] sm:%s613] %v798
                %v800 = vld [vmem:[%s620 + $0xa48] sm:%s613]
                %801 = vst [vmem:[%s621 + $0x2c8] sm:%s613] %v800
                %v802 = vld [vmem:[%s620 + $0xa50] sm:%s613]
                %803 = vst [vmem:[%s621 + $0x2d0] sm:%s613] %v802
                %v804 = vld [vmem:[%s620 + $0xa58] sm:%s613]
                %805 = vst [vmem:[%s621 + $0x2d8] sm:%s613] %v804
                %v806 = vld [vmem:[%s620 + $0xa60] sm:%s613]
                %807 = vst [vmem:[%s621 + $0x2e0] sm:%s613] %v806
                %v808 = vld [vmem:[%s620 + $0xa68] sm:%s613]
                %809 = vst [vmem:[%s621 + $0x2e8] sm:%s613] %v808
                %v810 = vld [vmem:[%s620 + $0xa70] sm:%s613]
                %811 = vst [vmem:[%s621 + $0x2f0] sm:%s613] %v810
                %v812 = vld [vmem:[%s620 + $0xa78] sm:%s613]
                %813 = vst [vmem:[%s621 + $0x2f8] sm:%s613] %v812
                %v814 = vld [vmem:[%s620 + $0x1200] sm:%s613]
                %815 = vst [vmem:[%s621 + $0x300] sm:%s613] %v814
                %v816 = vld [vmem:[%s620 + $0x1208] sm:%s613]
                %817 = vst [vmem:[%s621 + $0x308] sm:%s613] %v816
                %v818 = vld [vmem:[%s620 + $0x1210] sm:%s613]
                %819 = vst [vmem:[%s621 + $0x310] sm:%s613] %v818
                %v820 = vld [vmem:[%s620 + $0x1218] sm:%s613]
                %821 = vst [vmem:[%s621 + $0x318] sm:%s613] %v820
                %v822 = vld [vmem:[%s620 + $0x1220] sm:%s613]
                %823 = vst [vmem:[%s621 + $0x320] sm:%s613] %v822
                %v824 = vld [vmem:[%s620 + $0x1228] sm:%s613]
                %825 = vst [vmem:[%s621 + $0x328] sm:%s613] %v824
                %v826 = vld [vmem:[%s620 + $0x1230] sm:%s613]
                %827 = vst [vmem:[%s621 + $0x330] sm:%s613] %v826
                %v828 = vld [vmem:[%s620 + $0x1238] sm:%s613]
                %829 = vst [vmem:[%s621 + $0x338] sm:%s613] %v828
                %v830 = vld [vmem:[%s620 + $0x1240] sm:%s613]
                %831 = vst [vmem:[%s621 + $0x340] sm:%s613] %v830
                %v832 = vld [vmem:[%s620 + $0x1248] sm:%s613]
                %833 = vst [vmem:[%s621 + $0x348] sm:%s613] %v832
                %v834 = vld [vmem:[%s620 + $0x1250] sm:%s613]
                %835 = vst [vmem:[%s621 + $0x350] sm:%s613] %v834
                %v836 = vld [vmem:[%s620 + $0x1258] sm:%s613]
                %837 = vst [vmem:[%s621 + $0x358] sm:%s613] %v836
                %v838 = vld [vmem:[%s620 + $0x1260] sm:%s613]
                %839 = vst [vmem:[%s621 + $0x360] sm:%s613] %v838
                %v840 = vld [vmem:[%s620 + $0x1268] sm:%s613]
                %841 = vst [vmem:[%s621 + $0x368] sm:%s613] %v840
                %v842 = vld [vmem:[%s620 + $0x1270] sm:%s613]
                %843 = vst [vmem:[%s621 + $0x370] sm:%s613] %v842
                %v844 = vld [vmem:[%s620 + $0x1278] sm:%s613]
                %845 = vst [vmem:[%s621 + $0x378] sm:%s613] %v844
                %v846 = vld [vmem:[%s620 + $0x1280] sm:%s613]
                %847 = vst [vmem:[%s621 + $0x380] sm:%s613] %v846
                %v848 = vld [vmem:[%s620 + $0x1288] sm:%s613]
                %849 = vst [vmem:[%s621 + $0x388] sm:%s613] %v848
                %v850 = vld [vmem:[%s620 + $0x1290] sm:%s613]
                %851 = vst [vmem:[%s621 + $0x390] sm:%s613] %v850
                %v852 = vld [vmem:[%s620 + $0x1298] sm:%s613]
                %853 = vst [vmem:[%s621 + $0x398] sm:%s613] %v852
                %v854 = vld [vmem:[%s620 + $0x12a0] sm:%s613]
                %855 = vst [vmem:[%s621 + $0x3a0] sm:%s613] %v854
                %v856 = vld [vmem:[%s620 + $0x12a8] sm:%s613]
                %857 = vst [vmem:[%s621 + $0x3a8] sm:%s613] %v856
                %v858 = vld [vmem:[%s620 + $0x12b0] sm:%s613]
                %859 = vst [vmem:[%s621 + $0x3b0] sm:%s613] %v858
                %v860 = vld [vmem:[%s620 + $0x12b8] sm:%s613]
                %861 = vst [vmem:[%s621 + $0x3b8] sm:%s613] %v860
                %v862 = vld [vmem:[%s620 + $0x12c0] sm:%s613]
                %863 = vst [vmem:[%s621 + $0x3c0] sm:%s613] %v862
                %v864 = vld [vmem:[%s620 + $0x12c8] sm:%s613]
                %865 = vst [vmem:[%s621 + $0x3c8] sm:%s613] %v864
                %v866 = vld [vmem:[%s620 + $0x12d0] sm:%s613]
                %867 = vst [vmem:[%s621 + $0x3d0] sm:%s613] %v866
                %v868 = vld [vmem:[%s620 + $0x12d8] sm:%s613]
                %869 = vst [vmem:[%s621 + $0x3d8] sm:%s613] %v868
                %v870 = vld [vmem:[%s620 + $0x12e0] sm:%s613]
                %871 = vst [vmem:[%s621 + $0x3e0] sm:%s613] %v870
                %v872 = vld [vmem:[%s620 + $0x12e8] sm:%s613]
                %873 = vst [vmem:[%s621 + $0x3e8] sm:%s613] %v872
                %v874 = vld [vmem:[%s620 + $0x12f0] sm:%s613]
                %875 = vst [vmem:[%s621 + $0x3f0] sm:%s613] %v874
                %v876 = vld [vmem:[%s620 + $0x12f8] sm:%s613]
                %877 = vst [vmem:[%s621 + $0x3f8] sm:%s613] %v876
                %v878 = vld [vmem:[%s620 + $0x1300] sm:%s613]
                %879 = vst [vmem:[%s621 + $0x400] sm:%s613] %v878
                %v880 = vld [vmem:[%s620 + $0x1308] sm:%s613]
                %881 = vst [vmem:[%s621 + $0x408] sm:%s613] %v880
                %v882 = vld [vmem:[%s620 + $0x1310] sm:%s613]
                %883 = vst [vmem:[%s621 + $0x410] sm:%s613] %v882
                %v884 = vld [vmem:[%s620 + $0x1318] sm:%s613]
                %885 = vst [vmem:[%s621 + $0x418] sm:%s613] %v884
                %v886 = vld [vmem:[%s620 + $0x1320] sm:%s613]
                %887 = vst [vmem:[%s621 + $0x420] sm:%s613] %v886
                %v888 = vld [vmem:[%s620 + $0x1328] sm:%s613]
                %889 = vst [vmem:[%s621 + $0x428] sm:%s613] %v888
                %v890 = vld [vmem:[%s620 + $0x1330] sm:%s613]
                %891 = vst [vmem:[%s621 + $0x430] sm:%s613] %v890
                %v892 = vld [vmem:[%s620 + $0x1338] sm:%s613]
                %893 = vst [vmem:[%s621 + $0x438] sm:%s613] %v892
                %v894 = vld [vmem:[%s620 + $0x1340] sm:%s613]
                %895 = vst [vmem:[%s621 + $0x440] sm:%s613] %v894
                %v896 = vld [vmem:[%s620 + $0x1348] sm:%s613]
                %897 = vst [vmem:[%s621 + $0x448] sm:%s613] %v896
                %v898 = vld [vmem:[%s620 + $0x1350] sm:%s613]
                %899 = vst [vmem:[%s621 + $0x450] sm:%s613] %v898
                %v900 = vld [vmem:[%s620 + $0x1358] sm:%s613]
                %901 = vst [vmem:[%s621 + $0x458] sm:%s613] %v900
                %v902 = vld [vmem:[%s620 + $0x1360] sm:%s613]
                %903 = vst [vmem:[%s621 + $0x460] sm:%s613] %v902
                %v904 = vld [vmem:[%s620 + $0x1368] sm:%s613]
                %905 = vst [vmem:[%s621 + $0x468] sm:%s613] %v904
                %v906 = vld [vmem:[%s620 + $0x1370] sm:%s613]
                %907 = vst [vmem:[%s621 + $0x470] sm:%s613] %v906
                %v908 = vld [vmem:[%s620 + $0x1378] sm:%s613]
                %909 = vst [vmem:[%s621 + $0x478] sm:%s613] %v908
              $region87: #{discriminator_tcn_forward.1} parent=81 // loop_footer
                %s619 = sadd.s32 1, %s615
              $region88: #{discriminator_tcn_forward.1} parent=81 // loop_footer_branch
                %614 = sbr.rel target = $region84
              $region89: #{discriminator_tcn_forward.1} parent=81 // loop_exit
                _
            $region82: #{discriminator_tcn_forward.1} parent=73 // pred_fallthru
              _
          $region74: #{discriminator_tcn_forward.1} parent=69 // pred_fallthru
            _
          %1210 = vnop
        $region70: #{discriminator_tcn_forward.1} parent=39 // pred_fallthru
          _
      $region40: #{discriminator_tcn_forward.1} parent=5 // pred_fallthru
        _
      %p1211 = scmp.le.s32.totalorder 1, %s16
      %p1212 = scmp.lt.s32.totalorder %s16, 7
      %p1213 = pnand %p1211, %p1212
      %p1214 = pneg %p1213
      // Predicated region
      $region105: #{discriminator_tcn_forward.1} parent=5 // pred_check
        _
      $region106: #{discriminator_tcn_forward.1} parent=5 // pred_check_branch
        %1216 = sbr.rel (%p1213) target = $region108
      $region107: #{discriminator_tcn_forward.1} parent=5 // pred_region
        %s1217 = ssub.s32 %s16, 1
        %s1218 = sand.u32 %s93, 1
        %s1219 = sand.u32 %s93, 1
        %s1220 = smul.addr %s1219, 756
        %s1221 = scalar_lea.vmem [#allocation3], %s1220
        // Predicated region
        $region109: #{discriminator_tcn_forward.1} parent=107 // pred_check
          %p1222 = pneg %p106
        $region110: #{discriminator_tcn_forward.1} parent=107 // pred_check_branch
          %1224 = sbr.rel (%p1222) target = $region112
        $region111: #{discriminator_tcn_forward.1} parent=107 // pred_region
          _
        $region112: #{discriminator_tcn_forward.1} parent=107 // pred_fallthru
          _
        %s1225 = sand.u32 %s119, 1
        %s1226 = sand.u32 %s119, 1
        %s1227 = smul.addr %s1226, 1152
        %s1228 = scalar_lea.vmem [#allocation4], %s1227
        // Predicated region
        $region113: #{discriminator_tcn_forward.1} parent=107 // pred_check
          %p1229 = pneg %p132
        $region114: #{discriminator_tcn_forward.1} parent=107 // pred_check_branch
          %1231 = sbr.rel (%p1229) target = $region116
        $region115: #{discriminator_tcn_forward.1} parent=107 // pred_region
          _
        $region116: #{discriminator_tcn_forward.1} parent=107 // pred_fallthru
          _
        // Predicated region
        $region117: #{discriminator_tcn_forward.1} parent=107 // pred_check
          %p1232 = pneg %p153
        $region118: #{discriminator_tcn_forward.1} parent=107 // pred_check_branch
          %1234 = sbr.rel (%p1232) target = $region120
        $region119: #{discriminator_tcn_forward.1} parent=107 // pred_region
          %1236 = dma.done [#allocation6], 64
        $region120: #{discriminator_tcn_forward.1} parent=107 // pred_fallthru
          _
        // Predicated region
        $region121: #{discriminator_tcn_forward.1} parent=107 // pred_check
          %p1237 = pneg %p174
        $region122: #{discriminator_tcn_forward.1} parent=107 // pred_check_branch
          %1239 = sbr.rel (%p1237) target = $region124
        $region123: #{discriminator_tcn_forward.1} parent=107 // pred_region
          %1241 = dma.done [#allocation8], 64
        $region124: #{discriminator_tcn_forward.1} parent=107 // pred_fallthru
          _
        // Predicated region
        $region125: #{discriminator_tcn_forward.1} parent=107 // pred_check
          %p1242 = pneg %p216
        $region126: #{discriminator_tcn_forward.1} parent=107 // pred_check_branch
          %1244 = sbr.rel (%p1242) target = $region128
        $region127: #{discriminator_tcn_forward.1} parent=107 // pred_region
          %1246 = dma.done [#allocation8], 16
        $region128: #{discriminator_tcn_forward.1} parent=107 // pred_fallthru
          _
        %1247 = sfence
        %p1248 = scmp.lt.s32.totalorder %s25, 0
        %s1249 = scalar_select %p1248, %s25, 0
        %s1250 = smul.addr %s1249, 2
        %s1251 = smul.addr %s1250, 8
        %s1252 = scalar_lea.vmem %s0, %s1251
        %p1253 = pneg %p54
        %p1254 = pneg %p51
        %p1255 = scmp.lt.s32.totalorder %s25, 0
        %s1256 = scalar_select %p1255, %s25, 0
        %s1257 = smul.addr %s1256, 8
        %s1258 = scalar_lea.vmem %s1, %s1257
        %p1259 = pneg %p80
        %p1260 = pneg %p77
        %s1261 = sand.u32 %s93, 1
        %s1262 = sand.u32 %s93, 1
        %s1263 = smul.addr %s1262, 756
        %s1264 = scalar_lea.vmem [#allocation3], %s1263
        %p1265 = pneg %p106
        %p1266 = pneg %p103
        %s1267 = sand.u32 %s119, 1
        %s1268 = sand.u32 %s119, 1
        %s1269 = smul.addr %s1268, 1152
        %s1270 = scalar_lea.vmem [#allocation4], %s1269
        %p1271 = pneg %p132
        %p1272 = pneg %p129
        %p1273 = pneg %p153
        %p1274 = pneg %p150
        %p1275 = pneg %p174
        %p1276 = pneg %p171
        %p1277 = pneg %p195
        %p1278 = pneg %p192
        %p1279 = pneg %p216
        %p1280 = pneg %p213
        %p1281 = pneg %p242
        %p1282 = pneg %p239
        %p1283 = scmp.lt.s32.totalorder %s25, 0
        %s1284 = scalar_select %p1283, %s25, 0
        %s1285 = smul.addr %s1284, 8
        %s1286 = scalar_lea.vmem %s8, %s1285
        %p1287 = scmp.lt.s32.totalorder %s25, 0
        %s1288 = scalar_select %p1287, %s25, 0
        %s1289 = smul.addr %s1288, 2
        %s1290 = smul.addr %s1289, 8
        %s1291 = scalar_lea.vmem %s0, %s1290
        %p1292 = scmp.lt.s32.totalorder %s25, 0
        %s1293 = scalar_select %p1292, %s25, 0
        %s1294 = smul.addr %s1293, 8
        %s1295 = scalar_lea.vmem %s1, %s1294
        %p1296 = scmp.lt.s32.totalorder %s25, 0
        %s1297 = scalar_select %p1296, %s25, 0
        %s1298 = smul.addr %s1297, 8
        %s1299 = scalar_lea.vmem %s8, %s1298
        %p1301 = scmp.eq.s32.totalorder %s26, 0
        // Predicated region
        $region129: #{discriminator_tcn_forward.1} parent=107 // pred_check
          %p1302 = pneg %p1301
        $region130: #{discriminator_tcn_forward.1} parent=107 // pred_check_branch
          %1304 = sbr.rel (%p1302) target = $region132
        $region131: #{discriminator_tcn_forward.1} parent=107 // pred_region
          %v1305 = vld [vmem:[%s1291] sm:$0xff]
          %v1306 = vld [vmem:[%s1291 + $0x8] sm:$0xff]
          %1307 = vst [vmem:[#allocation2] sm:$0xff] %v1305
          %vm1308 = vcmask 326656
          %1309 = vst.msk [vmem:[#allocation2 + $0x8] sm:$0xff] %vm1308, %v1306
          %v1310 = vld [vmem:[%s1291] sm:$0xff]
          %v1311 = vld [vmem:[%s1291 + $0x8] sm:$0xff]
          %s1312 = scalar_lea.vmem [#allocation2], 16
          %1313 = vst [vmem:[%s1312] sm:$0xff] %v1310
          %1314 = vst.msk [vmem:[%s1312 + $0x8] sm:$0xff] %vm1308, %v1311
          %v1315 = vld [vmem:[%s1291] sm:$0xff]
          %v1316 = vld [vmem:[%s1291 + $0x8] sm:$0xff]
          %s1317 = scalar_lea.vmem [#allocation2], 32
          %1318 = vst [vmem:[%s1317] sm:$0xff] %v1315
          %1319 = vst.msk [vmem:[%s1317 + $0x8] sm:$0xff] %vm1308, %v1316
        $region132: #{discriminator_tcn_forward.1} parent=107 // pred_fallthru
          _
        %v1320 = vld [vmem:[#allocation2] sm:$0xff]
        %v1321 = vld [vmem:[#allocation2 + $0x8] sm:$0xff]
        %v1322 = vpack.c.bf16 %v1320, %v1320
        %v1323 = vpack.c.bf16 %v1321, %v1321
        %v1324 = vld [vmem:[%s1221] sm:$0xff]
        %v1325 = vld [vmem:[%s1221 + $0x8] sm:$0xf]
        %v1326 = vld [vmem:[%s1221 + $0xc] sm:$0xff]
        %v1327 = vld [vmem:[%s1221 + $0x14] sm:$0xf]
        %v1328 = vld [vmem:[%s1221 + $0x18] sm:$0xff]
        %v1329 = vld [vmem:[%s1221 + $0x20] sm:$0xf]
        %v1330 = vld [vmem:[%s1221 + $0x24] sm:$0xff]
        %v1331 = vld [vmem:[%s1221 + $0x2c] sm:$0xf]
        %v1332 = vld [vmem:[%s1221 + $0x30] sm:$0xff]
        %v1333 = vld [vmem:[%s1221 + $0x38] sm:$0xf]
        %v1334 = vld [vmem:[%s1221 + $0x3c] sm:$0xff]
        %v1335 = vld [vmem:[%s1221 + $0x44] sm:$0xf]
        %v1336 = vld [vmem:[%s1221 + $0x48] sm:$0xff]
        %v1337 = vld [vmem:[%s1221 + $0x50] sm:$0xf]
        %v1338 = vld [vmem:[%s1221 + $0x54] sm:$0xff]
        %v1339 = vld [vmem:[%s1221 + $0x5c] sm:$0xf]
        %v1340 = vld [vmem:[%s1221 + $0x60] sm:$0xff]
        %v1341 = vld [vmem:[%s1221 + $0x68] sm:$0xf]
        %v1342 = vld [vmem:[%s1221 + $0x6c] sm:$0xff]
        %v1343 = vld [vmem:[%s1221 + $0x74] sm:$0xf]
        %v1344 = vld [vmem:[%s1221 + $0x78] sm:$0xff]
        %v1345 = vld [vmem:[%s1221 + $0x80] sm:$0xf]
        %v1346 = vld [vmem:[%s1221 + $0x84] sm:$0xff]
        %v1347 = vld [vmem:[%s1221 + $0x8c] sm:$0xf]
        %v1348 = vld [vmem:[%s1221 + $0x90] sm:$0xff]
        %v1349 = vld [vmem:[%s1221 + $0x98] sm:$0xf]
        %v1350 = vld [vmem:[%s1221 + $0x9c] sm:$0xff]
        %v1351 = vld [vmem:[%s1221 + $0xa4] sm:$0xf]
        %v1352 = vld [vmem:[%s1221 + $0xa8] sm:$0xff]
        %v1353 = vld [vmem:[%s1221 + $0xb0] sm:$0xf]
        %v1354 = vld [vmem:[%s1221 + $0xb4] sm:$0xff]
        %v1355 = vld [vmem:[%s1221 + $0xbc] sm:$0xf]
        %v1356 = vld [vmem:[%s1221 + $0xc0] sm:$0xff]
        %v1357 = vld [vmem:[%s1221 + $0xc8] sm:$0xf]
        %v1358 = vld [vmem:[%s1221 + $0xcc] sm:$0xff]
        %v1359 = vld [vmem:[%s1221 + $0xd4] sm:$0xf]
        %v1360 = vld [vmem:[%s1221 + $0xd8] sm:$0xff]
        %v1361 = vld [vmem:[%s1221 + $0xe0] sm:$0xf]
        %v1362 = vld [vmem:[%s1221 + $0xe4] sm:$0xff]
        %v1363 = vld [vmem:[%s1221 + $0xec] sm:$0xf]
        %v1364 = vld [vmem:[%s1221 + $0xf0] sm:$0xff]
        %v1365 = vld [vmem:[%s1221 + $0xf8] sm:$0xf]
        %s1366 = sld [smem:[#allocation5 + %s26]]
        %v1367 = vstv %s1366
        %v1410 = vunpack.c.l.b16 %v1324
        %v1411 = vunpack.c.h.b16 %v1324
        %v1412 = vunpack.c.l.b16 %v1325
        %v1413 = vunpack.c.l.b16 %v1326
        %v1414 = vunpack.c.h.b16 %v1326
        %v1415 = vunpack.c.l.b16 %v1327
        %v1416 = vunpack.c.l.b16 %v1328
        %v1417 = vunpack.c.h.b16 %v1328
        %v1418 = vunpack.c.l.b16 %v1329
        %v1419 = vunpack.c.l.b16 %v1330
        %v1420 = vunpack.c.h.b16 %v1330
        %v1421 = vunpack.c.l.b16 %v1331
        %v1422 = vunpack.c.l.b16 %v1332
        %v1423 = vunpack.c.h.b16 %v1332
        %v1424 = vunpack.c.l.b16 %v1333
        %v1425 = vunpack.c.l.b16 %v1334
        %v1426 = vunpack.c.h.b16 %v1334
        %v1427 = vunpack.c.l.b16 %v1335
        %v1428 = vunpack.c.l.b16 %v1336
        %v1429 = vunpack.c.h.b16 %v1336
        %v1430 = vunpack.c.l.b16 %v1337
        %v1431 = vunpack.c.l.b16 %v1338
        %v1432 = vunpack.c.h.b16 %v1338
        %v1433 = vunpack.c.l.b16 %v1339
        %v1434 = vunpack.c.l.b16 %v1340
        %v1435 = vunpack.c.h.b16 %v1340
        %v1436 = vunpack.c.l.b16 %v1341
        %v1437 = vunpack.c.l.b16 %v1342
        %v1438 = vunpack.c.h.b16 %v1342
        %v1439 = vunpack.c.l.b16 %v1343
        %v1440 = vunpack.c.l.b16 %v1344
        %v1441 = vunpack.c.h.b16 %v1344
        %v1442 = vunpack.c.l.b16 %v1345
        %v1443 = vunpack.c.l.b16 %v1346
        %v1444 = vunpack.c.h.b16 %v1346
        %v1445 = vunpack.c.l.b16 %v1347
        %v1446 = vunpack.c.l.b16 %v1348
        %v1447 = vunpack.c.h.b16 %v1348
        %v1448 = vunpack.c.l.b16 %v1349
        %v1449 = vunpack.c.l.b16 %v1350
        %v1450 = vunpack.c.h.b16 %v1350
        %v1451 = vunpack.c.l.b16 %v1351
        %v1452 = vunpack.c.l.b16 %v1352
        %v1453 = vunpack.c.h.b16 %v1352
        %v1454 = vunpack.c.l.b16 %v1353
        %v1455 = vunpack.c.l.b16 %v1354
        %v1456 = vunpack.c.h.b16 %v1354
        %v1457 = vunpack.c.l.b16 %v1355
        %v1458 = vunpack.c.l.b16 %v1356
        %v1459 = vunpack.c.h.b16 %v1356
        %v1460 = vunpack.c.l.b16 %v1357
        %v1461 = vunpack.c.l.b16 %v1358
        %v1462 = vunpack.c.h.b16 %v1358
        %v1463 = vunpack.c.l.b16 %v1359
        %v1464 = vunpack.c.l.b16 %v1360
        %v1465 = vunpack.c.h.b16 %v1360
        %v1466 = vunpack.c.l.b16 %v1361
        %v1467 = vunpack.c.l.b16 %v1362
        %v1468 = vunpack.c.h.b16 %v1362
        %v1469 = vunpack.c.l.b16 %v1363
        %v1470 = vunpack.c.l.b16 %v1364
        %v1471 = vunpack.c.h.b16 %v1364
        %v1472 = vunpack.c.l.b16 %v1365
        %v1473 = vpack.c.b16 %v1413, %v1410
        %v1474 = vpack.c.b16 %v1414, %v1411
        %v1475 = vpack.c.b16 %v1415, %v1412
        %v1476 = vpack.c.b16 %v1419, %v1416
        %v1477 = vpack.c.b16 %v1420, %v1417
        %v1478 = vpack.c.b16 %v1421, %v1418
        %v1479 = vpack.c.b16 %v1425, %v1422
        %v1480 = vpack.c.b16 %v1426, %v1423
        %v1481 = vpack.c.b16 %v1427, %v1424
        %v1482 = vpack.c.b16 %v1431, %v1428
        %v1483 = vpack.c.b16 %v1432, %v1429
        %v1484 = vpack.c.b16 %v1433, %v1430
        %v1485 = vpack.c.b16 %v1437, %v1434
        %v1486 = vpack.c.b16 %v1438, %v1435
        %v1487 = vpack.c.b16 %v1439, %v1436
        %v1488 = vpack.c.b16 %v1443, %v1440
        %v1489 = vpack.c.b16 %v1444, %v1441
        %v1490 = vpack.c.b16 %v1445, %v1442
        %v1491 = vpack.c.b16 %v1449, %v1446
        %v1492 = vpack.c.b16 %v1450, %v1447
        %v1493 = vpack.c.b16 %v1451, %v1448
        %v1494 = vpack.c.b16 %v1455, %v1452
        %v1495 = vpack.c.b16 %v1456, %v1453
        %v1496 = vpack.c.b16 %v1457, %v1454
        %v1497 = vpack.c.b16 %v1461, %v1458
        %v1498 = vpack.c.b16 %v1462, %v1459
        %v1499 = vpack.c.b16 %v1463, %v1460
        %v1500 = vpack.c.b16 %v1467, %v1464
        %v1501 = vpack.c.b16 %v1468, %v1465
        %v1502 = vpack.c.b16 %v1469, %v1466
        %v1503 = vpack.c.b16 %v1470, %v1470
        %v1504 = vpack.c.b16 %v1471, %v1471
        %v1505 = vpack.c.b16 %v1472, %v1472
        %vm1536 = vcmask 326656
        %v1538 = vsel %vm1536, %v1323, 0
        %vm1540 = vcmask 1043456
        %v1542 = vsel %vm1540, %v1503, 0
        %v1545 = vsel %vm1540, %v1504, 0
        %v1548 = vsel %vm1540, %v1505, 0
        %1550 = vmatpush.bf16.msra.mxu0 %v1494
        %1551 = vmatpush.bf16.msra.mxu0 %v1491
        %1552 = vmatpush.bf16.msra.mxu0 %v1488
        %1553 = vmatpush.bf16.msra.mxu0 %v1485
        %1554 = vmatpush.bf16.msra.mxu0 %v1482
        %1555 = vmatpush.bf16.msra.mxu0 %v1479
        %1556 = vmatpush.bf16.msra.mxu0 %v1476
        %1557 = vmatpush.bf16.msra.mxu0 %v1473
        %1558 = vmatmul.bf16.gmra.mxu0 %v1322
        %v1559 = vpop.f32.mrf.mxu0
        %v1560 = vadd.f32 %v1367, %v1559
        %v1561 = vpop.f32.mrf.mxu0
        %1562 = vdwg.mxu0
        %1563 = vmatpush.bf16.msra.mxu0 0
        %1564 = vmatpush.bf16.msra.mxu0 0
        %1565 = vmatpush.bf16.msra.mxu0 0
        %1566 = vmatpush.bf16.msra.mxu0 0
        %1567 = vmatpush.bf16.msra.mxu0 0
        %1568 = vmatpush.bf16.msra.mxu0 %v1542
        %1569 = vmatpush.bf16.msra.mxu0 %v1500
        %1570 = vmatpush.bf16.msra.mxu0 %v1497
        %1571 = vmatmul.bf16.gmra.mxu0 %v1538
        %v1572 = vpop.f32.mrf.mxu0
        %v1573 = vadd.f32 %v1560, %v1572
        %v1574 = vpop.f32.mrf.mxu0
        %1575 = vdwg.mxu0
        %1576 = vmatpush.bf16.msra.mxu0 %v1495
        %1577 = vmatpush.bf16.msra.mxu0 %v1492
        %1578 = vmatpush.bf16.msra.mxu0 %v1489
        %1579 = vmatpush.bf16.msra.mxu0 %v1486
        %1580 = vmatpush.bf16.msra.mxu0 %v1483
        %1581 = vmatpush.bf16.msra.mxu0 %v1480
        %1582 = vmatpush.bf16.msra.mxu0 %v1477
        %1583 = vmatpush.bf16.msra.mxu0 %v1474
        %1584 = vmatmul.bf16.gmra.mxu0 %v1322
        %v1585 = vpop.f32.mrf.mxu0
        %v1586 = vadd.f32 %v1367, %v1585
        %v1587 = vpop.f32.mrf.mxu0
        %1588 = vdwg.mxu0
        %1589 = vmatpush.bf16.msra.mxu0 0
        %1590 = vmatpush.bf16.msra.mxu0 0
        %1591 = vmatpush.bf16.msra.mxu0 0
        %1592 = vmatpush.bf16.msra.mxu0 0
        %1593 = vmatpush.bf16.msra.mxu0 0
        %1594 = vmatpush.bf16.msra.mxu0 %v1545
        %1595 = vmatpush.bf16.msra.mxu0 %v1501
        %1596 = vmatpush.bf16.msra.mxu0 %v1498
        %1597 = vmatmul.bf16.gmra.mxu0 %v1538
        %v1598 = vpop.f32.mrf.mxu0
        %v1599 = vadd.f32 %v1586, %v1598
        %v1600 = vpop.f32.mrf.mxu0
        %1601 = vdwg.mxu0
        %1602 = vmatpush.bf16.msra.mxu0 %v1496
        %1603 = vmatpush.bf16.msra.mxu0 %v1493
        %1604 = vmatpush.bf16.msra.mxu0 %v1490
        %1605 = vmatpush.bf16.msra.mxu0 %v1487
        %1606 = vmatpush.bf16.msra.mxu0 %v1484
        %1607 = vmatpush.bf16.msra.mxu0 %v1481
        %1608 = vmatpush.bf16.msra.mxu0 %v1478
        %1609 = vmatpush.bf16.msra.mxu0 %v1475
        %1610 = vmatmul.bf16.gmra.mxu0 %v1322
        %v1611 = vpop.f32.mrf.mxu0
        %v1612 = vadd.f32 %v1367, %v1611
        %v1613 = vpop.f32.mrf.mxu0
        %1614 = vdwg.mxu0
        %1615 = vmatpush.bf16.msra.mxu0 0
        %1616 = vmatpush.bf16.msra.mxu0 0
        %1617 = vmatpush.bf16.msra.mxu0 0
        %1618 = vmatpush.bf16.msra.mxu0 0
        %1619 = vmatpush.bf16.msra.mxu0 0
        %1620 = vmatpush.bf16.msra.mxu0 %v1548
        %1621 = vmatpush.bf16.msra.mxu0 %v1502
        %1622 = vmatpush.bf16.msra.mxu0 %v1499
        %1623 = vmatmul.bf16.gmra.mxu0 %v1538
        %v1624 = vpop.f32.mrf.mxu0
        %v1625 = vadd.f32 %v1612, %v1624
        %v1626 = vpop.f32.mrf.mxu0
        %1627 = vdwg.mxu0
        %v1628 = vmax.f32 %v1573, 0.0
        %v1629 = vmax.f32 %v1599, 0.0
        %v1630 = vmax.f32 %v1625, 0.0
        %v1631 = vpack.c.bf16 %v1628, %v1628
        %v1632 = vpack.c.bf16 %v1629, %v1629
        %v1633 = vpack.c.bf16 %v1630, %v1630
        %v1634 = vld [vmem:[%s1228] sm:$0xff]
        %v1635 = vld [vmem:[%s1228 + $0x8] sm:$0xff]
        %v1636 = vld [vmem:[%s1228 + $0x10] sm:$0xff]
        %v1637 = vld [vmem:[%s1228 + $0x18] sm:$0xff]
        %v1638 = vld [vmem:[%s1228 + $0x20] sm:$0xff]
        %v1639 = vld [vmem:[%s1228 + $0x28] sm:$0xff]
        %v1640 = vld [vmem:[%s1228 + $0x30] sm:$0xff]
        %v1641 = vld [vmem:[%s1228 + $0x38] sm:$0xff]
        %v1642 = vld [vmem:[%s1228 + $0x40] sm:$0xff]
        %v1643 = vld [vmem:[%s1228 + $0x48] sm:$0xff]
        %v1644 = vld [vmem:[%s1228 + $0x50] sm:$0xff]
        %v1645 = vld [vmem:[%s1228 + $0x58] sm:$0xff]
        %v1646 = vld [vmem:[%s1228 + $0x60] sm:$0xff]
        %v1647 = vld [vmem:[%s1228 + $0x68] sm:$0xff]
        %v1648 = vld [vmem:[%s1228 + $0x70] sm:$0xff]
        %v1649 = vld [vmem:[%s1228 + $0x78] sm:$0xff]
        %v1650 = vld [vmem:[%s1228 + $0x80] sm:$0xff]
        %v1651 = vld [vmem:[%s1228 + $0x88] sm:$0xff]
        %v1652 = vld [vmem:[%s1228 + $0x90] sm:$0xff]
        %v1653 = vld [vmem:[%s1228 + $0x98] sm:$0xff]
        %v1654 = vld [vmem:[%s1228 + $0xa0] sm:$0xff]
        %v1655 = vld [vmem:[%s1228 + $0xa8] sm:$0xff]
        %v1656 = vld [vmem:[%s1228 + $0xb0] sm:$0xff]
        %v1657 = vld [vmem:[%s1228 + $0xb8] sm:$0xff]
        %v1658 = vld [vmem:[%s1228 + $0xc0] sm:$0xff]
        %v1659 = vld [vmem:[%s1228 + $0xc8] sm:$0xff]
        %v1660 = vld [vmem:[%s1228 + $0xd0] sm:$0xff]
        %v1661 = vld [vmem:[%s1228 + $0xd8] sm:$0xff]
        %v1662 = vld [vmem:[%s1228 + $0xe0] sm:$0xff]
        %v1663 = vld [vmem:[%s1228 + $0xe8] sm:$0xff]
        %v1664 = vld [vmem:[%s1228 + $0xf0] sm:$0xff]
        %v1665 = vld [vmem:[%s1228 + $0xf8] sm:$0xff]
        %v1666 = vld [vmem:[%s1228 + $0x100] sm:$0xff]
        %v1667 = vld [vmem:[%s1228 + $0x108] sm:$0xff]
        %v1668 = vld [vmem:[%s1228 + $0x110] sm:$0xff]
        %v1669 = vld [vmem:[%s1228 + $0x118] sm:$0xff]
        %v1670 = vld [vmem:[%s1228 + $0x120] sm:$0xff]
        %v1671 = vld [vmem:[%s1228 + $0x128] sm:$0xff]
        %v1672 = vld [vmem:[%s1228 + $0x130] sm:$0xff]
        %v1673 = vld [vmem:[%s1228 + $0x138] sm:$0xff]
        %v1674 = vld [vmem:[%s1228 + $0x140] sm:$0xff]
        %v1675 = vld [vmem:[%s1228 + $0x148] sm:$0xff]
        %v1676 = vld [vmem:[%s1228 + $0x150] sm:$0xff]
        %v1677 = vld [vmem:[%s1228 + $0x158] sm:$0xff]
        %v1678 = vld [vmem:[%s1228 + $0x160] sm:$0xff]
        %v1679 = vld [vmem:[%s1228 + $0x168] sm:$0xff]
        %v1680 = vld [vmem:[%s1228 + $0x170] sm:$0xff]
        %v1681 = vld [vmem:[%s1228 + $0x178] sm:$0xff]
        %s1682 = sld [smem:[#allocation7 + %s26]]
        %v1683 = vstv %s1682
        %v1732 = vunpack.c.l.b16 %v1634
        %v1733 = vunpack.c.h.b16 %v1634
        %v1734 = vunpack.c.l.b16 %v1635
        %v1735 = vunpack.c.h.b16 %v1635
        %v1736 = vunpack.c.l.b16 %v1636
        %v1737 = vunpack.c.h.b16 %v1636
        %v1738 = vunpack.c.l.b16 %v1637
        %v1739 = vunpack.c.h.b16 %v1637
        %v1740 = vunpack.c.l.b16 %v1638
        %v1741 = vunpack.c.h.b16 %v1638
        %v1742 = vunpack.c.l.b16 %v1639
        %v1743 = vunpack.c.h.b16 %v1639
        %v1744 = vunpack.c.l.b16 %v1640
        %v1745 = vunpack.c.h.b16 %v1640
        %v1746 = vunpack.c.l.b16 %v1641
        %v1747 = vunpack.c.h.b16 %v1641
        %v1748 = vunpack.c.l.b16 %v1642
        %v1749 = vunpack.c.h.b16 %v1642
        %v1750 = vunpack.c.l.b16 %v1643
        %v1751 = vunpack.c.h.b16 %v1643
        %v1752 = vunpack.c.l.b16 %v1644
        %v1753 = vunpack.c.h.b16 %v1644
        %v1754 = vunpack.c.l.b16 %v1645
        %v1755 = vunpack.c.h.b16 %v1645
        %v1756 = vunpack.c.l.b16 %v1646
        %v1757 = vunpack.c.h.b16 %v1646
        %v1758 = vunpack.c.l.b16 %v1647
        %v1759 = vunpack.c.h.b16 %v1647
        %v1760 = vunpack.c.l.b16 %v1648
        %v1761 = vunpack.c.h.b16 %v1648
        %v1762 = vunpack.c.l.b16 %v1649
        %v1763 = vunpack.c.h.b16 %v1649
        %v1764 = vunpack.c.l.b16 %v1650
        %v1765 = vunpack.c.h.b16 %v1650
        %v1766 = vunpack.c.l.b16 %v1651
        %v1767 = vunpack.c.h.b16 %v1651
        %v1768 = vunpack.c.l.b16 %v1652
        %v1769 = vunpack.c.h.b16 %v1652
        %v1770 = vunpack.c.l.b16 %v1653
        %v1771 = vunpack.c.h.b16 %v1653
        %v1772 = vunpack.c.l.b16 %v1654
        %v1773 = vunpack.c.h.b16 %v1654
        %v1774 = vunpack.c.l.b16 %v1655
        %v1775 = vunpack.c.h.b16 %v1655
        %v1776 = vunpack.c.l.b16 %v1656
        %v1777 = vunpack.c.h.b16 %v1656
        %v1778 = vunpack.c.l.b16 %v1657
        %v1779 = vunpack.c.h.b16 %v1657
        %v1780 = vunpack.c.l.b16 %v1658
        %v1781 = vunpack.c.h.b16 %v1658
        %v1782 = vunpack.c.l.b16 %v1659
        %v1783 = vunpack.c.h.b16 %v1659
        %v1784 = vunpack.c.l.b16 %v1660
        %v1785 = vunpack.c.h.b16 %v1660
        %v1786 = vunpack.c.l.b16 %v1661
        %v1787 = vunpack.c.h.b16 %v1661
        %v1788 = vunpack.c.l.b16 %v1662
        %v1789 = vunpack.c.h.b16 %v1662
        %v1790 = vunpack.c.l.b16 %v1663
        %v1791 = vunpack.c.h.b16 %v1663
        %v1792 = vunpack.c.l.b16 %v1664
        %v1793 = vunpack.c.h.b16 %v1664
        %v1794 = vunpack.c.l.b16 %v1665
        %v1795 = vunpack.c.h.b16 %v1665
        %v1796 = vunpack.c.l.b16 %v1666
        %v1797 = vunpack.c.h.b16 %v1666
        %v1798 = vunpack.c.l.b16 %v1667
        %v1799 = vunpack.c.h.b16 %v1667
        %v1800 = vunpack.c.l.b16 %v1668
        %v1801 = vunpack.c.h.b16 %v1668
        %v1802 = vunpack.c.l.b16 %v1669
        %v1803 = vunpack.c.h.b16 %v1669
        %v1804 = vunpack.c.l.b16 %v1670
        %v1805 = vunpack.c.h.b16 %v1670
        %v1806 = vunpack.c.l.b16 %v1671
        %v1807 = vunpack.c.h.b16 %v1671
        %v1808 = vunpack.c.l.b16 %v1672
        %v1809 = vunpack.c.h.b16 %v1672
        %v1810 = vunpack.c.l.b16 %v1673
        %v1811 = vunpack.c.h.b16 %v1673
        %v1812 = vunpack.c.l.b16 %v1674
        %v1813 = vunpack.c.h.b16 %v1674
        %v1814 = vunpack.c.l.b16 %v1675
        %v1815 = vunpack.c.h.b16 %v1675
        %v1816 = vunpack.c.l.b16 %v1676
        %v1817 = vunpack.c.h.b16 %v1676
        %v1818 = vunpack.c.l.b16 %v1677
        %v1819 = vunpack.c.h.b16 %v1677
        %v1820 = vunpack.c.l.b16 %v1678
        %v1821 = vunpack.c.h.b16 %v1678
        %v1822 = vunpack.c.l.b16 %v1679
        %v1823 = vunpack.c.h.b16 %v1679
        %v1824 = vunpack.c.l.b16 %v1680
        %v1825 = vunpack.c.h.b16 %v1680
        %v1826 = vunpack.c.l.b16 %v1681
        %v1827 = vunpack.c.h.b16 %v1681
        %v1828 = vpack.c.b16 %v1734, %v1732
        %v1829 = vpack.c.b16 %v1735, %v1733
        %v1830 = vpack.c.b16 %v1738, %v1736
        %v1831 = vpack.c.b16 %v1739, %v1737
        %v1832 = vpack.c.b16 %v1742, %v1740
        %v1833 = vpack.c.b16 %v1743, %v1741
        %v1834 = vpack.c.b16 %v1746, %v1744
        %v1835 = vpack.c.b16 %v1747, %v1745
        %v1836 = vpack.c.b16 %v1750, %v1748
        %v1837 = vpack.c.b16 %v1751, %v1749
        %v1838 = vpack.c.b16 %v1754, %v1752
        %v1839 = vpack.c.b16 %v1755, %v1753
        %v1840 = vpack.c.b16 %v1758, %v1756
        %v1841 = vpack.c.b16 %v1759, %v1757
        %v1842 = vpack.c.b16 %v1762, %v1760
        %v1843 = vpack.c.b16 %v1763, %v1761
        %v1844 = vpack.c.b16 %v1766, %v1764
        %v1845 = vpack.c.b16 %v1767, %v1765
        %v1846 = vpack.c.b16 %v1770, %v1768
        %v1847 = vpack.c.b16 %v1771, %v1769
        %v1848 = vpack.c.b16 %v1774, %v1772
        %v1849 = vpack.c.b16 %v1775, %v1773
        %v1850 = vpack.c.b16 %v1778, %v1776
        %v1851 = vpack.c.b16 %v1779, %v1777
        %v1852 = vpack.c.b16 %v1782, %v1780
        %v1853 = vpack.c.b16 %v1783, %v1781
        %v1854 = vpack.c.b16 %v1786, %v1784
        %v1855 = vpack.c.b16 %v1787, %v1785
        %v1856 = vpack.c.b16 %v1790, %v1788
        %v1857 = vpack.c.b16 %v1791, %v1789
        %v1858 = vpack.c.b16 %v1794, %v1792
        %v1859 = vpack.c.b16 %v1795, %v1793
        %v1860 = vpack.c.b16 %v1798, %v1796
        %v1861 = vpack.c.b16 %v1799, %v1797
        %v1862 = vpack.c.b16 %v1802, %v1800
        %v1863 = vpack.c.b16 %v1803, %v1801
        %v1864 = vpack.c.b16 %v1806, %v1804
        %v1865 = vpack.c.b16 %v1807, %v1805
        %v1866 = vpack.c.b16 %v1810, %v1808
        %v1867 = vpack.c.b16 %v1811, %v1809
        %v1868 = vpack.c.b16 %v1814, %v1812
        %v1869 = vpack.c.b16 %v1815, %v1813
        %v1870 = vpack.c.b16 %v1818, %v1816
        %v1871 = vpack.c.b16 %v1819, %v1817
        %v1872 = vpack.c.b16 %v1822, %v1820
        %v1873 = vpack.c.b16 %v1823, %v1821
        %v1874 = vpack.c.b16 %v1826, %v1824
        %v1875 = vpack.c.b16 %v1827, %v1825
        %1924 = vmatpush.bf16.msra.mxu0 %v1842
        %1925 = vmatpush.bf16.msra.mxu0 %v1840
        %1926 = vmatpush.bf16.msra.mxu0 %v1838
        %1927 = vmatpush.bf16.msra.mxu0 %v1836
        %1928 = vmatpush.bf16.msra.mxu0 %v1834
        %1929 = vmatpush.bf16.msra.mxu0 %v1832
        %1930 = vmatpush.bf16.msra.mxu0 %v1830
        %1931 = vmatpush.bf16.msra.mxu0 %v1828
        %1932 = vmatmul.bf16.gmra.mxu0 %v1631
        %v1933 = vpop.f32.mrf.mxu0
        %v1934 = vadd.f32 %v1683, %v1933
        %v1935 = vpop.f32.mrf.mxu0
        %1936 = vdwg.mxu0
        %1937 = vmatpush.bf16.msra.mxu0 %v1858
        %1938 = vmatpush.bf16.msra.mxu0 %v1856
        %1939 = vmatpush.bf16.msra.mxu0 %v1854
        %1940 = vmatpush.bf16.msra.mxu0 %v1852
        %1941 = vmatpush.bf16.msra.mxu0 %v1850
        %1942 = vmatpush.bf16.msra.mxu0 %v1848
        %1943 = vmatpush.bf16.msra.mxu0 %v1846
        %1944 = vmatpush.bf16.msra.mxu0 %v1844
        %1945 = vmatmul.bf16.gmra.mxu0 %v1632
        %v1946 = vpop.f32.mrf.mxu0
        %v1947 = vadd.f32 %v1934, %v1946
        %v1948 = vpop.f32.mrf.mxu0
        %1949 = vdwg.mxu0
        %1950 = vmatpush.bf16.msra.mxu0 %v1874
        %1951 = vmatpush.bf16.msra.mxu0 %v1872
        %1952 = vmatpush.bf16.msra.mxu0 %v1870
        %1953 = vmatpush.bf16.msra.mxu0 %v1868
        %1954 = vmatpush.bf16.msra.mxu0 %v1866
        %1955 = vmatpush.bf16.msra.mxu0 %v1864
        %1956 = vmatpush.bf16.msra.mxu0 %v1862
        %1957 = vmatpush.bf16.msra.mxu0 %v1860
        %1958 = vmatmul.bf16.gmra.mxu0 %v1633
        %v1959 = vpop.f32.mrf.mxu0
        %v1960 = vadd.f32 %v1947, %v1959
        %v1961 = vpop.f32.mrf.mxu0
        %1962 = vdwg.mxu0
        %1963 = vmatpush.bf16.msra.mxu0 %v1843
        %1964 = vmatpush.bf16.msra.mxu0 %v1841
        %1965 = vmatpush.bf16.msra.mxu0 %v1839
        %1966 = vmatpush.bf16.msra.mxu0 %v1837
        %1967 = vmatpush.bf16.msra.mxu0 %v1835
        %1968 = vmatpush.bf16.msra.mxu0 %v1833
        %1969 = vmatpush.bf16.msra.mxu0 %v1831
        %1970 = vmatpush.bf16.msra.mxu0 %v1829
        %1971 = vmatmul.bf16.gmra.mxu0 %v1631
        %v1972 = vpop.f32.mrf.mxu0
        %v1973 = vadd.f32 %v1683, %v1972
        %v1974 = vpop.f32.mrf.mxu0
        %1975 = vdwg.mxu0
        %1976 = vmatpush.bf16.msra.mxu0 %v1859
        %1977 = vmatpush.bf16.msra.mxu0 %v1857
        %1978 = vmatpush.bf16.msra.mxu0 %v1855
        %1979 = vmatpush.bf16.msra.mxu0 %v1853
        %1980 = vmatpush.bf16.msra.mxu0 %v1851
        %1981 = vmatpush.bf16.msra.mxu0 %v1849
        %1982 = vmatpush.bf16.msra.mxu0 %v1847
        %1983 = vmatpush.bf16.msra.mxu0 %v1845
        %1984 = vmatmul.bf16.gmra.mxu0 %v1632
        %v1985 = vpop.f32.mrf.mxu0
        %v1986 = vadd.f32 %v1973, %v1985
        %v1987 = vpop.f32.mrf.mxu0
        %1988 = vdwg.mxu0
        %1989 = vmatpush.bf16.msra.mxu0 %v1875
        %1990 = vmatpush.bf16.msra.mxu0 %v1873
        %1991 = vmatpush.bf16.msra.mxu0 %v1871
        %1992 = vmatpush.bf16.msra.mxu0 %v1869
        %1993 = vmatpush.bf16.msra.mxu0 %v1867
        %1994 = vmatpush.bf16.msra.mxu0 %v1865
        %1995 = vmatpush.bf16.msra.mxu0 %v1863
        %1996 = vmatpush.bf16.msra.mxu0 %v1861
        %1997 = vmatmul.bf16.gmra.mxu0 %v1633
        %v1998 = vpop.f32.mrf.mxu0
        %v1999 = vadd.f32 %v1986, %v1998
        %v2000 = vpop.f32.mrf.mxu0
        %2001 = vdwg.mxu0
        %v2002 = vmax.f32 %v1960, 0.0
        %v2003 = vmax.f32 %v1999, 0.0
        %v2004 = vadd.f32 %v2002, %v1320
        %v2005 = vadd.f32 %v2003, %v1321
        %v2006 = vmax.f32 %v2004, 0.0
        %v2007 = vmax.f32 %v2005, 0.0
        %2008 = vst [vmem:[#allocation2] sm:$0xff] %v2006
        %2009 = vst.msk [vmem:[#allocation2 + $0x8] sm:$0xff] %vm1536, %v2007
        %s2010 = scalar_lea.vmem [#allocation2], 16
        %v2011 = vld [vmem:[%s2010] sm:$0xff]
        %v2012 = vld [vmem:[%s2010 + $0x8] sm:$0xff]
        %v2013 = vpack.c.bf16 %v2011, %v2011
        %v2014 = vpack.c.bf16 %v2012, %v2012
        %s2015 = scalar_lea.vmem %s1221, 252 [#allocation3]
        %v2016 = vld [vmem:[%s2015] sm:$0xff]
        %v2017 = vld [vmem:[%s2015 + $0x8] sm:$0xf]
        %v2018 = vld [vmem:[%s2015 + $0xc] sm:$0xff]
        %v2019 = vld [vmem:[%s2015 + $0x14] sm:$0xf]
        %v2020 = vld [vmem:[%s2015 + $0x18] sm:$0xff]
        %v2021 = vld [vmem:[%s2015 + $0x20] sm:$0xf]
        %v2022 = vld [vmem:[%s2015 + $0x24] sm:$0xff]
        %v2023 = vld [vmem:[%s2015 + $0x2c] sm:$0xf]
        %v2024 = vld [vmem:[%s2015 + $0x30] sm:$0xff]
        %v2025 = vld [vmem:[%s2015 + $0x38] sm:$0xf]
        %v2026 = vld [vmem:[%s2015 + $0x3c] sm:$0xff]
        %v2027 = vld [vmem:[%s2015 + $0x44] sm:$0xf]
        %v2028 = vld [vmem:[%s2015 + $0x48] sm:$0xff]
        %v2029 = vld [vmem:[%s2015 + $0x50] sm:$0xf]
        %v2030 = vld [vmem:[%s2015 + $0x54] sm:$0xff]
        %v2031 = vld [vmem:[%s2015 + $0x5c] sm:$0xf]
        %v2032 = vld [vmem:[%s2015 + $0x60] sm:$0xff]
        %v2033 = vld [vmem:[%s2015 + $0x68] sm:$0xf]
        %v2034 = vld [vmem:[%s2015 + $0x6c] sm:$0xff]
        %v2035 = vld [vmem:[%s2015 + $0x74] sm:$0xf]
        %v2036 = vld [vmem:[%s2015 + $0x78] sm:$0xff]
        %v2037 = vld [vmem:[%s2015 + $0x80] sm:$0xf]
        %v2038 = vld [vmem:[%s2015 + $0x84] sm:$0xff]
        %v2039 = vld [vmem:[%s2015 + $0x8c] sm:$0xf]
        %v2040 = vld [vmem:[%s2015 + $0x90] sm:$0xff]
        %v2041 = vld [vmem:[%s2015 + $0x98] sm:$0xf]
        %v2042 = vld [vmem:[%s2015 + $0x9c] sm:$0xff]
        %v2043 = vld [vmem:[%s2015 + $0xa4] sm:$0xf]
        %v2044 = vld [vmem:[%s2015 + $0xa8] sm:$0xff]
        %v2045 = vld [vmem:[%s2015 + $0xb0] sm:$0xf]
        %v2046 = vld [vmem:[%s2015 + $0xb4] sm:$0xff]
        %v2047 = vld [vmem:[%s2015 + $0xbc] sm:$0xf]
        %v2048 = vld [vmem:[%s2015 + $0xc0] sm:$0xff]
        %v2049 = vld [vmem:[%s2015 + $0xc8] sm:$0xf]
        %v2050 = vld [vmem:[%s2015 + $0xcc] sm:$0xff]
        %v2051 = vld [vmem:[%s2015 + $0xd4] sm:$0xf]
        %v2052 = vld [vmem:[%s2015 + $0xd8] sm:$0xff]
        %v2053 = vld [vmem:[%s2015 + $0xe0] sm:$0xf]
        %v2054 = vld [vmem:[%s2015 + $0xe4] sm:$0xff]
        %v2055 = vld [vmem:[%s2015 + $0xec] sm:$0xf]
        %v2056 = vld [vmem:[%s2015 + $0xf0] sm:$0xff]
        %v2057 = vld [vmem:[%s2015 + $0xf8] sm:$0xf]
        %s2058 = sshra.s32 %s26, 7
        %s2059 = sand.u32 %s26, 127
        %s2060 = sadd.s32 %s2058, 1
        %s2061 = smul.u32 %s2060, 128
        %s2062 = sshra.s32 %s26, 7
        %s2063 = sand.u32 %s26, 127
        %s2064 = sadd.s32 %s2061, %s2063
        %s2065 = sld [smem:[#allocation5 + %s2064]]
        %v2066 = vstv %s2065
        %v2109 = vunpack.c.l.b16 %v2016
        %v2110 = vunpack.c.h.b16 %v2016
        %v2111 = vunpack.c.l.b16 %v2017
        %v2112 = vunpack.c.l.b16 %v2018
        %v2113 = vunpack.c.h.b16 %v2018
        %v2114 = vunpack.c.l.b16 %v2019
        %v2115 = vunpack.c.l.b16 %v2020
        %v2116 = vunpack.c.h.b16 %v2020
        %v2117 = vunpack.c.l.b16 %v2021
        %v2118 = vunpack.c.l.b16 %v2022
        %v2119 = vunpack.c.h.b16 %v2022
        %v2120 = vunpack.c.l.b16 %v2023
        %v2121 = vunpack.c.l.b16 %v2024
        %v2122 = vunpack.c.h.b16 %v2024
        %v2123 = vunpack.c.l.b16 %v2025
        %v2124 = vunpack.c.l.b16 %v2026
        %v2125 = vunpack.c.h.b16 %v2026
        %v2126 = vunpack.c.l.b16 %v2027
        %v2127 = vunpack.c.l.b16 %v2028
        %v2128 = vunpack.c.h.b16 %v2028
        %v2129 = vunpack.c.l.b16 %v2029
        %v2130 = vunpack.c.l.b16 %v2030
        %v2131 = vunpack.c.h.b16 %v2030
        %v2132 = vunpack.c.l.b16 %v2031
        %v2133 = vunpack.c.l.b16 %v2032
        %v2134 = vunpack.c.h.b16 %v2032
        %v2135 = vunpack.c.l.b16 %v2033
        %v2136 = vunpack.c.l.b16 %v2034
        %v2137 = vunpack.c.h.b16 %v2034
        %v2138 = vunpack.c.l.b16 %v2035
        %v2139 = vunpack.c.l.b16 %v2036
        %v2140 = vunpack.c.h.b16 %v2036
        %v2141 = vunpack.c.l.b16 %v2037
        %v2142 = vunpack.c.l.b16 %v2038
        %v2143 = vunpack.c.h.b16 %v2038
        %v2144 = vunpack.c.l.b16 %v2039
        %v2145 = vunpack.c.l.b16 %v2040
        %v2146 = vunpack.c.h.b16 %v2040
        %v2147 = vunpack.c.l.b16 %v2041
        %v2148 = vunpack.c.l.b16 %v2042
        %v2149 = vunpack.c.h.b16 %v2042
        %v2150 = vunpack.c.l.b16 %v2043
        %v2151 = vunpack.c.l.b16 %v2044
        %v2152 = vunpack.c.h.b16 %v2044
        %v2153 = vunpack.c.l.b16 %v2045
        %v2154 = vunpack.c.l.b16 %v2046
        %v2155 = vunpack.c.h.b16 %v2046
        %v2156 = vunpack.c.l.b16 %v2047
        %v2157 = vunpack.c.l.b16 %v2048
        %v2158 = vunpack.c.h.b16 %v2048
        %v2159 = vunpack.c.l.b16 %v2049
        %v2160 = vunpack.c.l.b16 %v2050
        %v2161 = vunpack.c.h.b16 %v2050
        %v2162 = vunpack.c.l.b16 %v2051
        %v2163 = vunpack.c.l.b16 %v2052
        %v2164 = vunpack.c.h.b16 %v2052
        %v2165 = vunpack.c.l.b16 %v2053
        %v2166 = vunpack.c.l.b16 %v2054
        %v2167 = vunpack.c.h.b16 %v2054
        %v2168 = vunpack.c.l.b16 %v2055
        %v2169 = vunpack.c.l.b16 %v2056
        %v2170 = vunpack.c.h.b16 %v2056
        %v2171 = vunpack.c.l.b16 %v2057
        %v2172 = vpack.c.b16 %v2112, %v2109
        %v2173 = vpack.c.b16 %v2113, %v2110
        %v2174 = vpack.c.b16 %v2114, %v2111
        %v2175 = vpack.c.b16 %v2118, %v2115
        %v2176 = vpack.c.b16 %v2119, %v2116
        %v2177 = vpack.c.b16 %v2120, %v2117
        %v2178 = vpack.c.b16 %v2124, %v2121
        %v2179 = vpack.c.b16 %v2125, %v2122
        %v2180 = vpack.c.b16 %v2126, %v2123
        %v2181 = vpack.c.b16 %v2130, %v2127
        %v2182 = vpack.c.b16 %v2131, %v2128
        %v2183 = vpack.c.b16 %v2132, %v2129
        %v2184 = vpack.c.b16 %v2136, %v2133
        %v2185 = vpack.c.b16 %v2137, %v2134
        %v2186 = vpack.c.b16 %v2138, %v2135
        %v2187 = vpack.c.b16 %v2142, %v2139
        %v2188 = vpack.c.b16 %v2143, %v2140
        %v2189 = vpack.c.b16 %v2144, %v2141
        %v2190 = vpack.c.b16 %v2148, %v2145
        %v2191 = vpack.c.b16 %v2149, %v2146
        %v2192 = vpack.c.b16 %v2150, %v2147
        %v2193 = vpack.c.b16 %v2154, %v2151
        %v2194 = vpack.c.b16 %v2155, %v2152
        %v2195 = vpack.c.b16 %v2156, %v2153
        %v2196 = vpack.c.b16 %v2160, %v2157
        %v2197 = vpack.c.b16 %v2161, %v2158
        %v2198 = vpack.c.b16 %v2162, %v2159
        %v2199 = vpack.c.b16 %v2166, %v2163
        %v2200 = vpack.c.b16 %v2167, %v2164
        %v2201 = vpack.c.b16 %v2168, %v2165
        %v2202 = vpack.c.b16 %v2169, %v2169
        %v2203 = vpack.c.b16 %v2170, %v2170
        %v2204 = vpack.c.b16 %v2171, %v2171
        %v2236 = vsel %vm1536, %v2014, 0
        %v2239 = vsel %vm1540, %v2202, 0
        %v2242 = vsel %vm1540, %v2203, 0
        %v2245 = vsel %vm1540, %v2204, 0
        %2247 = vmatpush.bf16.msra.mxu0 %v2193
        %2248 = vmatpush.bf16.msra.mxu0 %v2190
        %2249 = vmatpush.bf16.msra.mxu0 %v2187
        %2250 = vmatpush.bf16.msra.mxu0 %v2184
        %2251 = vmatpush.bf16.msra.mxu0 %v2181
        %2252 = vmatpush.bf16.msra.mxu0 %v2178
        %2253 = vmatpush.bf16.msra.mxu0 %v2175
        %2254 = vmatpush.bf16.msra.mxu0 %v2172
        %2255 = vmatmul.bf16.gmra.mxu0 %v2013
        %v2256 = vpop.f32.mrf.mxu0
        %v2257 = vadd.f32 %v2066, %v2256
        %v2258 = vpop.f32.mrf.mxu0
        %2259 = vdwg.mxu0
        %2260 = vmatpush.bf16.msra.mxu0 0
        %2261 = vmatpush.bf16.msra.mxu0 0
        %2262 = vmatpush.bf16.msra.mxu0 0
        %2263 = vmatpush.bf16.msra.mxu0 0
        %2264 = vmatpush.bf16.msra.mxu0 0
        %2265 = vmatpush.bf16.msra.mxu0 %v2239
        %2266 = vmatpush.bf16.msra.mxu0 %v2199
        %2267 = vmatpush.bf16.msra.mxu0 %v2196
        %2268 = vmatmul.bf16.gmra.mxu0 %v2236
        %v2269 = vpop.f32.mrf.mxu0
        %v2270 = vadd.f32 %v2257, %v2269
        %v2271 = vpop.f32.mrf.mxu0
        %2272 = vdwg.mxu0
        %2273 = vmatpush.bf16.msra.mxu0 %v2194
        %2274 = vmatpush.bf16.msra.mxu0 %v2191
        %2275 = vmatpush.bf16.msra.mxu0 %v2188
        %2276 = vmatpush.bf16.msra.mxu0 %v2185
        %2277 = vmatpush.bf16.msra.mxu0 %v2182
        %2278 = vmatpush.bf16.msra.mxu0 %v2179
        %2279 = vmatpush.bf16.msra.mxu0 %v2176
        %2280 = vmatpush.bf16.msra.mxu0 %v2173
        %2281 = vmatmul.bf16.gmra.mxu0 %v2013
        %v2282 = vpop.f32.mrf.mxu0
        %v2283 = vadd.f32 %v2066, %v2282
        %v2284 = vpop.f32.mrf.mxu0
        %2285 = vdwg.mxu0
        %2286 = vmatpush.bf16.msra.mxu0 0
        %2287 = vmatpush.bf16.msra.mxu0 0
        %2288 = vmatpush.bf16.msra.mxu0 0
        %2289 = vmatpush.bf16.msra.mxu0 0
        %2290 = vmatpush.bf16.msra.mxu0 0
        %2291 = vmatpush.bf16.msra.mxu0 %v2242
        %2292 = vmatpush.bf16.msra.mxu0 %v2200
        %2293 = vmatpush.bf16.msra.mxu0 %v2197
        %2294 = vmatmul.bf16.gmra.mxu0 %v2236
        %v2295 = vpop.f32.mrf.mxu0
        %v2296 = vadd.f32 %v2283, %v2295
        %v2297 = vpop.f32.mrf.mxu0
        %2298 = vdwg.mxu0
        %2299 = vmatpush.bf16.msra.mxu0 %v2195
        %2300 = vmatpush.bf16.msra.mxu0 %v2192
        %2301 = vmatpush.bf16.msra.mxu0 %v2189
        %2302 = vmatpush.bf16.msra.mxu0 %v2186
        %2303 = vmatpush.bf16.msra.mxu0 %v2183
        %2304 = vmatpush.bf16.msra.mxu0 %v2180
        %2305 = vmatpush.bf16.msra.mxu0 %v2177
        %2306 = vmatpush.bf16.msra.mxu0 %v2174
        %2307 = vmatmul.bf16.gmra.mxu0 %v2013
        %v2308 = vpop.f32.mrf.mxu0
        %v2309 = vadd.f32 %v2066, %v2308
        %v2310 = vpop.f32.mrf.mxu0
        %2311 = vdwg.mxu0
        %2312 = vmatpush.bf16.msra.mxu0 0
        %2313 = vmatpush.bf16.msra.mxu0 0
        %2314 = vmatpush.bf16.msra.mxu0 0
        %2315 = vmatpush.bf16.msra.mxu0 0
        %2316 = vmatpush.bf16.msra.mxu0 0
        %2317 = vmatpush.bf16.msra.mxu0 %v2245
        %2318 = vmatpush.bf16.msra.mxu0 %v2201
        %2319 = vmatpush.bf16.msra.mxu0 %v2198
        %2320 = vmatmul.bf16.gmra.mxu0 %v2236
        %v2321 = vpop.f32.mrf.mxu0
        %v2322 = vadd.f32 %v2309, %v2321
        %v2323 = vpop.f32.mrf.mxu0
        %2324 = vdwg.mxu0
        %v2325 = vmax.f32 %v2270, 0.0
        %v2326 = vmax.f32 %v2296, 0.0
        %v2327 = vmax.f32 %v2322, 0.0
        %v2328 = vpack.c.bf16 %v2325, %v2325
        %v2329 = vpack.c.bf16 %v2326, %v2326
        %v2330 = vpack.c.bf16 %v2327, %v2327
        %s2331 = scalar_lea.vmem %s1228, 384 [#allocation4]
        %v2332 = vld [vmem:[%s2331] sm:$0xff]
        %v2333 = vld [vmem:[%s2331 + $0x8] sm:$0xff]
        %v2334 = vld [vmem:[%s2331 + $0x10] sm:$0xff]
        %v2335 = vld [vmem:[%s2331 + $0x18] sm:$0xff]
        %v2336 = vld [vmem:[%s2331 + $0x20] sm:$0xff]
        %v2337 = vld [vmem:[%s2331 + $0x28] sm:$0xff]
        %v2338 = vld [vmem:[%s2331 + $0x30] sm:$0xff]
        %v2339 = vld [vmem:[%s2331 + $0x38] sm:$0xff]
        %v2340 = vld [vmem:[%s2331 + $0x40] sm:$0xff]
        %v2341 = vld [vmem:[%s2331 + $0x48] sm:$0xff]
        %v2342 = vld [vmem:[%s2331 + $0x50] sm:$0xff]
        %v2343 = vld [vmem:[%s2331 + $0x58] sm:$0xff]
        %v2344 = vld [vmem:[%s2331 + $0x60] sm:$0xff]
        %v2345 = vld [vmem:[%s2331 + $0x68] sm:$0xff]
        %v2346 = vld [vmem:[%s2331 + $0x70] sm:$0xff]
        %v2347 = vld [vmem:[%s2331 + $0x78] sm:$0xff]
        %v2348 = vld [vmem:[%s2331 + $0x80] sm:$0xff]
        %v2349 = vld [vmem:[%s2331 + $0x88] sm:$0xff]
        %v2350 = vld [vmem:[%s2331 + $0x90] sm:$0xff]
        %v2351 = vld [vmem:[%s2331 + $0x98] sm:$0xff]
        %v2352 = vld [vmem:[%s2331 + $0xa0] sm:$0xff]
        %v2353 = vld [vmem:[%s2331 + $0xa8] sm:$0xff]
        %v2354 = vld [vmem:[%s2331 + $0xb0] sm:$0xff]
        %v2355 = vld [vmem:[%s2331 + $0xb8] sm:$0xff]
        %v2356 = vld [vmem:[%s2331 + $0xc0] sm:$0xff]
        %v2357 = vld [vmem:[%s2331 + $0xc8] sm:$0xff]
        %v2358 = vld [vmem:[%s2331 + $0xd0] sm:$0xff]
        %v2359 = vld [vmem:[%s2331 + $0xd8] sm:$0xff]
        %v2360 = vld [vmem:[%s2331 + $0xe0] sm:$0xff]
        %v2361 = vld [vmem:[%s2331 + $0xe8] sm:$0xff]
        %v2362 = vld [vmem:[%s2331 + $0xf0] sm:$0xff]
        %v2363 = vld [vmem:[%s2331 + $0xf8] sm:$0xff]
        %v2364 = vld [vmem:[%s2331 + $0x100] sm:$0xff]
        %v2365 = vld [vmem:[%s2331 + $0x108] sm:$0xff]
        %v2366 = vld [vmem:[%s2331 + $0x110] sm:$0xff]
        %v2367 = vld [vmem:[%s2331 + $0x118] sm:$0xff]
        %v2368 = vld [vmem:[%s2331 + $0x120] sm:$0xff]
        %v2369 = vld [vmem:[%s2331 + $0x128] sm:$0xff]
        %v2370 = vld [vmem:[%s2331 + $0x130] sm:$0xff]
        %v2371 = vld [vmem:[%s2331 + $0x138] sm:$0xff]
        %v2372 = vld [vmem:[%s2331 + $0x140] sm:$0xff]
        %v2373 = vld [vmem:[%s2331 + $0x148] sm:$0xff]
        %v2374 = vld [vmem:[%s2331 + $0x150] sm:$0xff]
        %v2375 = vld [vmem:[%s2331 + $0x158] sm:$0xff]
        %v2376 = vld [vmem:[%s2331 + $0x160] sm:$0xff]
        %v2377 = vld [vmem:[%s2331 + $0x168] sm:$0xff]
        %v2378 = vld [vmem:[%s2331 + $0x170] sm:$0xff]
        %v2379 = vld [vmem:[%s2331 + $0x178] sm:$0xff]
        %s2380 = sld [smem:[#allocation7 + %s2064]]
        %v2381 = vstv %s2380
        %v2430 = vunpack.c.l.b16 %v2332
        %v2431 = vunpack.c.h.b16 %v2332
        %v2432 = vunpack.c.l.b16 %v2333
        %v2433 = vunpack.c.h.b16 %v2333
        %v2434 = vunpack.c.l.b16 %v2334
        %v2435 = vunpack.c.h.b16 %v2334
        %v2436 = vunpack.c.l.b16 %v2335
        %v2437 = vunpack.c.h.b16 %v2335
        %v2438 = vunpack.c.l.b16 %v2336
        %v2439 = vunpack.c.h.b16 %v2336
        %v2440 = vunpack.c.l.b16 %v2337
        %v2441 = vunpack.c.h.b16 %v2337
        %v2442 = vunpack.c.l.b16 %v2338
        %v2443 = vunpack.c.h.b16 %v2338
        %v2444 = vunpack.c.l.b16 %v2339
        %v2445 = vunpack.c.h.b16 %v2339
        %v2446 = vunpack.c.l.b16 %v2340
        %v2447 = vunpack.c.h.b16 %v2340
        %v2448 = vunpack.c.l.b16 %v2341
        %v2449 = vunpack.c.h.b16 %v2341
        %v2450 = vunpack.c.l.b16 %v2342
        %v2451 = vunpack.c.h.b16 %v2342
        %v2452 = vunpack.c.l.b16 %v2343
        %v2453 = vunpack.c.h.b16 %v2343
        %v2454 = vunpack.c.l.b16 %v2344
        %v2455 = vunpack.c.h.b16 %v2344
        %v2456 = vunpack.c.l.b16 %v2345
        %v2457 = vunpack.c.h.b16 %v2345
        %v2458 = vunpack.c.l.b16 %v2346
        %v2459 = vunpack.c.h.b16 %v2346
        %v2460 = vunpack.c.l.b16 %v2347
        %v2461 = vunpack.c.h.b16 %v2347
        %v2462 = vunpack.c.l.b16 %v2348
        %v2463 = vunpack.c.h.b16 %v2348
        %v2464 = vunpack.c.l.b16 %v2349
        %v2465 = vunpack.c.h.b16 %v2349
        %v2466 = vunpack.c.l.b16 %v2350
        %v2467 = vunpack.c.h.b16 %v2350
        %v2468 = vunpack.c.l.b16 %v2351
        %v2469 = vunpack.c.h.b16 %v2351
        %v2470 = vunpack.c.l.b16 %v2352
        %v2471 = vunpack.c.h.b16 %v2352
        %v2472 = vunpack.c.l.b16 %v2353
        %v2473 = vunpack.c.h.b16 %v2353
        %v2474 = vunpack.c.l.b16 %v2354
        %v2475 = vunpack.c.h.b16 %v2354
        %v2476 = vunpack.c.l.b16 %v2355
        %v2477 = vunpack.c.h.b16 %v2355
        %v2478 = vunpack.c.l.b16 %v2356
        %v2479 = vunpack.c.h.b16 %v2356
        %v2480 = vunpack.c.l.b16 %v2357
        %v2481 = vunpack.c.h.b16 %v2357
        %v2482 = vunpack.c.l.b16 %v2358
        %v2483 = vunpack.c.h.b16 %v2358
        %v2484 = vunpack.c.l.b16 %v2359
        %v2485 = vunpack.c.h.b16 %v2359
        %v2486 = vunpack.c.l.b16 %v2360
        %v2487 = vunpack.c.h.b16 %v2360
        %v2488 = vunpack.c.l.b16 %v2361
        %v2489 = vunpack.c.h.b16 %v2361
        %v2490 = vunpack.c.l.b16 %v2362
        %v2491 = vunpack.c.h.b16 %v2362
        %v2492 = vunpack.c.l.b16 %v2363
        %v2493 = vunpack.c.h.b16 %v2363
        %v2494 = vunpack.c.l.b16 %v2364
        %v2495 = vunpack.c.h.b16 %v2364
        %v2496 = vunpack.c.l.b16 %v2365
        %v2497 = vunpack.c.h.b16 %v2365
        %v2498 = vunpack.c.l.b16 %v2366
        %v2499 = vunpack.c.h.b16 %v2366
        %v2500 = vunpack.c.l.b16 %v2367
        %v2501 = vunpack.c.h.b16 %v2367
        %v2502 = vunpack.c.l.b16 %v2368
        %v2503 = vunpack.c.h.b16 %v2368
        %v2504 = vunpack.c.l.b16 %v2369
        %v2505 = vunpack.c.h.b16 %v2369
        %v2506 = vunpack.c.l.b16 %v2370
        %v2507 = vunpack.c.h.b16 %v2370
        %v2508 = vunpack.c.l.b16 %v2371
        %v2509 = vunpack.c.h.b16 %v2371
        %v2510 = vunpack.c.l.b16 %v2372
        %v2511 = vunpack.c.h.b16 %v2372
        %v2512 = vunpack.c.l.b16 %v2373
        %v2513 = vunpack.c.h.b16 %v2373
        %v2514 = vunpack.c.l.b16 %v2374
        %v2515 = vunpack.c.h.b16 %v2374
        %v2516 = vunpack.c.l.b16 %v2375
        %v2517 = vunpack.c.h.b16 %v2375
        %v2518 = vunpack.c.l.b16 %v2376
        %v2519 = vunpack.c.h.b16 %v2376
        %v2520 = vunpack.c.l.b16 %v2377
        %v2521 = vunpack.c.h.b16 %v2377
        %v2522 = vunpack.c.l.b16 %v2378
        %v2523 = vunpack.c.h.b16 %v2378
        %v2524 = vunpack.c.l.b16 %v2379
        %v2525 = vunpack.c.h.b16 %v2379
        %v2526 = vpack.c.b16 %v2432, %v2430
        %v2527 = vpack.c.b16 %v2433, %v2431
        %v2528 = vpack.c.b16 %v2436, %v2434
        %v2529 = vpack.c.b16 %v2437, %v2435
        %v2530 = vpack.c.b16 %v2440, %v2438
        %v2531 = vpack.c.b16 %v2441, %v2439
        %v2532 = vpack.c.b16 %v2444, %v2442
        %v2533 = vpack.c.b16 %v2445, %v2443
        %v2534 = vpack.c.b16 %v2448, %v2446
        %v2535 = vpack.c.b16 %v2449, %v2447
        %v2536 = vpack.c.b16 %v2452, %v2450
        %v2537 = vpack.c.b16 %v2453, %v2451
        %v2538 = vpack.c.b16 %v2456, %v2454
        %v2539 = vpack.c.b16 %v2457, %v2455
        %v2540 = vpack.c.b16 %v2460, %v2458
        %v2541 = vpack.c.b16 %v2461, %v2459
        %v2542 = vpack.c.b16 %v2464, %v2462
        %v2543 = vpack.c.b16 %v2465, %v2463
        %v2544 = vpack.c.b16 %v2468, %v2466
        %v2545 = vpack.c.b16 %v2469, %v2467
        %v2546 = vpack.c.b16 %v2472, %v2470
        %v2547 = vpack.c.b16 %v2473, %v2471
        %v2548 = vpack.c.b16 %v2476, %v2474
        %v2549 = vpack.c.b16 %v2477, %v2475
        %v2550 = vpack.c.b16 %v2480, %v2478
        %v2551 = vpack.c.b16 %v2481, %v2479
        %v2552 = vpack.c.b16 %v2484, %v2482
        %v2553 = vpack.c.b16 %v2485, %v2483
        %v2554 = vpack.c.b16 %v2488, %v2486
        %v2555 = vpack.c.b16 %v2489, %v2487
        %v2556 = vpack.c.b16 %v2492, %v2490
        %v2557 = vpack.c.b16 %v2493, %v2491
        %v2558 = vpack.c.b16 %v2496, %v2494
        %v2559 = vpack.c.b16 %v2497, %v2495
        %v2560 = vpack.c.b16 %v2500, %v2498
        %v2561 = vpack.c.b16 %v2501, %v2499
        %v2562 = vpack.c.b16 %v2504, %v2502
        %v2563 = vpack.c.b16 %v2505, %v2503
        %v2564 = vpack.c.b16 %v2508, %v2506
        %v2565 = vpack.c.b16 %v2509, %v2507
        %v2566 = vpack.c.b16 %v2512, %v2510
        %v2567 = vpack.c.b16 %v2513, %v2511
        %v2568 = vpack.c.b16 %v2516, %v2514
        %v2569 = vpack.c.b16 %v2517, %v2515
        %v2570 = vpack.c.b16 %v2520, %v2518
        %v2571 = vpack.c.b16 %v2521, %v2519
        %v2572 = vpack.c.b16 %v2524, %v2522
        %v2573 = vpack.c.b16 %v2525, %v2523
        %2622 = vmatpush.bf16.msra.mxu0 %v2540
        %2623 = vmatpush.bf16.msra.mxu0 %v2538
        %2624 = vmatpush.bf16.msra.mxu0 %v2536
        %2625 = vmatpush.bf16.msra.mxu0 %v2534
        %2626 = vmatpush.bf16.msra.mxu0 %v2532
        %2627 = vmatpush.bf16.msra.mxu0 %v2530
        %2628 = vmatpush.bf16.msra.mxu0 %v2528
        %2629 = vmatpush.bf16.msra.mxu0 %v2526
        %2630 = vmatmul.bf16.gmra.mxu0 %v2328
        %v2631 = vpop.f32.mrf.mxu0
        %v2632 = vadd.f32 %v2381, %v2631
        %v2633 = vpop.f32.mrf.mxu0
        %2634 = vdwg.mxu0
        %2635 = vmatpush.bf16.msra.mxu0 %v2556
        %2636 = vmatpush.bf16.msra.mxu0 %v2554
        %2637 = vmatpush.bf16.msra.mxu0 %v2552
        %2638 = vmatpush.bf16.msra.mxu0 %v2550
        %2639 = vmatpush.bf16.msra.mxu0 %v2548
        %2640 = vmatpush.bf16.msra.mxu0 %v2546
        %2641 = vmatpush.bf16.msra.mxu0 %v2544
        %2642 = vmatpush.bf16.msra.mxu0 %v2542
        %2643 = vmatmul.bf16.gmra.mxu0 %v2329
        %v2644 = vpop.f32.mrf.mxu0
        %v2645 = vadd.f32 %v2632, %v2644
        %v2646 = vpop.f32.mrf.mxu0
        %2647 = vdwg.mxu0
        %2648 = vmatpush.bf16.msra.mxu0 %v2572
        %2649 = vmatpush.bf16.msra.mxu0 %v2570
        %2650 = vmatpush.bf16.msra.mxu0 %v2568
        %2651 = vmatpush.bf16.msra.mxu0 %v2566
        %2652 = vmatpush.bf16.msra.mxu0 %v2564
        %2653 = vmatpush.bf16.msra.mxu0 %v2562
        %2654 = vmatpush.bf16.msra.mxu0 %v2560
        %2655 = vmatpush.bf16.msra.mxu0 %v2558
        %2656 = vmatmul.bf16.gmra.mxu0 %v2330
        %v2657 = vpop.f32.mrf.mxu0
        %v2658 = vadd.f32 %v2645, %v2657
        %v2659 = vpop.f32.mrf.mxu0
        %2660 = vdwg.mxu0
        %2661 = vmatpush.bf16.msra.mxu0 %v2541
        %2662 = vmatpush.bf16.msra.mxu0 %v2539
        %2663 = vmatpush.bf16.msra.mxu0 %v2537
        %2664 = vmatpush.bf16.msra.mxu0 %v2535
        %2665 = vmatpush.bf16.msra.mxu0 %v2533
        %2666 = vmatpush.bf16.msra.mxu0 %v2531
        %2667 = vmatpush.bf16.msra.mxu0 %v2529
        %2668 = vmatpush.bf16.msra.mxu0 %v2527
        %2669 = vmatmul.bf16.gmra.mxu0 %v2328
        %v2670 = vpop.f32.mrf.mxu0
        %v2671 = vadd.f32 %v2381, %v2670
        %v2672 = vpop.f32.mrf.mxu0
        %2673 = vdwg.mxu0
        %2674 = vmatpush.bf16.msra.mxu0 %v2557
        %2675 = vmatpush.bf16.msra.mxu0 %v2555
        %2676 = vmatpush.bf16.msra.mxu0 %v2553
        %2677 = vmatpush.bf16.msra.mxu0 %v2551
        %2678 = vmatpush.bf16.msra.mxu0 %v2549
        %2679 = vmatpush.bf16.msra.mxu0 %v2547
        %2680 = vmatpush.bf16.msra.mxu0 %v2545
        %2681 = vmatpush.bf16.msra.mxu0 %v2543
        %2682 = vmatmul.bf16.gmra.mxu0 %v2329
        %v2683 = vpop.f32.mrf.mxu0
        %v2684 = vadd.f32 %v2671, %v2683
        %v2685 = vpop.f32.mrf.mxu0
        %2686 = vdwg.mxu0
        %2687 = vmatpush.bf16.msra.mxu0 %v2573
        %2688 = vmatpush.bf16.msra.mxu0 %v2571
        %2689 = vmatpush.bf16.msra.mxu0 %v2569
        %2690 = vmatpush.bf16.msra.mxu0 %v2567
        %2691 = vmatpush.bf16.msra.mxu0 %v2565
        %2692 = vmatpush.bf16.msra.mxu0 %v2563
        %2693 = vmatpush.bf16.msra.mxu0 %v2561
        %2694 = vmatpush.bf16.msra.mxu0 %v2559
        %2695 = vmatmul.bf16.gmra.mxu0 %v2330
        %v2696 = vpop.f32.mrf.mxu0
        %v2697 = vadd.f32 %v2684, %v2696
        %v2698 = vpop.f32.mrf.mxu0
        %2699 = vdwg.mxu0
        %v2700 = vmax.f32 %v2658, 0.0
        %v2701 = vmax.f32 %v2697, 0.0
        %v2702 = vadd.f32 %v2700, %v2011
        %v2703 = vadd.f32 %v2701, %v2012
        %v2704 = vmax.f32 %v2702, 0.0
        %v2705 = vmax.f32 %v2703, 0.0
        %2706 = vst [vmem:[%s2010] sm:$0xff] %v2704
        %2707 = vst.msk [vmem:[%s2010 + $0x8] sm:$0xff] %vm1536, %v2705
        %s2708 = scalar_lea.vmem [#allocation2], 32
        %v2709 = vld [vmem:[%s2708] sm:$0xff]
        %v2710 = vld [vmem:[%s2708 + $0x8] sm:$0xff]
        %v2711 = vpack.c.bf16 %v2709, %v2709
        %v2712 = vpack.c.bf16 %v2710, %v2710
        %s2713 = scalar_lea.vmem %s1221, 504 [#allocation3]
        %v2714 = vld [vmem:[%s2713] sm:$0xff]
        %v2715 = vld [vmem:[%s2713 + $0x8] sm:$0xf]
        %v2716 = vld [vmem:[%s2713 + $0xc] sm:$0xff]
        %v2717 = vld [vmem:[%s2713 + $0x14] sm:$0xf]
        %v2718 = vld [vmem:[%s2713 + $0x18] sm:$0xff]
        %v2719 = vld [vmem:[%s2713 + $0x20] sm:$0xf]
        %v2720 = vld [vmem:[%s2713 + $0x24] sm:$0xff]
        %v2721 = vld [vmem:[%s2713 + $0x2c] sm:$0xf]
        %v2722 = vld [vmem:[%s2713 + $0x30] sm:$0xff]
        %v2723 = vld [vmem:[%s2713 + $0x38] sm:$0xf]
        %v2724 = vld [vmem:[%s2713 + $0x3c] sm:$0xff]
        %v2725 = vld [vmem:[%s2713 + $0x44] sm:$0xf]
        %v2726 = vld [vmem:[%s2713 + $0x48] sm:$0xff]
        %v2727 = vld [vmem:[%s2713 + $0x50] sm:$0xf]
        %v2728 = vld [vmem:[%s2713 + $0x54] sm:$0xff]
        %v2729 = vld [vmem:[%s2713 + $0x5c] sm:$0xf]
        %v2730 = vld [vmem:[%s2713 + $0x60] sm:$0xff]
        %v2731 = vld [vmem:[%s2713 + $0x68] sm:$0xf]
        %v2732 = vld [vmem:[%s2713 + $0x6c] sm:$0xff]
        %v2733 = vld [vmem:[%s2713 + $0x74] sm:$0xf]
        %v2734 = vld [vmem:[%s2713 + $0x78] sm:$0xff]
        %v2735 = vld [vmem:[%s2713 + $0x80] sm:$0xf]
        %v2736 = vld [vmem:[%s2713 + $0x84] sm:$0xff]
        %v2737 = vld [vmem:[%s2713 + $0x8c] sm:$0xf]
        %v2738 = vld [vmem:[%s2713 + $0x90] sm:$0xff]
        %v2739 = vld [vmem:[%s2713 + $0x98] sm:$0xf]
        %v2740 = vld [vmem:[%s2713 + $0x9c] sm:$0xff]
        %v2741 = vld [vmem:[%s2713 + $0xa4] sm:$0xf]
        %v2742 = vld [vmem:[%s2713 + $0xa8] sm:$0xff]
        %v2743 = vld [vmem:[%s2713 + $0xb0] sm:$0xf]
        %v2744 = vld [vmem:[%s2713 + $0xb4] sm:$0xff]
        %v2745 = vld [vmem:[%s2713 + $0xbc] sm:$0xf]
        %v2746 = vld [vmem:[%s2713 + $0xc0] sm:$0xff]
        %v2747 = vld [vmem:[%s2713 + $0xc8] sm:$0xf]
        %v2748 = vld [vmem:[%s2713 + $0xcc] sm:$0xff]
        %v2749 = vld [vmem:[%s2713 + $0xd4] sm:$0xf]
        %v2750 = vld [vmem:[%s2713 + $0xd8] sm:$0xff]
        %v2751 = vld [vmem:[%s2713 + $0xe0] sm:$0xf]
        %v2752 = vld [vmem:[%s2713 + $0xe4] sm:$0xff]
        %v2753 = vld [vmem:[%s2713 + $0xec] sm:$0xf]
        %v2754 = vld [vmem:[%s2713 + $0xf0] sm:$0xff]
        %v2755 = vld [vmem:[%s2713 + $0xf8] sm:$0xf]
        %s2756 = sadd.s32 %s2058, 2
        %s2757 = smul.u32 %s2756, 128
        %s2758 = sadd.s32 %s2757, %s2063
        %s2759 = sld [smem:[#allocation5 + %s2758]]
        %v2760 = vstv %s2759
        %v2803 = vunpack.c.l.b16 %v2714
        %v2804 = vunpack.c.h.b16 %v2714
        %v2805 = vunpack.c.l.b16 %v2715
        %v2806 = vunpack.c.l.b16 %v2716
        %v2807 = vunpack.c.h.b16 %v2716
        %v2808 = vunpack.c.l.b16 %v2717
        %v2809 = vunpack.c.l.b16 %v2718
        %v2810 = vunpack.c.h.b16 %v2718
        %v2811 = vunpack.c.l.b16 %v2719
        %v2812 = vunpack.c.l.b16 %v2720
        %v2813 = vunpack.c.h.b16 %v2720
        %v2814 = vunpack.c.l.b16 %v2721
        %v2815 = vunpack.c.l.b16 %v2722
        %v2816 = vunpack.c.h.b16 %v2722
        %v2817 = vunpack.c.l.b16 %v2723
        %v2818 = vunpack.c.l.b16 %v2724
        %v2819 = vunpack.c.h.b16 %v2724
        %v2820 = vunpack.c.l.b16 %v2725
        %v2821 = vunpack.c.l.b16 %v2726
        %v2822 = vunpack.c.h.b16 %v2726
        %v2823 = vunpack.c.l.b16 %v2727
        %v2824 = vunpack.c.l.b16 %v2728
        %v2825 = vunpack.c.h.b16 %v2728
        %v2826 = vunpack.c.l.b16 %v2729
        %v2827 = vunpack.c.l.b16 %v2730
        %v2828 = vunpack.c.h.b16 %v2730
        %v2829 = vunpack.c.l.b16 %v2731
        %v2830 = vunpack.c.l.b16 %v2732
        %v2831 = vunpack.c.h.b16 %v2732
        %v2832 = vunpack.c.l.b16 %v2733
        %v2833 = vunpack.c.l.b16 %v2734
        %v2834 = vunpack.c.h.b16 %v2734
        %v2835 = vunpack.c.l.b16 %v2735
        %v2836 = vunpack.c.l.b16 %v2736
        %v2837 = vunpack.c.h.b16 %v2736
        %v2838 = vunpack.c.l.b16 %v2737
        %v2839 = vunpack.c.l.b16 %v2738
        %v2840 = vunpack.c.h.b16 %v2738
        %v2841 = vunpack.c.l.b16 %v2739
        %v2842 = vunpack.c.l.b16 %v2740
        %v2843 = vunpack.c.h.b16 %v2740
        %v2844 = vunpack.c.l.b16 %v2741
        %v2845 = vunpack.c.l.b16 %v2742
        %v2846 = vunpack.c.h.b16 %v2742
        %v2847 = vunpack.c.l.b16 %v2743
        %v2848 = vunpack.c.l.b16 %v2744
        %v2849 = vunpack.c.h.b16 %v2744
        %v2850 = vunpack.c.l.b16 %v2745
        %v2851 = vunpack.c.l.b16 %v2746
        %v2852 = vunpack.c.h.b16 %v2746
        %v2853 = vunpack.c.l.b16 %v2747
        %v2854 = vunpack.c.l.b16 %v2748
        %v2855 = vunpack.c.h.b16 %v2748
        %v2856 = vunpack.c.l.b16 %v2749
        %v2857 = vunpack.c.l.b16 %v2750
        %v2858 = vunpack.c.h.b16 %v2750
        %v2859 = vunpack.c.l.b16 %v2751
        %v2860 = vunpack.c.l.b16 %v2752
        %v2861 = vunpack.c.h.b16 %v2752
        %v2862 = vunpack.c.l.b16 %v2753
        %v2863 = vunpack.c.l.b16 %v2754
        %v2864 = vunpack.c.h.b16 %v2754
        %v2865 = vunpack.c.l.b16 %v2755
        %v2866 = vpack.c.b16 %v2806, %v2803
        %v2867 = vpack.c.b16 %v2807, %v2804
        %v2868 = vpack.c.b16 %v2808, %v2805
        %v2869 = vpack.c.b16 %v2812, %v2809
        %v2870 = vpack.c.b16 %v2813, %v2810
        %v2871 = vpack.c.b16 %v2814, %v2811
        %v2872 = vpack.c.b16 %v2818, %v2815
        %v2873 = vpack.c.b16 %v2819, %v2816
        %v2874 = vpack.c.b16 %v2820, %v2817
        %v2875 = vpack.c.b16 %v2824, %v2821
        %v2876 = vpack.c.b16 %v2825, %v2822
        %v2877 = vpack.c.b16 %v2826, %v2823
        %v2878 = vpack.c.b16 %v2830, %v2827
        %v2879 = vpack.c.b16 %v2831, %v2828
        %v2880 = vpack.c.b16 %v2832, %v2829
        %v2881 = vpack.c.b16 %v2836, %v2833
        %v2882 = vpack.c.b16 %v2837, %v2834
        %v2883 = vpack.c.b16 %v2838, %v2835
        %v2884 = vpack.c.b16 %v2842, %v2839
        %v2885 = vpack.c.b16 %v2843, %v2840
        %v2886 = vpack.c.b16 %v2844, %v2841
        %v2887 = vpack.c.b16 %v2848, %v2845
        %v2888 = vpack.c.b16 %v2849, %v2846
        %v2889 = vpack.c.b16 %v2850, %v2847
        %v2890 = vpack.c.b16 %v2854, %v2851
        %v2891 = vpack.c.b16 %v2855, %v2852
        %v2892 = vpack.c.b16 %v2856, %v2853
        %v2893 = vpack.c.b16 %v2860, %v2857
        %v2894 = vpack.c.b16 %v2861, %v2858
        %v2895 = vpack.c.b16 %v2862, %v2859
        %v2896 = vpack.c.b16 %v2863, %v2863
        %v2897 = vpack.c.b16 %v2864, %v2864
        %v2898 = vpack.c.b16 %v2865, %v2865
        %v2930 = vsel %vm1536, %v2712, 0
        %v2933 = vsel %vm1540, %v2896, 0
        %v2936 = vsel %vm1540, %v2897, 0
        %v2939 = vsel %vm1540, %v2898, 0
        %2941 = vmatpush.bf16.msra.mxu0 %v2887
        %2942 = vmatpush.bf16.msra.mxu0 %v2884
        %2943 = vmatpush.bf16.msra.mxu0 %v2881
        %2944 = vmatpush.bf16.msra.mxu0 %v2878
        %2945 = vmatpush.bf16.msra.mxu0 %v2875
        %2946 = vmatpush.bf16.msra.mxu0 %v2872
        %2947 = vmatpush.bf16.msra.mxu0 %v2869
        %2948 = vmatpush.bf16.msra.mxu0 %v2866
        %2949 = vmatmul.bf16.gmra.mxu0 %v2711
        %v2950 = vpop.f32.mrf.mxu0
        %v2951 = vadd.f32 %v2760, %v2950
        %v2952 = vpop.f32.mrf.mxu0
        %2953 = vdwg.mxu0
        %2954 = vmatpush.bf16.msra.mxu0 0
        %2955 = vmatpush.bf16.msra.mxu0 0
        %2956 = vmatpush.bf16.msra.mxu0 0
        %2957 = vmatpush.bf16.msra.mxu0 0
        %2958 = vmatpush.bf16.msra.mxu0 0
        %2959 = vmatpush.bf16.msra.mxu0 %v2933
        %2960 = vmatpush.bf16.msra.mxu0 %v2893
        %2961 = vmatpush.bf16.msra.mxu0 %v2890
        %2962 = vmatmul.bf16.gmra.mxu0 %v2930
        %v2963 = vpop.f32.mrf.mxu0
        %v2964 = vadd.f32 %v2951, %v2963
        %v2965 = vpop.f32.mrf.mxu0
        %2966 = vdwg.mxu0
        %2967 = vmatpush.bf16.msra.mxu0 %v2888
        %2968 = vmatpush.bf16.msra.mxu0 %v2885
        %2969 = vmatpush.bf16.msra.mxu0 %v2882
        %2970 = vmatpush.bf16.msra.mxu0 %v2879
        %2971 = vmatpush.bf16.msra.mxu0 %v2876
        %2972 = vmatpush.bf16.msra.mxu0 %v2873
        %2973 = vmatpush.bf16.msra.mxu0 %v2870
        %2974 = vmatpush.bf16.msra.mxu0 %v2867
        %2975 = vmatmul.bf16.gmra.mxu0 %v2711
        %v2976 = vpop.f32.mrf.mxu0
        %v2977 = vadd.f32 %v2760, %v2976
        %v2978 = vpop.f32.mrf.mxu0
        %2979 = vdwg.mxu0
        %2980 = vmatpush.bf16.msra.mxu0 0
        %2981 = vmatpush.bf16.msra.mxu0 0
        %2982 = vmatpush.bf16.msra.mxu0 0
        %2983 = vmatpush.bf16.msra.mxu0 0
        %2984 = vmatpush.bf16.msra.mxu0 0
        %2985 = vmatpush.bf16.msra.mxu0 %v2936
        %2986 = vmatpush.bf16.msra.mxu0 %v2894
        %2987 = vmatpush.bf16.msra.mxu0 %v2891
        %2988 = vmatmul.bf16.gmra.mxu0 %v2930
        %v2989 = vpop.f32.mrf.mxu0
        %v2990 = vadd.f32 %v2977, %v2989
        %v2991 = vpop.f32.mrf.mxu0
        %2992 = vdwg.mxu0
        %2993 = vmatpush.bf16.msra.mxu0 %v2889
        %2994 = vmatpush.bf16.msra.mxu0 %v2886
        %2995 = vmatpush.bf16.msra.mxu0 %v2883
        %2996 = vmatpush.bf16.msra.mxu0 %v2880
        %2997 = vmatpush.bf16.msra.mxu0 %v2877
        %2998 = vmatpush.bf16.msra.mxu0 %v2874
        %2999 = vmatpush.bf16.msra.mxu0 %v2871
        %3000 = vmatpush.bf16.msra.mxu0 %v2868
        %3001 = vmatmul.bf16.gmra.mxu0 %v2711
        %v3002 = vpop.f32.mrf.mxu0
        %v3003 = vadd.f32 %v2760, %v3002
        %v3004 = vpop.f32.mrf.mxu0
        %3005 = vdwg.mxu0
        %3006 = vmatpush.bf16.msra.mxu0 0
        %3007 = vmatpush.bf16.msra.mxu0 0
        %3008 = vmatpush.bf16.msra.mxu0 0
        %3009 = vmatpush.bf16.msra.mxu0 0
        %3010 = vmatpush.bf16.msra.mxu0 0
        %3011 = vmatpush.bf16.msra.mxu0 %v2939
        %3012 = vmatpush.bf16.msra.mxu0 %v2895
        %3013 = vmatpush.bf16.msra.mxu0 %v2892
        %3014 = vmatmul.bf16.gmra.mxu0 %v2930
        %v3015 = vpop.f32.mrf.mxu0
        %v3016 = vadd.f32 %v3003, %v3015
        %v3017 = vpop.f32.mrf.mxu0
        %3018 = vdwg.mxu0
        %v3019 = vmax.f32 %v2964, 0.0
        %v3020 = vmax.f32 %v2990, 0.0
        %v3021 = vmax.f32 %v3016, 0.0
        %v3022 = vpack.c.bf16 %v3019, %v3019
        %v3023 = vpack.c.bf16 %v3020, %v3020
        %v3024 = vpack.c.bf16 %v3021, %v3021
        %s3025 = scalar_lea.vmem %s1228, 768 [#allocation4]
        %v3026 = vld [vmem:[%s3025] sm:$0xff]
        %v3027 = vld [vmem:[%s3025 + $0x8] sm:$0xff]
        %v3028 = vld [vmem:[%s3025 + $0x10] sm:$0xff]
        %v3029 = vld [vmem:[%s3025 + $0x18] sm:$0xff]
        %v3030 = vld [vmem:[%s3025 + $0x20] sm:$0xff]
        %v3031 = vld [vmem:[%s3025 + $0x28] sm:$0xff]
        %v3032 = vld [vmem:[%s3025 + $0x30] sm:$0xff]
        %v3033 = vld [vmem:[%s3025 + $0x38] sm:$0xff]
        %v3034 = vld [vmem:[%s3025 + $0x40] sm:$0xff]
        %v3035 = vld [vmem:[%s3025 + $0x48] sm:$0xff]
        %v3036 = vld [vmem:[%s3025 + $0x50] sm:$0xff]
        %v3037 = vld [vmem:[%s3025 + $0x58] sm:$0xff]
        %v3038 = vld [vmem:[%s3025 + $0x60] sm:$0xff]
        %v3039 = vld [vmem:[%s3025 + $0x68] sm:$0xff]
        %v3040 = vld [vmem:[%s3025 + $0x70] sm:$0xff]
        %v3041 = vld [vmem:[%s3025 + $0x78] sm:$0xff]
        %v3042 = vld [vmem:[%s3025 + $0x80] sm:$0xff]
        %v3043 = vld [vmem:[%s3025 + $0x88] sm:$0xff]
        %v3044 = vld [vmem:[%s3025 + $0x90] sm:$0xff]
        %v3045 = vld [vmem:[%s3025 + $0x98] sm:$0xff]
        %v3046 = vld [vmem:[%s3025 + $0xa0] sm:$0xff]
        %v3047 = vld [vmem:[%s3025 + $0xa8] sm:$0xff]
        %v3048 = vld [vmem:[%s3025 + $0xb0] sm:$0xff]
        %v3049 = vld [vmem:[%s3025 + $0xb8] sm:$0xff]
        %v3050 = vld [vmem:[%s3025 + $0xc0] sm:$0xff]
        %v3051 = vld [vmem:[%s3025 + $0xc8] sm:$0xff]
        %v3052 = vld [vmem:[%s3025 + $0xd0] sm:$0xff]
        %v3053 = vld [vmem:[%s3025 + $0xd8] sm:$0xff]
        %v3054 = vld [vmem:[%s3025 + $0xe0] sm:$0xff]
        %v3055 = vld [vmem:[%s3025 + $0xe8] sm:$0xff]
        %v3056 = vld [vmem:[%s3025 + $0xf0] sm:$0xff]
        %v3057 = vld [vmem:[%s3025 + $0xf8] sm:$0xff]
        %v3058 = vld [vmem:[%s3025 + $0x100] sm:$0xff]
        %v3059 = vld [vmem:[%s3025 + $0x108] sm:$0xff]
        %v3060 = vld [vmem:[%s3025 + $0x110] sm:$0xff]
        %v3061 = vld [vmem:[%s3025 + $0x118] sm:$0xff]
        %v3062 = vld [vmem:[%s3025 + $0x120] sm:$0xff]
        %v3063 = vld [vmem:[%s3025 + $0x128] sm:$0xff]
        %v3064 = vld [vmem:[%s3025 + $0x130] sm:$0xff]
        %v3065 = vld [vmem:[%s3025 + $0x138] sm:$0xff]
        %v3066 = vld [vmem:[%s3025 + $0x140] sm:$0xff]
        %v3067 = vld [vmem:[%s3025 + $0x148] sm:$0xff]
        %v3068 = vld [vmem:[%s3025 + $0x150] sm:$0xff]
        %v3069 = vld [vmem:[%s3025 + $0x158] sm:$0xff]
        %v3070 = vld [vmem:[%s3025 + $0x160] sm:$0xff]
        %v3071 = vld [vmem:[%s3025 + $0x168] sm:$0xff]
        %v3072 = vld [vmem:[%s3025 + $0x170] sm:$0xff]
        %v3073 = vld [vmem:[%s3025 + $0x178] sm:$0xff]
        %s3074 = sld [smem:[#allocation7 + %s2758]]
        %v3075 = vstv %s3074
        %v3124 = vunpack.c.l.b16 %v3026
        %v3125 = vunpack.c.h.b16 %v3026
        %v3126 = vunpack.c.l.b16 %v3027
        %v3127 = vunpack.c.h.b16 %v3027
        %v3128 = vunpack.c.l.b16 %v3028
        %v3129 = vunpack.c.h.b16 %v3028
        %v3130 = vunpack.c.l.b16 %v3029
        %v3131 = vunpack.c.h.b16 %v3029
        %v3132 = vunpack.c.l.b16 %v3030
        %v3133 = vunpack.c.h.b16 %v3030
        %v3134 = vunpack.c.l.b16 %v3031
        %v3135 = vunpack.c.h.b16 %v3031
        %v3136 = vunpack.c.l.b16 %v3032
        %v3137 = vunpack.c.h.b16 %v3032
        %v3138 = vunpack.c.l.b16 %v3033
        %v3139 = vunpack.c.h.b16 %v3033
        %v3140 = vunpack.c.l.b16 %v3034
        %v3141 = vunpack.c.h.b16 %v3034
        %v3142 = vunpack.c.l.b16 %v3035
        %v3143 = vunpack.c.h.b16 %v3035
        %v3144 = vunpack.c.l.b16 %v3036
        %v3145 = vunpack.c.h.b16 %v3036
        %v3146 = vunpack.c.l.b16 %v3037
        %v3147 = vunpack.c.h.b16 %v3037
        %v3148 = vunpack.c.l.b16 %v3038
        %v3149 = vunpack.c.h.b16 %v3038
        %v3150 = vunpack.c.l.b16 %v3039
        %v3151 = vunpack.c.h.b16 %v3039
        %v3152 = vunpack.c.l.b16 %v3040
        %v3153 = vunpack.c.h.b16 %v3040
        %v3154 = vunpack.c.l.b16 %v3041
        %v3155 = vunpack.c.h.b16 %v3041
        %v3156 = vunpack.c.l.b16 %v3042
        %v3157 = vunpack.c.h.b16 %v3042
        %v3158 = vunpack.c.l.b16 %v3043
        %v3159 = vunpack.c.h.b16 %v3043
        %v3160 = vunpack.c.l.b16 %v3044
        %v3161 = vunpack.c.h.b16 %v3044
        %v3162 = vunpack.c.l.b16 %v3045
        %v3163 = vunpack.c.h.b16 %v3045
        %v3164 = vunpack.c.l.b16 %v3046
        %v3165 = vunpack.c.h.b16 %v3046
        %v3166 = vunpack.c.l.b16 %v3047
        %v3167 = vunpack.c.h.b16 %v3047
        %v3168 = vunpack.c.l.b16 %v3048
        %v3169 = vunpack.c.h.b16 %v3048
        %v3170 = vunpack.c.l.b16 %v3049
        %v3171 = vunpack.c.h.b16 %v3049
        %v3172 = vunpack.c.l.b16 %v3050
        %v3173 = vunpack.c.h.b16 %v3050
        %v3174 = vunpack.c.l.b16 %v3051
        %v3175 = vunpack.c.h.b16 %v3051
        %v3176 = vunpack.c.l.b16 %v3052
        %v3177 = vunpack.c.h.b16 %v3052
        %v3178 = vunpack.c.l.b16 %v3053
        %v3179 = vunpack.c.h.b16 %v3053
        %v3180 = vunpack.c.l.b16 %v3054
        %v3181 = vunpack.c.h.b16 %v3054
        %v3182 = vunpack.c.l.b16 %v3055
        %v3183 = vunpack.c.h.b16 %v3055
        %v3184 = vunpack.c.l.b16 %v3056
        %v3185 = vunpack.c.h.b16 %v3056
        %v3186 = vunpack.c.l.b16 %v3057
        %v3187 = vunpack.c.h.b16 %v3057
        %v3188 = vunpack.c.l.b16 %v3058
        %v3189 = vunpack.c.h.b16 %v3058
        %v3190 = vunpack.c.l.b16 %v3059
        %v3191 = vunpack.c.h.b16 %v3059
        %v3192 = vunpack.c.l.b16 %v3060
        %v3193 = vunpack.c.h.b16 %v3060
        %v3194 = vunpack.c.l.b16 %v3061
        %v3195 = vunpack.c.h.b16 %v3061
        %v3196 = vunpack.c.l.b16 %v3062
        %v3197 = vunpack.c.h.b16 %v3062
        %v3198 = vunpack.c.l.b16 %v3063
        %v3199 = vunpack.c.h.b16 %v3063
        %v3200 = vunpack.c.l.b16 %v3064
        %v3201 = vunpack.c.h.b16 %v3064
        %v3202 = vunpack.c.l.b16 %v3065
        %v3203 = vunpack.c.h.b16 %v3065
        %v3204 = vunpack.c.l.b16 %v3066
        %v3205 = vunpack.c.h.b16 %v3066
        %v3206 = vunpack.c.l.b16 %v3067
        %v3207 = vunpack.c.h.b16 %v3067
        %v3208 = vunpack.c.l.b16 %v3068
        %v3209 = vunpack.c.h.b16 %v3068
        %v3210 = vunpack.c.l.b16 %v3069
        %v3211 = vunpack.c.h.b16 %v3069
        %v3212 = vunpack.c.l.b16 %v3070
        %v3213 = vunpack.c.h.b16 %v3070
        %v3214 = vunpack.c.l.b16 %v3071
        %v3215 = vunpack.c.h.b16 %v3071
        %v3216 = vunpack.c.l.b16 %v3072
        %v3217 = vunpack.c.h.b16 %v3072
        %v3218 = vunpack.c.l.b16 %v3073
        %v3219 = vunpack.c.h.b16 %v3073
        %v3220 = vpack.c.b16 %v3126, %v3124
        %v3221 = vpack.c.b16 %v3127, %v3125
        %v3222 = vpack.c.b16 %v3130, %v3128
        %v3223 = vpack.c.b16 %v3131, %v3129
        %v3224 = vpack.c.b16 %v3134, %v3132
        %v3225 = vpack.c.b16 %v3135, %v3133
        %v3226 = vpack.c.b16 %v3138, %v3136
        %v3227 = vpack.c.b16 %v3139, %v3137
        %v3228 = vpack.c.b16 %v3142, %v3140
        %v3229 = vpack.c.b16 %v3143, %v3141
        %v3230 = vpack.c.b16 %v3146, %v3144
        %v3231 = vpack.c.b16 %v3147, %v3145
        %v3232 = vpack.c.b16 %v3150, %v3148
        %v3233 = vpack.c.b16 %v3151, %v3149
        %v3234 = vpack.c.b16 %v3154, %v3152
        %v3235 = vpack.c.b16 %v3155, %v3153
        %v3236 = vpack.c.b16 %v3158, %v3156
        %v3237 = vpack.c.b16 %v3159, %v3157
        %v3238 = vpack.c.b16 %v3162, %v3160
        %v3239 = vpack.c.b16 %v3163, %v3161
        %v3240 = vpack.c.b16 %v3166, %v3164
        %v3241 = vpack.c.b16 %v3167, %v3165
        %v3242 = vpack.c.b16 %v3170, %v3168
        %v3243 = vpack.c.b16 %v3171, %v3169
        %v3244 = vpack.c.b16 %v3174, %v3172
        %v3245 = vpack.c.b16 %v3175, %v3173
        %v3246 = vpack.c.b16 %v3178, %v3176
        %v3247 = vpack.c.b16 %v3179, %v3177
        %v3248 = vpack.c.b16 %v3182, %v3180
        %v3249 = vpack.c.b16 %v3183, %v3181
        %v3250 = vpack.c.b16 %v3186, %v3184
        %v3251 = vpack.c.b16 %v3187, %v3185
        %v3252 = vpack.c.b16 %v3190, %v3188
        %v3253 = vpack.c.b16 %v3191, %v3189
        %v3254 = vpack.c.b16 %v3194, %v3192
        %v3255 = vpack.c.b16 %v3195, %v3193
        %v3256 = vpack.c.b16 %v3198, %v3196
        %v3257 = vpack.c.b16 %v3199, %v3197
        %v3258 = vpack.c.b16 %v3202, %v3200
        %v3259 = vpack.c.b16 %v3203, %v3201
        %v3260 = vpack.c.b16 %v3206, %v3204
        %v3261 = vpack.c.b16 %v3207, %v3205
        %v3262 = vpack.c.b16 %v3210, %v3208
        %v3263 = vpack.c.b16 %v3211, %v3209
        %v3264 = vpack.c.b16 %v3214, %v3212
        %v3265 = vpack.c.b16 %v3215, %v3213
        %v3266 = vpack.c.b16 %v3218, %v3216
        %v3267 = vpack.c.b16 %v3219, %v3217
        %3316 = vmatpush.bf16.msra.mxu0 %v3234
        %3317 = vmatpush.bf16.msra.mxu0 %v3232
        %3318 = vmatpush.bf16.msra.mxu0 %v3230
        %3319 = vmatpush.bf16.msra.mxu0 %v3228
        %3320 = vmatpush.bf16.msra.mxu0 %v3226
        %3321 = vmatpush.bf16.msra.mxu0 %v3224
        %3322 = vmatpush.bf16.msra.mxu0 %v3222
        %3323 = vmatpush.bf16.msra.mxu0 %v3220
        %3324 = vmatmul.bf16.gmra.mxu0 %v3022
        %v3325 = vpop.f32.mrf.mxu0
        %v3326 = vadd.f32 %v3075, %v3325
        %v3327 = vpop.f32.mrf.mxu0
        %3328 = vdwg.mxu0
        %3329 = vmatpush.bf16.msra.mxu0 %v3250
        %3330 = vmatpush.bf16.msra.mxu0 %v3248
        %3331 = vmatpush.bf16.msra.mxu0 %v3246
        %3332 = vmatpush.bf16.msra.mxu0 %v3244
        %3333 = vmatpush.bf16.msra.mxu0 %v3242
        %3334 = vmatpush.bf16.msra.mxu0 %v3240
        %3335 = vmatpush.bf16.msra.mxu0 %v3238
        %3336 = vmatpush.bf16.msra.mxu0 %v3236
        %3337 = vmatmul.bf16.gmra.mxu0 %v3023
        %v3338 = vpop.f32.mrf.mxu0
        %v3339 = vadd.f32 %v3326, %v3338
        %v3340 = vpop.f32.mrf.mxu0
        %3341 = vdwg.mxu0
        %3342 = vmatpush.bf16.msra.mxu0 %v3266
        %3343 = vmatpush.bf16.msra.mxu0 %v3264
        %3344 = vmatpush.bf16.msra.mxu0 %v3262
        %3345 = vmatpush.bf16.msra.mxu0 %v3260
        %3346 = vmatpush.bf16.msra.mxu0 %v3258
        %3347 = vmatpush.bf16.msra.mxu0 %v3256
        %3348 = vmatpush.bf16.msra.mxu0 %v3254
        %3349 = vmatpush.bf16.msra.mxu0 %v3252
        %3350 = vmatmul.bf16.gmra.mxu0 %v3024
        %v3351 = vpop.f32.mrf.mxu0
        %v3352 = vadd.f32 %v3339, %v3351
        %v3353 = vpop.f32.mrf.mxu0
        %3354 = vdwg.mxu0
        %3355 = vmatpush.bf16.msra.mxu0 %v3235
        %3356 = vmatpush.bf16.msra.mxu0 %v3233
        %3357 = vmatpush.bf16.msra.mxu0 %v3231
        %3358 = vmatpush.bf16.msra.mxu0 %v3229
        %3359 = vmatpush.bf16.msra.mxu0 %v3227
        %3360 = vmatpush.bf16.msra.mxu0 %v3225
        %3361 = vmatpush.bf16.msra.mxu0 %v3223
        %3362 = vmatpush.bf16.msra.mxu0 %v3221
        %3363 = vmatmul.bf16.gmra.mxu0 %v3022
        %v3364 = vpop.f32.mrf.mxu0
        %v3365 = vadd.f32 %v3075, %v3364
        %v3366 = vpop.f32.mrf.mxu0
        %3367 = vdwg.mxu0
        %3368 = vmatpush.bf16.msra.mxu0 %v3251
        %3369 = vmatpush.bf16.msra.mxu0 %v3249
        %3370 = vmatpush.bf16.msra.mxu0 %v3247
        %3371 = vmatpush.bf16.msra.mxu0 %v3245
        %3372 = vmatpush.bf16.msra.mxu0 %v3243
        %3373 = vmatpush.bf16.msra.mxu0 %v3241
        %3374 = vmatpush.bf16.msra.mxu0 %v3239
        %3375 = vmatpush.bf16.msra.mxu0 %v3237
        %3376 = vmatmul.bf16.gmra.mxu0 %v3023
        %v3377 = vpop.f32.mrf.mxu0
        %v3378 = vadd.f32 %v3365, %v3377
        %v3379 = vpop.f32.mrf.mxu0
        %3380 = vdwg.mxu0
        %3381 = vmatpush.bf16.msra.mxu0 %v3267
        %3382 = vmatpush.bf16.msra.mxu0 %v3265
        %3383 = vmatpush.bf16.msra.mxu0 %v3263
        %3384 = vmatpush.bf16.msra.mxu0 %v3261
        %3385 = vmatpush.bf16.msra.mxu0 %v3259
        %3386 = vmatpush.bf16.msra.mxu0 %v3257
        %3387 = vmatpush.bf16.msra.mxu0 %v3255
        %3388 = vmatpush.bf16.msra.mxu0 %v3253
        %3389 = vmatmul.bf16.gmra.mxu0 %v3024
        %v3390 = vpop.f32.mrf.mxu0
        %v3391 = vadd.f32 %v3378, %v3390
        %v3392 = vpop.f32.mrf.mxu0
        %3393 = vdwg.mxu0
        %v3394 = vmax.f32 %v3352, 0.0
        %v3395 = vmax.f32 %v3391, 0.0
        %v3396 = vadd.f32 %v3394, %v2709
        %v3397 = vadd.f32 %v3395, %v2710
        %v3398 = vmax.f32 %v3396, 0.0
        %v3399 = vmax.f32 %v3397, 0.0
        %3400 = vst [vmem:[%s2708] sm:$0xff] %v3398
        %3401 = vst.msk [vmem:[%s2708 + $0x8] sm:$0xff] %vm1536, %v3399
        %p3402 = scmp.eq.s32.totalorder %s26, 5
        // Predicated region
        $region133: #{discriminator_tcn_forward.1} parent=107 // pred_check
          %p3403 = pneg %p3402
        $region134: #{discriminator_tcn_forward.1} parent=107 // pred_check_branch
          %3405 = sbr.rel (%p3403) target = $region136
        $region135: #{discriminator_tcn_forward.1} parent=107 // pred_region
          %v3406 = vld [vmem:[%s1291] sm:$0xff]
          %v3407 = vld [vmem:[%s1291 + $0x8] sm:$0xff]
          %v3408 = vsel %vm1536, %v3407, 0.0
          %v3409 = vadd.f32 %v3406, %v3408
          %3410 = vadd.xlane.f32.xlu0 %v3409
          %v3411 = vpop.xlane.xlu0 %3410
          %v3412 = vrcp.pop 168.0
          %v3413 = vmul.f32 168.0, %v3412
          %v3414 = vsub.f32 1.0, %v3413
          %v3415 = vmul.f32 %v3412, %v3414
          %v3416 = vadd.f32 %v3412, %v3415
          %vm3417 = vweird.f32 %v3412
          %v3418 = vsel %vm3417, %v3412, %v3416
          %v3419 = vmul.f32 %v3411, %v3418
          %v3420 = vsel %vm1536, %v3407, inf
          %v3421 = vmin.f32 %v3406, %v3420
          %3422 = vmin.xlane.f32.xlu0 %v3421
          %v3423 = vpop.xlane.xlu0 %3422
          %v3424 = vld [vmem:[%s1295] sm:$0xff]
          %v3425 = vld [vmem:[%s6] sm:$0x1]
          %v3427 = vperm.slane %v3425, 0
          %v3429 = vmul.f32 %v3424, %v3427
          %vm3430 = vcmask 261120
          %v3431 = vsel %vm3430, %v3429, 0.0
          %3432 = vadd.xlane.f32.xlu0 %v3431
          %v3433 = vpop.xlane.xlu0 %3432
          %v3434 = vld [vmem:[#allocation2 + $0x8] sm:$0xff]
          %v3435 = vld [vmem:[%s2010 + $0x8] sm:$0xff]
          %v3436 = vld [vmem:[%s2708 + $0x8] sm:$0xff]
          %s3437 = sld [smem:[#allocation9]]
          %v3438 = vstv %s3437
          %v3439 = vmul.f32 %v3434, %v3438
          %s3440 = sld [smem:[#allocation9 + $0x1]]
          %v3441 = vstv %s3440
          %v3442 = vmul.f32 %v3435, %v3441
          %v3443 = vadd.f32 %v3439, %v3442
          %s3444 = sld [smem:[#allocation9 + $0x2]]
          %v3445 = vstv %s3444
          %v3446 = vmul.f32 %v3436, %v3445
          %v3447 = vadd.f32 %v3443, %v3446
          %s3448 = sld [smem:[#allocation9 + $0x3]]
          %v3449 = vstv %s3448
          %v3450 = vmul.f32 %v3419, %v3449
          %v3451 = vadd.f32 %v3447, %v3450
          %s3452 = sld [smem:[#allocation9 + $0x4]]
          %v3453 = vstv %s3452
          %v3454 = vmul.f32 %v3423, %v3453
          %v3455 = vadd.f32 %v3451, %v3454
          %v3456 = vadd.f32 %v3455, %v3433
          %s3457 = sld [smem:[#allocation9 + $0x5]]
          %v3458 = vstv %s3457
          %v3459 = vadd.f32 %v3456, %v3458
          %v3460 = vsub.f32 0.0, %v3459
          %v3461 = vmul.f32 %v3460, 1.442695
          %v3462 = vpow.pop %v3461
          %v3463 = vadd.f32 %v3462, 1.0
          %v3464 = vrcp.pop %v3463
          %v3465 = vmul.f32 %v3463, %v3464
          %v3466 = vsub.f32 1.0, %v3465
          %v3467 = vmul.f32 %v3464, %v3466
          %v3468 = vadd.f32 %v3464, %v3467
          %vm3469 = vweird.f32 %v3463
          %vm3470 = vweird.f32 %v3464
          %vm3471 = vmor %vm3469, %vm3470
          %v3472 = vsel %vm3471, %v3464, %v3468
          %v3473 = vand.u32 2147483647, %v3463
          %vm3474 = vcmp.eq.f32.partialorder %v3473, 8.507059e+37
          %v3475 = vand.u32 %v3463, 2147483648
          %v3476 = vor.u32 1.1754944e-38, %v3475
          %v3477 = vsel %vm3474, %v3476, %v3472
          %v3478 = vmul.f32 1.0, %v3477
          %3480 = vrot.lane.b32.xlu0 %v3478, 89
          %v3481 = vpop.permute.xlu0 %3480
          %vm3483 = vcmask 7168
          %3484 = vst.msk [vmem:[%s1299] sm:$0xff] %vm3483, %v3481
        $region136: #{discriminator_tcn_forward.1} parent=107 // pred_fallthru
          _
        %p3485 = scmp.lt.s32.totalorder %s25, 0
        %s3486 = scalar_select %p3485, %s25, 0
        %s3487 = smul.addr %s3486, 8
        %s3488 = scalar_lea.vmem %s8, %s3487
        // Predicated region
        $region137: #{discriminator_tcn_forward.1} parent=107 // pred_check
          %p3489 = pneg %p239
        $region138: #{discriminator_tcn_forward.1} parent=107 // pred_check_branch
          %3491 = sbr.rel (%p3489) target = $region140
        $region139: #{discriminator_tcn_forward.1} parent=107 // pred_region
          _
        $region140: #{discriminator_tcn_forward.1} parent=107 // pred_fallthru
          _
        // Predicated region
        $region141: #{discriminator_tcn_forward.1} parent=107 // pred_check
          %p3492 = pneg %p239
        $region142: #{discriminator_tcn_forward.1} parent=107 // pred_check_branch
          %3494 = sbr.rel (%p3492) target = $region144
        $region143: #{discriminator_tcn_forward.1} parent=107 // pred_region
          %p3495 = scmp.lt.s32.totalorder %s25, 0
          %s3496 = scalar_select %p3495, %s25, 0
          %s3497 = smul.addr %s3496, 8
          %s3498 = scalar_lea.vmem %s8, %s3497
        $region144: #{discriminator_tcn_forward.1} parent=107 // pred_fallthru
          _
      $region108: #{discriminator_tcn_forward.1} parent=5 // pred_fallthru
        _
      %p3499 = scmp.le.s32.totalorder 2, %s16
      // Predicated region
      $region145: #{discriminator_tcn_forward.1} parent=5 // pred_check
        %p3500 = pneg %p3499
      $region146: #{discriminator_tcn_forward.1} parent=5 // pred_check_branch
        %3502 = sbr.rel (%p3500) target = $region148
      $region147: #{discriminator_tcn_forward.1} parent=5 // pred_region
        %s3503 = ssub.s32 %s16, 2
      $region148: #{discriminator_tcn_forward.1} parent=5 // pred_fallthru
        _
    $region6: #{discriminator_tcn_forward.1} parent=1 // loop_footer
      %s20 = sadd.s32 1, %s16
    $region7: #{discriminator_tcn_forward.1} parent=1 // loop_footer_branch
      %15 = sbr.rel target = $region3
    $region8: #{discriminator_tcn_forward.1} parent=1 // loop_exit
      _
    %3504 = vsyncpa [#allocation6], 1
    %s3505 = scalar_lea.sflag [#allocation6], 1
    %3506 = vsyncpa %s3505, 1
    %3507 = vsyncpa [#allocation8], 1

</llo_original>
